<compile_context>
chip_gen: v7x
topology: tpu7x:2x2x1
jax: 0.10.0
libtpu: 0.0.40
codegen_flags: <defaults>
</compile_context>

<pallas_src>
import jax
import jax.numpy as jnp
from jax.experimental import pallas as pl
from jax.experimental.pallas import tpu as pltpu

_EPS = 1e-5  # PyTorch LayerNorm default


def _layernorm(x, g, b):
    mu = jnp.mean(x, axis=-1, keepdims=True)
    var = jnp.mean(jnp.square(x - mu), axis=-1, keepdims=True)
    return (x - mu) * jax.lax.rsqrt(var + _EPS) * g + b


# ----------------------------------------------------------------------------
# Fused kernel: all TCN0 layers, whole batch, single invocation.
# ----------------------------------------------------------------------------
def _tcn0_kernel(fea_ref, text_ref, wq_ref, wkv_ref, w1_ref, w2_ref,
                 vecd_ref, vecm_ref, out_ref, weights_ref):
    B, T, D = fea_ref.shape
    L = text_ref.shape[1]
    NL = wq_ref.shape[0]

    x = fea_ref[...].astype(jnp.float32)          # (B, T, D)
    txt = text_ref[...].astype(jnp.float32)       # (B, L, D)
    txt_flat = txt.reshape(B * L, D)              # layer-invariant; hoisted out of the loop

    for li in range(NL):   # layer_num is a static config constant -> unrolled
        # ---- packed per-layer params -----------------------------------------------
        wq = wq_ref[li]        # (D, D)   (already scaled by 1/sqrt(D))
        wkv = wkv_ref[li]      # (D, 2D)  [Wk | Wv]
        w1 = w1_ref[li]        # (T, M)
        w2 = w2_ref[li]        # (M, D)
        vd = vecd_ref[li]      # (8, D): pn_g, pn_b, bq(scaled), bk, bv, b2, ln2_g, ln2_b
        vm = vecm_ref[li]      # (3, M): b1, ln1_g, ln1_b
        pn_g, pn_b = vd[0], vd[1]
        bq, bk, bv = vd[2], vd[3], vd[4]
        b2, ln2_g, ln2_b = vd[5], vd[6], vd[7]
        b1, ln1_g, ln1_b = vm[0], vm[1], vm[2]

        # ---- prenorm (residual res0 is the post-LN features, as in the reference) ----
        xn = _layernorm(x, pn_g, pn_b)                                     # (B, T, D)

        # ---- cross attention: weight, fea = attention(fea, text_fea) -----------------
        q = (jnp.dot(xn.reshape(B * T, D), wq,
                     preferred_element_type=jnp.float32) + bq).reshape(B, T, D)
        kv = jnp.dot(txt_flat, wkv, preferred_element_type=jnp.float32)   # (B*L, 2D)
        k = (kv[:, :D] + bk).reshape(B, L, D)
        v = (kv[:, D:] + bv).reshape(B, L, D)

        scores = jnp.einsum('btd,bld->btl', q, k,
                            preferred_element_type=jnp.float32)           # (B, T, L)
        m = jnp.max(scores, axis=-1, keepdims=True)
        e = jnp.exp(scores - m)
        attn = e * pl.reciprocal(jnp.sum(e, axis=-1, keepdims=True), approx=True)
        att_out = jnp.einsum('btl,bld->btd', attn, v,
                             preferred_element_type=jnp.float32)          # (B, T, D)

        fea1 = att_out + xn                                               # res1

        # ---- MLP applied after permute(0, 2, 1): acts along the time axis ------------
        y = jnp.swapaxes(fea1, 1, 2).reshape(B * D, T)                    # (B*D, T)
        h = jnp.dot(y, w1, preferred_element_type=jnp.float32) + b1       # (B*D, M)
        h = _layernorm(h, ln1_g, ln1_b)
        h = jnp.maximum(h, 0.0)                                           # Dropout=identity, ReLU
        h2 = jnp.dot(h, w2, preferred_element_type=jnp.float32) + b2      # (B*D, D)
        h2 = _layernorm(h2, ln2_g, ln2_b)

        x = fea1 + jnp.swapaxes(h2.reshape(B, D, T), 1, 2)                # res1 + permute-back

        weights_ref[li] = attn.astype(weights_ref.dtype)

    out_ref[...] = x.astype(out_ref.dtype)


# ----------------------------------------------------------------------------
# Wrapper: pack per-layer params, single pallas_call for the whole forward.
# ----------------------------------------------------------------------------
def tcn0_forward(params, fea, text_fea, text_feal=None, mask=None):
    """Mirrors TCN0.forward: returns (fea, weights) with one weight per layer."""
    del text_feal, mask  # unused in the reference forward
    B, T, D = fea.shape
    L = text_fea.shape[1]
    NL = len(params)
    assert T == D, "TCN0 permute(0,2,1)+Linear requires seq_len == attention_dim"

    scale = 1.0 / jnp.sqrt(jnp.float32(D))   # folded into Wq / bq (scores scale)
    wq = jnp.stack([p["wq"] * scale for p in params])                                   # (NL, D, D)
    wkv = jnp.stack([jnp.concatenate([p["wk"], p["wv"]], axis=1) for p in params])      # (NL, D, 2D)
    w1 = jnp.stack([p["w1"] for p in params])                                           # (NL, T, M)
    w2 = jnp.stack([p["w2"] for p in params])                                           # (NL, M, D)
    vec_d = jnp.stack([jnp.concatenate(
        [p["pn_g"], p["pn_b"], p["bq"] * scale, p["bk"], p["bv"],
         p["b2"], p["ln2_g"], p["ln2_b"]], axis=0) for p in params])                    # (NL, 8, D)
    vec_m = jnp.stack([jnp.concatenate(
        [p["b1"], p["ln1_g"], p["ln1_b"]], axis=0) for p in params])                    # (NL, 3, M)

    vmem = pl.BlockSpec(memory_space=pltpu.MemorySpace.VMEM)
    fea_out, weights_all = pl.pallas_call(
        _tcn0_kernel,
        in_specs=[vmem] * 8,
        out_specs=(vmem, vmem),
        out_shape=(jax.ShapeDtypeStruct((B, T, D), jnp.float32),
                   jax.ShapeDtypeStruct((NL, B, T, L), jnp.float32)),
    )(fea, text_fea, wq, wkv, w1, w2, vec_d, vec_m)

    return fea_out, [weights_all[i] for i in range(NL)]


def init_tcn0_params(config, key):
    """Deterministic synthetic parameters (same shapes as the PyTorch module)."""
    D = config["attention_dim"]
    M = config["MLP_dim"]
    params = []
    for _ in range(config["layer_num"]):
        key, k0, k1, k2, k3, k4 = jax.random.split(key, 6)

        def w(k, shape, fan_in):
            return jax.random.normal(k, shape, jnp.float32) / jnp.sqrt(float(fan_in))

        params.append(dict(
            pn_g=jnp.ones((1, D), jnp.float32), pn_b=jnp.zeros((1, D), jnp.float32),
            wq=w(k0, (D, D), D), bq=jnp.zeros((1, D), jnp.float32),
            wk=w(k1, (D, D), D), bk=jnp.zeros((1, D), jnp.float32),
            wv=w(k2, (D, D), D), bv=jnp.zeros((1, D), jnp.float32),
            w1=w(k3, (D, M), D), b1=jnp.zeros((1, M), jnp.float32),
            ln1_g=jnp.ones((1, M), jnp.float32), ln1_b=jnp.zeros((1, M), jnp.float32),
            w2=w(k4, (M, D), M), b2=jnp.zeros((1, D), jnp.float32),
            ln2_g=jnp.ones((1, D), jnp.float32), ln2_b=jnp.zeros((1, D), jnp.float32),
        ))
    return params


if __name__ == "__main__":
    config = dict(layer_num=2, attention_dim=32, MLP_dim=64, groups=1,
                  with_attention=True, dropout=0.0, padding_type="same")

    key = jax.random.PRNGKey(0)
    kf, kt, kp = jax.random.split(key, 3)

    B = 2
    D = config["attention_dim"]
    T = D          # required by the permute(0,2,1) + Linear(attention_dim, MLP_dim) pattern
    L = 8          # text sequence length

    fea = jax.random.normal(kf, (B, T, D), jnp.float32)
    text_fea = jax.random.normal(kt, (B, L, D), jnp.float32)
    text_feal = jnp.full((B,), L, jnp.int32)   # unused by forward, kept for signature parity

    params = init_tcn0_params(config, kp)

    out_fea, weights = tcn0_forward(params, fea, text_fea, text_feal)
    jax.block_until_ready((out_fea, weights))

    assert out_fea.shape == (B, T, D)
    assert len(weights) == config["layer_num"]
    assert all(w.shape == (B, T, L) for w in weights)
    print("KERNEL_OK")
</pallas_src>

<mosaic_0001>
module attributes {stable_mosaic.version = 11 : i64} {
  func.func @_tcn0_kernel(%arg0: memref<2x32x32xf32, #tpu.memory_space<vmem>>, %arg1: memref<2x8x32xf32, #tpu.memory_space<vmem>>, %arg2: memref<2x32x32xf32, #tpu.memory_space<vmem>>, %arg3: memref<2x32x64xf32, #tpu.memory_space<vmem>>, %arg4: memref<2x32x64xf32, #tpu.memory_space<vmem>>, %arg5: memref<2x64x32xf32, #tpu.memory_space<vmem>>, %arg6: memref<2x8x32xf32, #tpu.memory_space<vmem>>, %arg7: memref<2x3x64xf32, #tpu.memory_space<vmem>>, %arg8: memref<2x32x32xf32, #tpu.memory_space<vmem>>, %arg9: memref<2x2x32x8xf32, #tpu.memory_space<vmem>>) attributes {dimension_semantics = [], scalar_prefetch = 0 : i64, scratch_operands = 0 : i64, tpu.core_type = #tpu.core_type<tc>} {
    %c0 = arith.constant 0 : index
    %c0_0 = arith.constant 0 : index
    %c0_1 = arith.constant 0 : index
    %0 = vector.load %arg0[%c0, %c0_0, %c0_1] : memref<2x32x32xf32, #tpu.memory_space<vmem>>, vector<2x32x32xf32>
    %c0_2 = arith.constant 0 : index
    %c0_3 = arith.constant 0 : index
    %c0_4 = arith.constant 0 : index
    %1 = vector.load %arg1[%c0_2, %c0_3, %c0_4] : memref<2x8x32xf32, #tpu.memory_space<vmem>>, vector<2x8x32xf32>
    %2 = vector.shape_cast %1 : vector<2x8x32xf32> to vector<16x32xf32>
    %c0_5 = arith.constant 0 : index
    %c0_6 = arith.constant 0 : index
    %c0_7 = arith.constant 0 : index
    %3 = vector.load %arg2[%c0_5, %c0_6, %c0_7] : memref<2x32x32xf32, #tpu.memory_space<vmem>>, vector<1x32x32xf32>
    %4 = vector.shape_cast %3 : vector<1x32x32xf32> to vector<32x32xf32>
    %c0_8 = arith.constant 0 : index
    %c0_9 = arith.constant 0 : index
    %c0_10 = arith.constant 0 : index
    %5 = vector.load %arg3[%c0_8, %c0_9, %c0_10] : memref<2x32x64xf32, #tpu.memory_space<vmem>>, vector<1x32x64xf32>
    %6 = vector.shape_cast %5 : vector<1x32x64xf32> to vector<32x64xf32>
    %c0_11 = arith.constant 0 : index
    %c0_12 = arith.constant 0 : index
    %c0_13 = arith.constant 0 : index
    %7 = vector.load %arg4[%c0_11, %c0_12, %c0_13] : memref<2x32x64xf32, #tpu.memory_space<vmem>>, vector<1x32x64xf32>
    %8 = vector.shape_cast %7 : vector<1x32x64xf32> to vector<32x64xf32>
    %c0_14 = arith.constant 0 : index
    %c0_15 = arith.constant 0 : index
    %c0_16 = arith.constant 0 : index
    %9 = vector.load %arg5[%c0_14, %c0_15, %c0_16] : memref<2x64x32xf32, #tpu.memory_space<vmem>>, vector<1x64x32xf32>
    %10 = vector.shape_cast %9 : vector<1x64x32xf32> to vector<64x32xf32>
    %c0_17 = arith.constant 0 : index
    %c0_18 = arith.constant 0 : index
    %c0_19 = arith.constant 0 : index
    %11 = vector.load %arg6[%c0_17, %c0_18, %c0_19] : memref<2x8x32xf32, #tpu.memory_space<vmem>>, vector<1x8x32xf32>
    %12 = vector.shape_cast %11 : vector<1x8x32xf32> to vector<8x32xf32>
    %c0_20 = arith.constant 0 : index
    %c0_21 = arith.constant 0 : index
    %c0_22 = arith.constant 0 : index
    %13 = vector.load %arg7[%c0_20, %c0_21, %c0_22] : memref<2x3x64xf32, #tpu.memory_space<vmem>>, vector<1x3x64xf32>
    %14 = vector.shape_cast %13 : vector<1x3x64xf32> to vector<3x64xf32>
    %15 = vector.extract_strided_slice %12 {offsets = [0, 0], sizes = [1, 32], strides = [1, 1]} : vector<8x32xf32> to vector<1x32xf32>
    %16 = vector.shape_cast %15 : vector<1x32xf32> to vector<32xf32>
    %17 = vector.extract_strided_slice %12 {offsets = [1, 0], sizes = [1, 32], strides = [1, 1]} : vector<8x32xf32> to vector<1x32xf32>
    %18 = vector.shape_cast %17 : vector<1x32xf32> to vector<32xf32>
    %19 = vector.extract_strided_slice %12 {offsets = [2, 0], sizes = [1, 32], strides = [1, 1]} : vector<8x32xf32> to vector<1x32xf32>
    %20 = vector.shape_cast %19 : vector<1x32xf32> to vector<32xf32>
    %21 = vector.extract_strided_slice %12 {offsets = [3, 0], sizes = [1, 32], strides = [1, 1]} : vector<8x32xf32> to vector<1x32xf32>
    %22 = vector.shape_cast %21 : vector<1x32xf32> to vector<32xf32>
    %23 = vector.extract_strided_slice %12 {offsets = [4, 0], sizes = [1, 32], strides = [1, 1]} : vector<8x32xf32> to vector<1x32xf32>
    %24 = vector.shape_cast %23 : vector<1x32xf32> to vector<32xf32>
    %25 = vector.extract_strided_slice %12 {offsets = [5, 0], sizes = [1, 32], strides = [1, 1]} : vector<8x32xf32> to vector<1x32xf32>
    %26 = vector.shape_cast %25 : vector<1x32xf32> to vector<32xf32>
    %27 = vector.extract_strided_slice %12 {offsets = [6, 0], sizes = [1, 32], strides = [1, 1]} : vector<8x32xf32> to vector<1x32xf32>
    %28 = vector.shape_cast %27 : vector<1x32xf32> to vector<32xf32>
    %29 = vector.extract_strided_slice %12 {offsets = [7, 0], sizes = [1, 32], strides = [1, 1]} : vector<8x32xf32> to vector<1x32xf32>
    %30 = vector.shape_cast %29 : vector<1x32xf32> to vector<32xf32>
    %31 = vector.extract_strided_slice %14 {offsets = [0, 0], sizes = [1, 64], strides = [1, 1]} : vector<3x64xf32> to vector<1x64xf32>
    %32 = vector.shape_cast %31 : vector<1x64xf32> to vector<64xf32>
    %33 = vector.extract_strided_slice %14 {offsets = [1, 0], sizes = [1, 64], strides = [1, 1]} : vector<3x64xf32> to vector<1x64xf32>
    %34 = vector.shape_cast %33 : vector<1x64xf32> to vector<64xf32>
    %35 = vector.extract_strided_slice %14 {offsets = [2, 0], sizes = [1, 64], strides = [1, 1]} : vector<3x64xf32> to vector<1x64xf32>
    %36 = vector.shape_cast %35 : vector<1x64xf32> to vector<64xf32>
    %cst = arith.constant dense<0.000000e+00> : vector<2x32xf32>
    %37 = vector.multi_reduction <add>, %0, %cst [2] : vector<2x32x32xf32> to vector<2x32xf32>
    %38 = vector.shape_cast %37 : vector<2x32xf32> to vector<2x32x1xf32>
    %cst_23 = arith.constant 3.200000e+01 : f32
    %39 = vector.broadcast %cst_23 : f32 to vector<2x32x1xf32>
    %40 = arith.divf %38, %39 : vector<2x32x1xf32>
    %41 = vector.broadcast %40 : vector<2x32x1xf32> to vector<2x32x32xf32>
    %42 = arith.subf %0, %41 : vector<2x32x32xf32>
    %43 = arith.mulf %42, %42 : vector<2x32x32xf32>
    %cst_24 = arith.constant dense<0.000000e+00> : vector<2x32xf32>
    %44 = vector.multi_reduction <add>, %43, %cst_24 [2] : vector<2x32x32xf32> to vector<2x32xf32>
    %45 = vector.shape_cast %44 : vector<2x32xf32> to vector<2x32x1xf32>
    %cst_25 = arith.constant 3.200000e+01 : f32
    %46 = vector.broadcast %cst_25 : f32 to vector<2x32x1xf32>
    %47 = arith.divf %45, %46 : vector<2x32x1xf32>
    %48 = vector.broadcast %40 : vector<2x32x1xf32> to vector<2x32x32xf32>
    %49 = arith.subf %0, %48 : vector<2x32x32xf32>
    %cst_26 = arith.constant 9.99999974E-6 : f32
    %50 = vector.broadcast %cst_26 : f32 to vector<2x32x1xf32>
    %51 = arith.addf %47, %50 : vector<2x32x1xf32>
    %52 = math.rsqrt %51 : vector<2x32x1xf32>
    %53 = vector.broadcast %52 : vector<2x32x1xf32> to vector<2x32x32xf32>
    %54 = arith.mulf %49, %53 : vector<2x32x32xf32>
    %55 = vector.shape_cast %16 : vector<32xf32> to vector<1x1x32xf32>
    %56 = vector.broadcast %55 : vector<1x1x32xf32> to vector<2x32x32xf32>
    %57 = arith.mulf %54, %56 : vector<2x32x32xf32>
    %58 = vector.shape_cast %18 : vector<32xf32> to vector<1x1x32xf32>
    %59 = vector.broadcast %58 : vector<1x1x32xf32> to vector<2x32x32xf32>
    %60 = arith.addf %57, %59 : vector<2x32x32xf32>
    %61 = vector.shape_cast %60 : vector<2x32x32xf32> to vector<64x32xf32>
    %cst_27 = arith.constant dense<0.000000e+00> : vector<64x32xf32>
    %62 = tpu.matmul %61, %4, %cst_27 {dimension_numbers = #tpu.dot_dimension_numbers<[1], [0], [0], [1], [0, 0, 1, 1], [], []>} : vector<64x32xf32>, vector<32x32xf32>, vector<64x32xf32> -> vector<64x32xf32>
    %63 = vector.shape_cast %20 : vector<32xf32> to vector<1x32xf32>
    %64 = vector.broadcast %63 : vector<1x32xf32> to vector<64x32xf32>
    %65 = arith.addf %62, %64 : vector<64x32xf32>
    %66 = vector.shape_cast %65 : vector<64x32xf32> to vector<2x32x32xf32>
    %cst_28 = arith.constant dense<0.000000e+00> : vector<16x64xf32>
    %67 = tpu.matmul %2, %6, %cst_28 {dimension_numbers = #tpu.dot_dimension_numbers<[1], [0], [0], [1], [0, 0, 1, 1], [], []>} : vector<16x32xf32>, vector<32x64xf32>, vector<16x64xf32> -> vector<16x64xf32>
    %68 = vector.extract_strided_slice %67 {offsets = [0, 0], sizes = [16, 32], strides = [1, 1]} : vector<16x64xf32> to vector<16x32xf32>
    %69 = vector.shape_cast %22 : vector<32xf32> to vector<1x32xf32>
    %70 = vector.broadcast %69 : vector<1x32xf32> to vector<16x32xf32>
    %71 = arith.addf %68, %70 : vector<16x32xf32>
    %72 = vector.shape_cast %71 : vector<16x32xf32> to vector<2x8x32xf32>
    %73 = vector.extract_strided_slice %67 {offsets = [0, 32], sizes = [16, 32], strides = [1, 1]} : vector<16x64xf32> to vector<16x32xf32>
    %74 = vector.shape_cast %24 : vector<32xf32> to vector<1x32xf32>
    %75 = vector.broadcast %74 : vector<1x32xf32> to vector<16x32xf32>
    %76 = arith.addf %73, %75 : vector<16x32xf32>
    %77 = vector.shape_cast %76 : vector<16x32xf32> to vector<2x8x32xf32>
    "tpu.trace_start"() <{level = 10 : i32, message = "btd,bld->btl"}> : () -> ()
    %cst_29 = arith.constant dense<0.000000e+00> : vector<2x32x8xf32>
    %78 = tpu.matmul %66, %72, %cst_29 {dimension_numbers = #tpu.dot_dimension_numbers<[2], [2], [1], [1], [0, 0, 0, 1, 1, 1], [0], [0]>} : vector<2x32x32xf32>, vector<2x8x32xf32>, vector<2x32x8xf32> -> vector<2x32x8xf32>
    "tpu.trace_stop"() : () -> ()
    %cst_30 = arith.constant dense<0xFF800000> : vector<2x32xf32>
    %79 = vector.multi_reduction <maximumf>, %78, %cst_30 [2] : vector<2x32x8xf32> to vector<2x32xf32>
    %80 = vector.shape_cast %79 : vector<2x32xf32> to vector<2x32x1xf32>
    %81 = vector.broadcast %80 : vector<2x32x1xf32> to vector<2x32x8xf32>
    %82 = arith.subf %78, %81 : vector<2x32x8xf32>
    %83 = math.exp %82 : vector<2x32x8xf32>
    %cst_31 = arith.constant dense<0.000000e+00> : vector<2x32xf32>
    %84 = vector.multi_reduction <add>, %83, %cst_31 [2] : vector<2x32x8xf32> to vector<2x32xf32>
    %85 = vector.shape_cast %84 : vector<2x32xf32> to vector<2x32x1xf32>
    %86 = tpu.reciprocal %85 {approx = true} : vector<2x32x1xf32> -> vector<2x32x1xf32>
    %87 = vector.broadcast %86 : vector<2x32x1xf32> to vector<2x32x8xf32>
    %88 = arith.mulf %83, %87 : vector<2x32x8xf32>
    "tpu.trace_start"() <{level = 10 : i32, message = "btl,bld->btd"}> : () -> ()
    %cst_32 = arith.constant dense<0.000000e+00> : vector<2x32x32xf32>
    %89 = tpu.matmul %88, %77, %cst_32 {dimension_numbers = #tpu.dot_dimension_numbers<[2], [1], [1], [2], [0, 0, 0, 1, 1, 2], [0], [0]>} : vector<2x32x8xf32>, vector<2x8x32xf32>, vector<2x32x32xf32> -> vector<2x32x32xf32>
    "tpu.trace_stop"() : () -> ()
    %90 = arith.addf %89, %60 : vector<2x32x32xf32>
    %91 = tpu.transpose %90, [0, 2, 1] : vector<2x32x32xf32> -> vector<2x32x32xf32>
    %92 = vector.shape_cast %91 : vector<2x32x32xf32> to vector<64x32xf32>
    %cst_33 = arith.constant dense<0.000000e+00> : vector<64x64xf32>
    %93 = tpu.matmul %92, %8, %cst_33 {dimension_numbers = #tpu.dot_dimension_numbers<[1], [0], [0], [1], [0, 0, 1, 1], [], []>} : vector<64x32xf32>, vector<32x64xf32>, vector<64x64xf32> -> vector<64x64xf32>
    %94 = vector.shape_cast %32 : vector<64xf32> to vector<1x64xf32>
    %95 = vector.broadcast %94 : vector<1x64xf32> to vector<64x64xf32>
    %96 = arith.addf %93, %95 : vector<64x64xf32>
    %cst_34 = arith.constant dense<0.000000e+00> : vector<64xf32>
    %97 = vector.multi_reduction <add>, %96, %cst_34 [1] : vector<64x64xf32> to vector<64xf32>
    %98 = vector.shape_cast %97 : vector<64xf32> to vector<64x1xf32>
    %cst_35 = arith.constant 6.400000e+01 : f32
    %99 = vector.broadcast %cst_35 : f32 to vector<64x1xf32>
    %100 = arith.divf %98, %99 : vector<64x1xf32>
    %101 = vector.broadcast %100 : vector<64x1xf32> to vector<64x64xf32>
    %102 = arith.subf %96, %101 : vector<64x64xf32>
    %103 = arith.mulf %102, %102 : vector<64x64xf32>
    %cst_36 = arith.constant dense<0.000000e+00> : vector<64xf32>
    %104 = vector.multi_reduction <add>, %103, %cst_36 [1] : vector<64x64xf32> to vector<64xf32>
    %105 = vector.shape_cast %104 : vector<64xf32> to vector<64x1xf32>
    %cst_37 = arith.constant 6.400000e+01 : f32
    %106 = vector.broadcast %cst_37 : f32 to vector<64x1xf32>
    %107 = arith.divf %105, %106 : vector<64x1xf32>
    %108 = vector.broadcast %100 : vector<64x1xf32> to vector<64x64xf32>
    %109 = arith.subf %96, %108 : vector<64x64xf32>
    %cst_38 = arith.constant 9.99999974E-6 : f32
    %110 = vector.broadcast %cst_38 : f32 to vector<64x1xf32>
    %111 = arith.addf %107, %110 : vector<64x1xf32>
    %112 = math.rsqrt %111 : vector<64x1xf32>
    %113 = vector.broadcast %112 : vector<64x1xf32> to vector<64x64xf32>
    %114 = arith.mulf %109, %113 : vector<64x64xf32>
    %115 = vector.shape_cast %34 : vector<64xf32> to vector<1x64xf32>
    %116 = vector.broadcast %115 : vector<1x64xf32> to vector<64x64xf32>
    %117 = arith.mulf %114, %116 : vector<64x64xf32>
    %118 = vector.shape_cast %36 : vector<64xf32> to vector<1x64xf32>
    %119 = vector.broadcast %118 : vector<1x64xf32> to vector<64x64xf32>
    %120 = arith.addf %117, %119 : vector<64x64xf32>
    %cst_39 = arith.constant 0.000000e+00 : f32
    %121 = vector.broadcast %cst_39 : f32 to vector<64x64xf32>
    %122 = arith.maximumf %120, %121 : vector<64x64xf32>
    %cst_40 = arith.constant dense<0.000000e+00> : vector<64x32xf32>
    %123 = tpu.matmul %122, %10, %cst_40 {dimension_numbers = #tpu.dot_dimension_numbers<[1], [0], [0], [1], [0, 0, 1, 1], [], []>} : vector<64x64xf32>, vector<64x32xf32>, vector<64x32xf32> -> vector<64x32xf32>
    %124 = vector.shape_cast %26 : vector<32xf32> to vector<1x32xf32>
    %125 = vector.broadcast %124 : vector<1x32xf32> to vector<64x32xf32>
    %126 = arith.addf %123, %125 : vector<64x32xf32>
    %cst_41 = arith.constant dense<0.000000e+00> : vector<64xf32>
    %127 = vector.multi_reduction <add>, %126, %cst_41 [1] : vector<64x32xf32> to vector<64xf32>
    %128 = vector.shape_cast %127 : vector<64xf32> to vector<64x1xf32>
    %cst_42 = arith.constant 3.200000e+01 : f32
    %129 = vector.broadcast %cst_42 : f32 to vector<64x1xf32>
    %130 = arith.divf %128, %129 : vector<64x1xf32>
    %131 = vector.broadcast %130 : vector<64x1xf32> to vector<64x32xf32>
    %132 = arith.subf %126, %131 : vector<64x32xf32>
    %133 = arith.mulf %132, %132 : vector<64x32xf32>
    %cst_43 = arith.constant dense<0.000000e+00> : vector<64xf32>
    %134 = vector.multi_reduction <add>, %133, %cst_43 [1] : vector<64x32xf32> to vector<64xf32>
    %135 = vector.shape_cast %134 : vector<64xf32> to vector<64x1xf32>
    %cst_44 = arith.constant 3.200000e+01 : f32
    %136 = vector.broadcast %cst_44 : f32 to vector<64x1xf32>
    %137 = arith.divf %135, %136 : vector<64x1xf32>
    %138 = vector.broadcast %130 : vector<64x1xf32> to vector<64x32xf32>
    %139 = arith.subf %126, %138 : vector<64x32xf32>
    %cst_45 = arith.constant 9.99999974E-6 : f32
    %140 = vector.broadcast %cst_45 : f32 to vector<64x1xf32>
    %141 = arith.addf %137, %140 : vector<64x1xf32>
    %142 = math.rsqrt %141 : vector<64x1xf32>
    %143 = vector.broadcast %142 : vector<64x1xf32> to vector<64x32xf32>
    %144 = arith.mulf %139, %143 : vector<64x32xf32>
    %145 = vector.shape_cast %28 : vector<32xf32> to vector<1x32xf32>
    %146 = vector.broadcast %145 : vector<1x32xf32> to vector<64x32xf32>
    %147 = arith.mulf %144, %146 : vector<64x32xf32>
    %148 = vector.shape_cast %30 : vector<32xf32> to vector<1x32xf32>
    %149 = vector.broadcast %148 : vector<1x32xf32> to vector<64x32xf32>
    %150 = arith.addf %147, %149 : vector<64x32xf32>
    %151 = vector.shape_cast %150 : vector<64x32xf32> to vector<2x32x32xf32>
    %152 = tpu.transpose %151, [0, 2, 1] : vector<2x32x32xf32> -> vector<2x32x32xf32>
    %153 = arith.addf %90, %152 : vector<2x32x32xf32>
    %c0_46 = arith.constant 0 : index
    %c0_47 = arith.constant 0 : index
    %c0_48 = arith.constant 0 : index
    %c0_49 = arith.constant 0 : index
    %154 = vector.load %arg9[%c0_46, %c0_47, %c0_48, %c0_49] : memref<2x2x32x8xf32, #tpu.memory_space<vmem>>, vector<1x2x32x8xf32>
    %155 = vector.shape_cast %154 : vector<1x2x32x8xf32> to vector<2x32x8xf32>
    %156 = vector.shape_cast %88 : vector<2x32x8xf32> to vector<1x2x32x8xf32>
    tpu.vector_store %arg9[%c0_46, %c0_47, %c0_48, %c0_49], %156 {strides = array<i32>} : memref<2x2x32x8xf32, #tpu.memory_space<vmem>>, vector<1x2x32x8xf32>,
    %c1 = arith.constant 1 : index
    %c0_50 = arith.constant 0 : index
    %c0_51 = arith.constant 0 : index
    %157 = vector.load %arg2[%c1, %c0_50, %c0_51] : memref<2x32x32xf32, #tpu.memory_space<vmem>>, vector<1x32x32xf32>
    %158 = vector.shape_cast %157 : vector<1x32x32xf32> to vector<32x32xf32>
    %c1_52 = arith.constant 1 : index
    %c0_53 = arith.constant 0 : index
    %c0_54 = arith.constant 0 : index
    %159 = vector.load %arg3[%c1_52, %c0_53, %c0_54] : memref<2x32x64xf32, #tpu.memory_space<vmem>>, vector<1x32x64xf32>
    %160 = vector.shape_cast %159 : vector<1x32x64xf32> to vector<32x64xf32>
    %c1_55 = arith.constant 1 : index
    %c0_56 = arith.constant 0 : index
    %c0_57 = arith.constant 0 : index
    %161 = vector.load %arg4[%c1_55, %c0_56, %c0_57] : memref<2x32x64xf32, #tpu.memory_space<vmem>>, vector<1x32x64xf32>
    %162 = vector.shape_cast %161 : vector<1x32x64xf32> to vector<32x64xf32>
    %c1_58 = arith.constant 1 : index
    %c0_59 = arith.constant 0 : index
    %c0_60 = arith.constant 0 : index
    %163 = vector.load %arg5[%c1_58, %c0_59, %c0_60] : memref<2x64x32xf32, #tpu.memory_space<vmem>>, vector<1x64x32xf32>
    %164 = vector.shape_cast %163 : vector<1x64x32xf32> to vector<64x32xf32>
    %c1_61 = arith.constant 1 : index
    %c0_62 = arith.constant 0 : index
    %c0_63 = arith.constant 0 : index
    %165 = vector.load %arg6[%c1_61, %c0_62, %c0_63] : memref<2x8x32xf32, #tpu.memory_space<vmem>>, vector<1x8x32xf32>
    %166 = vector.shape_cast %165 : vector<1x8x32xf32> to vector<8x32xf32>
    %c1_64 = arith.constant 1 : index
    %c0_65 = arith.constant 0 : index
    %c0_66 = arith.constant 0 : index
    %167 = vector.load %arg7[%c1_64, %c0_65, %c0_66] : memref<2x3x64xf32, #tpu.memory_space<vmem>>, vector<1x3x64xf32>
    %168 = vector.shape_cast %167 : vector<1x3x64xf32> to vector<3x64xf32>
    %169 = vector.extract_strided_slice %166 {offsets = [0, 0], sizes = [1, 32], strides = [1, 1]} : vector<8x32xf32> to vector<1x32xf32>
    %170 = vector.shape_cast %169 : vector<1x32xf32> to vector<32xf32>
    %171 = vector.extract_strided_slice %166 {offsets = [1, 0], sizes = [1, 32], strides = [1, 1]} : vector<8x32xf32> to vector<1x32xf32>
    %172 = vector.shape_cast %171 : vector<1x32xf32> to vector<32xf32>
    %173 = vector.extract_strided_slice %166 {offsets = [2, 0], sizes = [1, 32], strides = [1, 1]} : vector<8x32xf32> to vector<1x32xf32>
    %174 = vector.shape_cast %173 : vector<1x32xf32> to vector<32xf32>
    %175 = vector.extract_strided_slice %166 {offsets = [3, 0], sizes = [1, 32], strides = [1, 1]} : vector<8x32xf32> to vector<1x32xf32>
    %176 = vector.shape_cast %175 : vector<1x32xf32> to vector<32xf32>
    %177 = vector.extract_strided_slice %166 {offsets = [4, 0], sizes = [1, 32], strides = [1, 1]} : vector<8x32xf32> to vector<1x32xf32>
    %178 = vector.shape_cast %177 : vector<1x32xf32> to vector<32xf32>
    %179 = vector.extract_strided_slice %166 {offsets = [5, 0], sizes = [1, 32], strides = [1, 1]} : vector<8x32xf32> to vector<1x32xf32>
    %180 = vector.shape_cast %179 : vector<1x32xf32> to vector<32xf32>
    %181 = vector.extract_strided_slice %166 {offsets = [6, 0], sizes = [1, 32], strides = [1, 1]} : vector<8x32xf32> to vector<1x32xf32>
    %182 = vector.shape_cast %181 : vector<1x32xf32> to vector<32xf32>
    %183 = vector.extract_strided_slice %166 {offsets = [7, 0], sizes = [1, 32], strides = [1, 1]} : vector<8x32xf32> to vector<1x32xf32>
    %184 = vector.shape_cast %183 : vector<1x32xf32> to vector<32xf32>
    %185 = vector.extract_strided_slice %168 {offsets = [0, 0], sizes = [1, 64], strides = [1, 1]} : vector<3x64xf32> to vector<1x64xf32>
    %186 = vector.shape_cast %185 : vector<1x64xf32> to vector<64xf32>
    %187 = vector.extract_strided_slice %168 {offsets = [1, 0], sizes = [1, 64], strides = [1, 1]} : vector<3x64xf32> to vector<1x64xf32>
    %188 = vector.shape_cast %187 : vector<1x64xf32> to vector<64xf32>
    %189 = vector.extract_strided_slice %168 {offsets = [2, 0], sizes = [1, 64], strides = [1, 1]} : vector<3x64xf32> to vector<1x64xf32>
    %190 = vector.shape_cast %189 : vector<1x64xf32> to vector<64xf32>
    %cst_67 = arith.constant dense<0.000000e+00> : vector<2x32xf32>
    %191 = vector.multi_reduction <add>, %153, %cst_67 [2] : vector<2x32x32xf32> to vector<2x32xf32>
    %192 = vector.shape_cast %191 : vector<2x32xf32> to vector<2x32x1xf32>
    %cst_68 = arith.constant 3.200000e+01 : f32
    %193 = vector.broadcast %cst_68 : f32 to vector<2x32x1xf32>
    %194 = arith.divf %192, %193 : vector<2x32x1xf32>
    %195 = vector.broadcast %194 : vector<2x32x1xf32> to vector<2x32x32xf32>
    %196 = arith.subf %153, %195 : vector<2x32x32xf32>
    %197 = arith.mulf %196, %196 : vector<2x32x32xf32>
    %cst_69 = arith.constant dense<0.000000e+00> : vector<2x32xf32>
    %198 = vector.multi_reduction <add>, %197, %cst_69 [2] : vector<2x32x32xf32> to vector<2x32xf32>
    %199 = vector.shape_cast %198 : vector<2x32xf32> to vector<2x32x1xf32>
    %cst_70 = arith.constant 3.200000e+01 : f32
    %200 = vector.broadcast %cst_70 : f32 to vector<2x32x1xf32>
    %201 = arith.divf %199, %200 : vector<2x32x1xf32>
    %202 = vector.broadcast %194 : vector<2x32x1xf32> to vector<2x32x32xf32>
    %203 = arith.subf %153, %202 : vector<2x32x32xf32>
    %cst_71 = arith.constant 9.99999974E-6 : f32
    %204 = vector.broadcast %cst_71 : f32 to vector<2x32x1xf32>
    %205 = arith.addf %201, %204 : vector<2x32x1xf32>
    %206 = math.rsqrt %205 : vector<2x32x1xf32>
    %207 = vector.broadcast %206 : vector<2x32x1xf32> to vector<2x32x32xf32>
    %208 = arith.mulf %203, %207 : vector<2x32x32xf32>
    %209 = vector.shape_cast %170 : vector<32xf32> to vector<1x1x32xf32>
    %210 = vector.broadcast %209 : vector<1x1x32xf32> to vector<2x32x32xf32>
    %211 = arith.mulf %208, %210 : vector<2x32x32xf32>
    %212 = vector.shape_cast %172 : vector<32xf32> to vector<1x1x32xf32>
    %213 = vector.broadcast %212 : vector<1x1x32xf32> to vector<2x32x32xf32>
    %214 = arith.addf %211, %213 : vector<2x32x32xf32>
    %215 = vector.shape_cast %214 : vector<2x32x32xf32> to vector<64x32xf32>
    %cst_72 = arith.constant dense<0.000000e+00> : vector<64x32xf32>
    %216 = tpu.matmul %215, %158, %cst_72 {dimension_numbers = #tpu.dot_dimension_numbers<[1], [0], [0], [1], [0, 0, 1, 1], [], []>} : vector<64x32xf32>, vector<32x32xf32>, vector<64x32xf32> -> vector<64x32xf32>
    %217 = vector.shape_cast %174 : vector<32xf32> to vector<1x32xf32>
    %218 = vector.broadcast %217 : vector<1x32xf32> to vector<64x32xf32>
    %219 = arith.addf %216, %218 : vector<64x32xf32>
    %220 = vector.shape_cast %219 : vector<64x32xf32> to vector<2x32x32xf32>
    %cst_73 = arith.constant dense<0.000000e+00> : vector<16x64xf32>
    %221 = tpu.matmul %2, %160, %cst_73 {dimension_numbers = #tpu.dot_dimension_numbers<[1], [0], [0], [1], [0, 0, 1, 1], [], []>} : vector<16x32xf32>, vector<32x64xf32>, vector<16x64xf32> -> vector<16x64xf32>
    %222 = vector.extract_strided_slice %221 {offsets = [0, 0], sizes = [16, 32], strides = [1, 1]} : vector<16x64xf32> to vector<16x32xf32>
    %223 = vector.shape_cast %176 : vector<32xf32> to vector<1x32xf32>
    %224 = vector.broadcast %223 : vector<1x32xf32> to vector<16x32xf32>
    %225 = arith.addf %222, %224 : vector<16x32xf32>
    %226 = vector.shape_cast %225 : vector<16x32xf32> to vector<2x8x32xf32>
    %227 = vector.extract_strided_slice %221 {offsets = [0, 32], sizes = [16, 32], strides = [1, 1]} : vector<16x64xf32> to vector<16x32xf32>
    %228 = vector.shape_cast %178 : vector<32xf32> to vector<1x32xf32>
    %229 = vector.broadcast %228 : vector<1x32xf32> to vector<16x32xf32>
    %230 = arith.addf %227, %229 : vector<16x32xf32>
    %231 = vector.shape_cast %230 : vector<16x32xf32> to vector<2x8x32xf32>
    "tpu.trace_start"() <{level = 10 : i32, message = "btd,bld->btl"}> : () -> ()
    %cst_74 = arith.constant dense<0.000000e+00> : vector<2x32x8xf32>
    %232 = tpu.matmul %220, %226, %cst_74 {dimension_numbers = #tpu.dot_dimension_numbers<[2], [2], [1], [1], [0, 0, 0, 1, 1, 1], [0], [0]>} : vector<2x32x32xf32>, vector<2x8x32xf32>, vector<2x32x8xf32> -> vector<2x32x8xf32>
    "tpu.trace_stop"() : () -> ()
    %cst_75 = arith.constant dense<0xFF800000> : vector<2x32xf32>
    %233 = vector.multi_reduction <maximumf>, %232, %cst_75 [2] : vector<2x32x8xf32> to vector<2x32xf32>
    %234 = vector.shape_cast %233 : vector<2x32xf32> to vector<2x32x1xf32>
    %235 = vector.broadcast %234 : vector<2x32x1xf32> to vector<2x32x8xf32>
    %236 = arith.subf %232, %235 : vector<2x32x8xf32>
    %237 = math.exp %236 : vector<2x32x8xf32>
    %cst_76 = arith.constant dense<0.000000e+00> : vector<2x32xf32>
    %238 = vector.multi_reduction <add>, %237, %cst_76 [2] : vector<2x32x8xf32> to vector<2x32xf32>
    %239 = vector.shape_cast %238 : vector<2x32xf32> to vector<2x32x1xf32>
    %240 = tpu.reciprocal %239 {approx = true} : vector<2x32x1xf32> -> vector<2x32x1xf32>
    %241 = vector.broadcast %240 : vector<2x32x1xf32> to vector<2x32x8xf32>
    %242 = arith.mulf %237, %241 : vector<2x32x8xf32>
    "tpu.trace_start"() <{level = 10 : i32, message = "btl,bld->btd"}> : () -> ()
    %cst_77 = arith.constant dense<0.000000e+00> : vector<2x32x32xf32>
    %243 = tpu.matmul %242, %231, %cst_77 {dimension_numbers = #tpu.dot_dimension_numbers<[2], [1], [1], [2], [0, 0, 0, 1, 1, 2], [0], [0]>} : vector<2x32x8xf32>, vector<2x8x32xf32>, vector<2x32x32xf32> -> vector<2x32x32xf32>
    "tpu.trace_stop"() : () -> ()
    %244 = arith.addf %243, %214 : vector<2x32x32xf32>
    %245 = tpu.transpose %244, [0, 2, 1] : vector<2x32x32xf32> -> vector<2x32x32xf32>
    %246 = vector.shape_cast %245 : vector<2x32x32xf32> to vector<64x32xf32>
    %cst_78 = arith.constant dense<0.000000e+00> : vector<64x64xf32>
    %247 = tpu.matmul %246, %162, %cst_78 {dimension_numbers = #tpu.dot_dimension_numbers<[1], [0], [0], [1], [0, 0, 1, 1], [], []>} : vector<64x32xf32>, vector<32x64xf32>, vector<64x64xf32> -> vector<64x64xf32>
    %248 = vector.shape_cast %186 : vector<64xf32> to vector<1x64xf32>
    %249 = vector.broadcast %248 : vector<1x64xf32> to vector<64x64xf32>
    %250 = arith.addf %247, %249 : vector<64x64xf32>
    %cst_79 = arith.constant dense<0.000000e+00> : vector<64xf32>
    %251 = vector.multi_reduction <add>, %250, %cst_79 [1] : vector<64x64xf32> to vector<64xf32>
    %252 = vector.shape_cast %251 : vector<64xf32> to vector<64x1xf32>
    %cst_80 = arith.constant 6.400000e+01 : f32
    %253 = vector.broadcast %cst_80 : f32 to vector<64x1xf32>
    %254 = arith.divf %252, %253 : vector<64x1xf32>
    %255 = vector.broadcast %254 : vector<64x1xf32> to vector<64x64xf32>
    %256 = arith.subf %250, %255 : vector<64x64xf32>
    %257 = arith.mulf %256, %256 : vector<64x64xf32>
    %cst_81 = arith.constant dense<0.000000e+00> : vector<64xf32>
    %258 = vector.multi_reduction <add>, %257, %cst_81 [1] : vector<64x64xf32> to vector<64xf32>
    %259 = vector.shape_cast %258 : vector<64xf32> to vector<64x1xf32>
    %cst_82 = arith.constant 6.400000e+01 : f32
    %260 = vector.broadcast %cst_82 : f32 to vector<64x1xf32>
    %261 = arith.divf %259, %260 : vector<64x1xf32>
    %262 = vector.broadcast %254 : vector<64x1xf32> to vector<64x64xf32>
    %263 = arith.subf %250, %262 : vector<64x64xf32>
    %cst_83 = arith.constant 9.99999974E-6 : f32
    %264 = vector.broadcast %cst_83 : f32 to vector<64x1xf32>
    %265 = arith.addf %261, %264 : vector<64x1xf32>
    %266 = math.rsqrt %265 : vector<64x1xf32>
    %267 = vector.broadcast %266 : vector<64x1xf32> to vector<64x64xf32>
    %268 = arith.mulf %263, %267 : vector<64x64xf32>
    %269 = vector.shape_cast %188 : vector<64xf32> to vector<1x64xf32>
    %270 = vector.broadcast %269 : vector<1x64xf32> to vector<64x64xf32>
    %271 = arith.mulf %268, %270 : vector<64x64xf32>
    %272 = vector.shape_cast %190 : vector<64xf32> to vector<1x64xf32>
    %273 = vector.broadcast %272 : vector<1x64xf32> to vector<64x64xf32>
    %274 = arith.addf %271, %273 : vector<64x64xf32>
    %cst_84 = arith.constant 0.000000e+00 : f32
    %275 = vector.broadcast %cst_84 : f32 to vector<64x64xf32>
    %276 = arith.maximumf %274, %275 : vector<64x64xf32>
    %cst_85 = arith.constant dense<0.000000e+00> : vector<64x32xf32>
    %277 = tpu.matmul %276, %164, %cst_85 {dimension_numbers = #tpu.dot_dimension_numbers<[1], [0], [0], [1], [0, 0, 1, 1], [], []>} : vector<64x64xf32>, vector<64x32xf32>, vector<64x32xf32> -> vector<64x32xf32>
    %278 = vector.shape_cast %180 : vector<32xf32> to vector<1x32xf32>
    %279 = vector.broadcast %278 : vector<1x32xf32> to vector<64x32xf32>
    %280 = arith.addf %277, %279 : vector<64x32xf32>
    %cst_86 = arith.constant dense<0.000000e+00> : vector<64xf32>
    %281 = vector.multi_reduction <add>, %280, %cst_86 [1] : vector<64x32xf32> to vector<64xf32>
    %282 = vector.shape_cast %281 : vector<64xf32> to vector<64x1xf32>
    %cst_87 = arith.constant 3.200000e+01 : f32
    %283 = vector.broadcast %cst_87 : f32 to vector<64x1xf32>
    %284 = arith.divf %282, %283 : vector<64x1xf32>
    %285 = vector.broadcast %284 : vector<64x1xf32> to vector<64x32xf32>
    %286 = arith.subf %280, %285 : vector<64x32xf32>
    %287 = arith.mulf %286, %286 : vector<64x32xf32>
    %cst_88 = arith.constant dense<0.000000e+00> : vector<64xf32>
    %288 = vector.multi_reduction <add>, %287, %cst_88 [1] : vector<64x32xf32> to vector<64xf32>
    %289 = vector.shape_cast %288 : vector<64xf32> to vector<64x1xf32>
    %cst_89 = arith.constant 3.200000e+01 : f32
    %290 = vector.broadcast %cst_89 : f32 to vector<64x1xf32>
    %291 = arith.divf %289, %290 : vector<64x1xf32>
    %292 = vector.broadcast %284 : vector<64x1xf32> to vector<64x32xf32>
    %293 = arith.subf %280, %292 : vector<64x32xf32>
    %cst_90 = arith.constant 9.99999974E-6 : f32
    %294 = vector.broadcast %cst_90 : f32 to vector<64x1xf32>
    %295 = arith.addf %291, %294 : vector<64x1xf32>
    %296 = math.rsqrt %295 : vector<64x1xf32>
    %297 = vector.broadcast %296 : vector<64x1xf32> to vector<64x32xf32>
    %298 = arith.mulf %293, %297 : vector<64x32xf32>
    %299 = vector.shape_cast %182 : vector<32xf32> to vector<1x32xf32>
    %300 = vector.broadcast %299 : vector<1x32xf32> to vector<64x32xf32>
    %301 = arith.mulf %298, %300 : vector<64x32xf32>
    %302 = vector.shape_cast %184 : vector<32xf32> to vector<1x32xf32>
    %303 = vector.broadcast %302 : vector<1x32xf32> to vector<64x32xf32>
    %304 = arith.addf %301, %303 : vector<64x32xf32>
    %305 = vector.shape_cast %304 : vector<64x32xf32> to vector<2x32x32xf32>
    %306 = tpu.transpose %305, [0, 2, 1] : vector<2x32x32xf32> -> vector<2x32x32xf32>
    %307 = arith.addf %244, %306 : vector<2x32x32xf32>
    %c1_91 = arith.constant 1 : index
    %c0_92 = arith.constant 0 : index
    %c0_93 = arith.constant 0 : index
    %c0_94 = arith.constant 0 : index
    %308 = vector.load %arg9[%c1_91, %c0_92, %c0_93, %c0_94] : memref<2x2x32x8xf32, #tpu.memory_space<vmem>>, vector<1x2x32x8xf32>
    %309 = vector.shape_cast %308 : vector<1x2x32x8xf32> to vector<2x32x8xf32>
    %310 = vector.shape_cast %242 : vector<2x32x8xf32> to vector<1x2x32x8xf32>
    tpu.vector_store %arg9[%c1_91, %c0_92, %c0_93, %c0_94], %310 {strides = array<i32>} : memref<2x2x32x8xf32, #tpu.memory_space<vmem>>, vector<1x2x32x8xf32>,
    %c0_95 = arith.constant 0 : index
    %c0_96 = arith.constant 0 : index
    %c0_97 = arith.constant 0 : index
    %311 = vector.load %arg8[%c0_95, %c0_96, %c0_97] : memref<2x32x32xf32, #tpu.memory_space<vmem>>, vector<2x32x32xf32>
    tpu.vector_store %arg8[%c0_95, %c0_96, %c0_97], %307 {strides = array<i32>} : memref<2x32x32xf32, #tpu.memory_space<vmem>>, vector<2x32x32xf32>,
    return
  }
}

</mosaic_0001>

<llo_original>
// kernel: tpu_custom_call.1
$region0: #{tpu_custom_call.1}
  #allocation0 [shape = 'u32[]', space=smem, size = 0x4, offset = 0x4, fixed_abs, tag = 'smem constant byte address 0x4 - core index']
  #allocation1 [shape = 'u32[144,128]{1,0:T(1,128)}', space=vmem, size = 0x12000, scoped, tag = 'internal scratch']
  %s0 = inlined_call_operand.vmem [shape: f32[2,32,32], index: 0, kind: input, shape index: {}]
  %s1 = inlined_call_operand.vmem [shape: f32[2,8,32], index: 1, kind: input, shape index: {}]
  %s2 = inlined_call_operand.vmem [shape: f32[2,32,32], index: 2, kind: input, shape index: {}]
  %s3 = inlined_call_operand.vmem [shape: f32[2,32,64], index: 3, kind: input, shape index: {}]
  %s4 = inlined_call_operand.hbm [shape: f32[2,32,64], index: 4, kind: input, shape index: {}]
  %s5 = inlined_call_operand.vmem [shape: f32[2,64,32], index: 5, kind: input, shape index: {}]
  %s6 = inlined_call_operand.vmem [shape: f32[2,8,32], index: 6, kind: input, shape index: {}]
  %s7 = inlined_call_operand.vmem [shape: f32[2,3,64], index: 7, kind: input, shape index: {}]
  %s8 = inlined_call_operand.hbm [shape: f32[2,32,32], index: 8, kind: output, shape index: {0}]
  %s9 = inlined_call_operand.vmem [shape: f32[2,2,32,8], index: 9, kind: output, shape index: {1}]
  %10 = xla_tuple %s8, %s9
  %s11 = sld [smem:[#allocation0]]
  $region54: #{tpu_custom_call.1} parent=0
    _
  %s13 = ssub.s32 1, %s11
  %s14 = scalar_select 0, %s13, %s11
  $region1: #{tpu_custom_call.1} parent=0
    #allocation2 [shape = 'u8[32768]{0}', space=vmem, size = 0x8000, scoped, tag = 'input window, operand 4, single buffered']
    #allocation3 [shape = 's32[1]{0}', space=sflag, size = 0x4, scoped, tag = 'scoped memory for tpu_custom_call.1']
    #allocation4 [shape = 's32[1]{0}', space=sflag, size = 0x4, scoped, tag = 'scoped memory for tpu_custom_call.1']
    #allocation5 [shape = 'u8[32768]{0}', space=vmem, size = 0x8000, scoped, tag = 'output window, operand 0, single buffered']
    %15 = vsyncpa [#allocation3], 0
    %16 = vsyncpa [#allocation4], 0
    // Predicated region
    $region2: #{tpu_custom_call.1} parent=1 // pred_check
      _
    $region3: #{tpu_custom_call.1} parent=1 // pred_check_branch
      %18 = sbr.rel (0) target = $region5
    $region4: #{tpu_custom_call.1} parent=1 // pred_region
      _
    $region5: #{tpu_custom_call.1} parent=1 // pred_fallthru
      _
    // Predicated region
    $region6: #{tpu_custom_call.1} parent=1 // pred_check
      _
    $region7: #{tpu_custom_call.1} parent=1 // pred_check_branch
      %20 = sbr.rel (0) target = $region9
    $region8: #{tpu_custom_call.1} parent=1 // pred_region
      _
    $region9: #{tpu_custom_call.1} parent=1 // pred_fallthru
      _
    // Predicated region
    $region10: #{tpu_custom_call.1} parent=1 // pred_check
      _
    $region11: #{tpu_custom_call.1} parent=1 // pred_check_branch
      %22 = sbr.rel (0) target = $region13
    $region12: #{tpu_custom_call.1} parent=1 // pred_region
      _
    $region13: #{tpu_custom_call.1} parent=1 // pred_fallthru
      _
    // Predicated region
    $region14: #{tpu_custom_call.1} parent=1 // pred_check
      _
    $region15: #{tpu_custom_call.1} parent=1 // pred_check_branch
      %24 = sbr.rel (0) target = $region17
    $region16: #{tpu_custom_call.1} parent=1 // pred_region
      _
    $region17: #{tpu_custom_call.1} parent=1 // pred_fallthru
      _
    // Predicated region
    $region18: #{tpu_custom_call.1} parent=1 // pred_check
      _
    $region19: #{tpu_custom_call.1} parent=1 // pred_check_branch
      %26 = sbr.rel (0) target = $region21
    $region20: #{tpu_custom_call.1} parent=1 // pred_region
      %s28 = ssub.s32 1024, 1024
      %29 = vsyncadd [#allocation3], %s28
      %s30 = sshll.u32 [#allocation2], 4
      %s31 = int_to_ptr.vmem [resolvable:$true] %s30
      %36 = dma.hbm_to_vmem [thread:$0]  %s4, 1024, %s31, [#allocation3], 128, 128, 8
    $region21: #{tpu_custom_call.1} parent=1 // pred_fallthru
      _
    // Predicated region
    $region22: #{tpu_custom_call.1} parent=1 // pred_check
      _
    $region23: #{tpu_custom_call.1} parent=1 // pred_check_branch
      %38 = sbr.rel (0) target = $region25
    $region24: #{tpu_custom_call.1} parent=1 // pred_region
      _
    $region25: #{tpu_custom_call.1} parent=1 // pred_fallthru
      _
    // Predicated region
    $region26: #{tpu_custom_call.1} parent=1 // pred_check
      _
    $region27: #{tpu_custom_call.1} parent=1 // pred_check_branch
      %40 = sbr.rel (0) target = $region29
    $region28: #{tpu_custom_call.1} parent=1 // pred_region
      _
    $region29: #{tpu_custom_call.1} parent=1 // pred_fallthru
      _
    // Predicated region
    $region30: #{tpu_custom_call.1} parent=1 // pred_check
      _
    $region31: #{tpu_custom_call.1} parent=1 // pred_check_branch
      %42 = sbr.rel (0) target = $region33
    $region32: #{tpu_custom_call.1} parent=1 // pred_region
      _
    $region33: #{tpu_custom_call.1} parent=1 // pred_fallthru
      _
    // Predicated region
    $region34: #{tpu_custom_call.1} parent=1 // pred_check
      _
    $region35: #{tpu_custom_call.1} parent=1 // pred_check_branch
      %44 = sbr.rel (0) target = $region37
    $region36: #{tpu_custom_call.1} parent=1 // pred_region
      %45 = dma.done [#allocation3], 1024
    $region37: #{tpu_custom_call.1} parent=1 // pred_fallthru
      _
    %v46 = vld [vmem:[%s0] sm:$0xff]
    %v47 = vld [vmem:[%s0 + $0x8] sm:$0xff]
    %v48 = vld [vmem:[%s0 + $0x10] sm:$0xff]
    %v49 = vld [vmem:[%s0 + $0x18] sm:$0xff]
    %v50 = vld [vmem:[%s0 + $0x20] sm:$0xff]
    %v51 = vld [vmem:[%s0 + $0x28] sm:$0xff]
    %v52 = vld [vmem:[%s0 + $0x30] sm:$0xff]
    %v53 = vld [vmem:[%s0 + $0x38] sm:$0xff]
    %v54 = vld [vmem:[%s1] sm:$0xff]
    %v55 = vld [vmem:[%s1 + $0x8] sm:$0xff]
    %v56 = vld [vmem:[%s2] sm:$0xff]
    %v57 = vld [vmem:[%s2 + $0x8] sm:$0xff]
    %v58 = vld [vmem:[%s2 + $0x10] sm:$0xff]
    %v59 = vld [vmem:[%s2 + $0x18] sm:$0xff]
    %v60 = vld [vmem:[%s3] sm:$0xff]
    %v61 = vld [vmem:[%s3 + $0x8] sm:$0xff]
    %v62 = vld [vmem:[%s3 + $0x10] sm:$0xff]
    %v63 = vld [vmem:[%s3 + $0x18] sm:$0xff]
    %v64 = vld [vmem:[#allocation2] sm:$0xff]
    %v65 = vld [vmem:[#allocation2 + $0x8] sm:$0xff]
    %v66 = vld [vmem:[#allocation2 + $0x10] sm:$0xff]
    %v67 = vld [vmem:[#allocation2 + $0x18] sm:$0xff]
    %v68 = vld [vmem:[%s5] sm:$0xff]
    %v69 = vld [vmem:[%s5 + $0x8] sm:$0xff]
    %v70 = vld [vmem:[%s5 + $0x10] sm:$0xff]
    %v71 = vld [vmem:[%s5 + $0x18] sm:$0xff]
    %v72 = vld [vmem:[%s5 + $0x20] sm:$0xff]
    %v73 = vld [vmem:[%s5 + $0x28] sm:$0xff]
    %v74 = vld [vmem:[%s5 + $0x30] sm:$0xff]
    %v75 = vld [vmem:[%s5 + $0x38] sm:$0xff]
    %v76 = vld [vmem:[%s6] sm:$0xff]
    %v77 = vld [vmem:[%s7] sm:$0x7]
    %vm78 = vcmask 261120
    %v79 = vsel %vm78, %v46, 0.0
    %80 = vadd.xlane.f32.xlu0 %v79
    %v81 = vpop.xlane.xlu0 %80
    %v82 = vsel %vm78, %v47, 0.0
    %83 = vadd.xlane.f32.xlu0 %v82
    %v84 = vpop.xlane.xlu0 %83
    %v85 = vsel %vm78, %v48, 0.0
    %86 = vadd.xlane.f32.xlu0 %v85
    %v87 = vpop.xlane.xlu0 %86
    %v88 = vsel %vm78, %v49, 0.0
    %89 = vadd.xlane.f32.xlu0 %v88
    %v90 = vpop.xlane.xlu0 %89
    %v91 = vsel %vm78, %v50, 0.0
    %92 = vadd.xlane.f32.xlu0 %v91
    %v93 = vpop.xlane.xlu0 %92
    %v94 = vsel %vm78, %v51, 0.0
    %95 = vadd.xlane.f32.xlu0 %v94
    %v96 = vpop.xlane.xlu0 %95
    %v97 = vsel %vm78, %v52, 0.0
    %98 = vadd.xlane.f32.xlu0 %v97
    %v99 = vpop.xlane.xlu0 %98
    %v100 = vsel %vm78, %v53, 0.0
    %101 = vadd.xlane.f32.xlu0 %v100
    %v102 = vpop.xlane.xlu0 %101
    %v103 = vrcp.pop 32.0
    %v104 = vmul.f32 %v81, %v103
    %v105 = vmul.f32 %v84, %v103
    %v106 = vmul.f32 %v87, %v103
    %v107 = vmul.f32 %v90, %v103
    %v108 = vmul.f32 %v93, %v103
    %v109 = vmul.f32 %v96, %v103
    %v110 = vmul.f32 %v99, %v103
    %v111 = vmul.f32 %v102, %v103
    %v112 = vsub.f32 %v46, %v104
    %v113 = vsub.f32 %v47, %v105
    %v114 = vsub.f32 %v48, %v106
    %v115 = vsub.f32 %v49, %v107
    %v116 = vsub.f32 %v50, %v108
    %v117 = vsub.f32 %v51, %v109
    %v118 = vsub.f32 %v52, %v110
    %v119 = vsub.f32 %v53, %v111
    %v120 = vmul.f32 %v112, %v112
    %v121 = vmul.f32 %v113, %v113
    %v122 = vmul.f32 %v114, %v114
    %v123 = vmul.f32 %v115, %v115
    %v124 = vmul.f32 %v116, %v116
    %v125 = vmul.f32 %v117, %v117
    %v126 = vmul.f32 %v118, %v118
    %v127 = vmul.f32 %v119, %v119
    %v128 = vsel %vm78, %v120, 0.0
    %129 = vadd.xlane.f32.xlu0 %v128
    %v130 = vpop.xlane.xlu0 %129
    %v131 = vsel %vm78, %v121, 0.0
    %132 = vadd.xlane.f32.xlu0 %v131
    %v133 = vpop.xlane.xlu0 %132
    %v134 = vsel %vm78, %v122, 0.0
    %135 = vadd.xlane.f32.xlu0 %v134
    %v136 = vpop.xlane.xlu0 %135
    %v137 = vsel %vm78, %v123, 0.0
    %138 = vadd.xlane.f32.xlu0 %v137
    %v139 = vpop.xlane.xlu0 %138
    %v140 = vsel %vm78, %v124, 0.0
    %141 = vadd.xlane.f32.xlu0 %v140
    %v142 = vpop.xlane.xlu0 %141
    %v143 = vsel %vm78, %v125, 0.0
    %144 = vadd.xlane.f32.xlu0 %v143
    %v145 = vpop.xlane.xlu0 %144
    %v146 = vsel %vm78, %v126, 0.0
    %147 = vadd.xlane.f32.xlu0 %v146
    %v148 = vpop.xlane.xlu0 %147
    %v149 = vsel %vm78, %v127, 0.0
    %150 = vadd.xlane.f32.xlu0 %v149
    %v151 = vpop.xlane.xlu0 %150
    %v152 = vmul.f32 %v130, %v103
    %v153 = vmul.f32 %v133, %v103
    %v154 = vmul.f32 %v136, %v103
    %v155 = vmul.f32 %v139, %v103
    %v156 = vmul.f32 %v142, %v103
    %v157 = vmul.f32 %v145, %v103
    %v158 = vmul.f32 %v148, %v103
    %v159 = vmul.f32 %v151, %v103
    %v160 = vadd.f32 %v152, 1e-05
    %v161 = vadd.f32 %v153, 1e-05
    %v162 = vadd.f32 %v154, 1e-05
    %v163 = vadd.f32 %v155, 1e-05
    %v164 = vadd.f32 %v156, 1e-05
    %v165 = vadd.f32 %v157, 1e-05
    %v166 = vadd.f32 %v158, 1e-05
    %v167 = vadd.f32 %v159, 1e-05
    %v168 = vrsqrt.pop %v160
    %v169 = vrsqrt.pop %v161
    %v170 = vrsqrt.pop %v162
    %v171 = vrsqrt.pop %v163
    %v172 = vrsqrt.pop %v164
    %v173 = vrsqrt.pop %v165
    %v174 = vrsqrt.pop %v166
    %v175 = vrsqrt.pop %v167
    %v176 = vmul.f32 %v112, %v168
    %v177 = vmul.f32 %v113, %v169
    %v178 = vmul.f32 %v114, %v170
    %v179 = vmul.f32 %v115, %v171
    %v180 = vmul.f32 %v116, %v172
    %v181 = vmul.f32 %v117, %v173
    %v182 = vmul.f32 %v118, %v174
    %v183 = vmul.f32 %v119, %v175
    %v184 = vlaneseq
    %v185 = vshrl.u32 %v184, 7
    %v186 = vsub.s32 0, %v185
    %v187 = vrot.slane %v76, %v186
    %v188 = vmul.f32 %v176, %v187
    %v189 = vmul.f32 %v177, %v187
    %v190 = vmul.f32 %v178, %v187
    %v191 = vmul.f32 %v179, %v187
    %v192 = vmul.f32 %v180, %v187
    %v193 = vmul.f32 %v181, %v187
    %v194 = vmul.f32 %v182, %v187
    %v195 = vmul.f32 %v183, %v187
    %v196 = vlaneseq
    %v197 = vshrl.u32 %v196, 7
    %v198 = vsub.s32 1, %v197
    %v199 = vrot.slane %v76, %v198
    %v200 = vadd.f32 %v188, %v199
    %v201 = vadd.f32 %v189, %v199
    %v202 = vadd.f32 %v190, %v199
    %v203 = vadd.f32 %v191, %v199
    %v204 = vadd.f32 %v192, %v199
    %v205 = vadd.f32 %v193, %v199
    %v206 = vadd.f32 %v194, %v199
    %v207 = vadd.f32 %v195, %v199
    %v208 = vlaneseq
    %v209 = vshrl.u32 %v208, 7
    %v210 = vsub.s32 2, %v209
    %v211 = vrot.slane %v76, %v210
    %v213 = vsel %vm78, %v200, 0
    %v216 = vsel %vm78, %v201, 0
    %v219 = vsel %vm78, %v202, 0
    %v222 = vsel %vm78, %v203, 0
    %v225 = vsel %vm78, %v204, 0
    %v228 = vsel %vm78, %v205, 0
    %v231 = vsel %vm78, %v206, 0
    %v234 = vsel %vm78, %v207, 0
    %236 = vmatprep.subr.mxu0 0.0
    %237 = vmatpush1.msra.mxu0 %v56
    %238 = vmatprep.subr.mxu0 0.0
    %239 = vmatpush1.msra.mxu0 %v57
    %240 = vmatprep.subr.mxu0 0.0
    %241 = vmatpush1.msra.mxu0 %v58
    %242 = vmatprep.subr.mxu0 0.0
    %243 = vmatpush1.msra.mxu0 %v59
    %244 = vmatprep.subr.mxu0 0.0
    %245 = vmatpush1.msra.mxu0 0.0
    %246 = vmatprep.subr.mxu0 0.0
    %247 = vmatpush1.msra.mxu0 0.0
    %248 = vmatprep.subr.mxu0 0.0
    %249 = vmatpush1.msra.mxu0 0.0
    %250 = vmatprep.subr.mxu0 0.0
    %251 = vmatpush1.msra.mxu0 0.0
    %252 = vmatprep.subr.mxu0 0.0
    %253 = vmatpush1.msra.mxu0 0.0
    %254 = vmatprep.subr.mxu0 0.0
    %255 = vmatpush1.msra.mxu0 0.0
    %256 = vmatprep.subr.mxu0 0.0
    %257 = vmatpush1.msra.mxu0 0.0
    %258 = vmatprep.subr.mxu0 0.0
    %259 = vmatpush1.msra.mxu0 0.0
    %260 = vmatprep.subr.mxu0 0.0
    %261 = vmatpush1.msra.mxu0 0.0
    %262 = vmatprep.subr.mxu0 0.0
    %263 = vmatpush1.msra.mxu0 0.0
    %264 = vmatprep.subr.mxu0 0.0
    %265 = vmatpush1.msra.mxu0 0.0
    %266 = vmatprep.subr.mxu0 0.0
    %267 = vmatpush1.msra.mxu0 0.0
    %268 = vmatprep.subr.mxu0 0.0
    %269 = vmatpush1.msra.mxu0 0.0
    %270 = vmatprep.subr.mxu0 0.0
    %271 = vmatpush1.msra.mxu0 0.0
    %272 = vmatprep.subr.mxu0 0.0
    %273 = vmatpush1.msra.mxu0 0.0
    %274 = vmatprep.subr.mxu0 0.0
    %275 = vmatpush1.msra.mxu0 0.0
    %276 = vmatprep.subr.mxu0 0.0
    %277 = vmatpush1.msra.mxu0 0.0
    %278 = vmatprep.subr.mxu0 0.0
    %279 = vmatpush1.msra.mxu0 0.0
    %280 = vmatprep.subr.mxu0 0.0
    %281 = vmatpush1.msra.mxu0 0.0
    %282 = vmatprep.subr.mxu0 0.0
    %283 = vmatpush1.msra.mxu0 0.0
    %284 = vmatprep.subr.mxu0 0.0
    %285 = vmatpush1.msra.mxu0 0.0
    %286 = vmatprep.subr.mxu0 0.0
    %287 = vmatpush1.msra.mxu0 0.0
    %288 = vmatprep.subr.mxu0 0.0
    %289 = vmatpush1.msra.mxu0 0.0
    %290 = vmatprep.subr.mxu0 0.0
    %291 = vmatpush1.msra.mxu0 0.0
    %292 = vmatprep.subr.mxu0 0.0
    %293 = vmatpush1.msra.mxu0 0.0
    %294 = vmatprep.subr.mxu0 0.0
    %295 = vmatpush1.msra.mxu0 0.0
    %296 = vmatprep.subr.mxu0 0.0
    %297 = vmatpush1.msra.mxu0 0.0
    %298 = vmatprep.subr.mxu0 0.0
    %299 = vmatpush1.msra.mxu0 0.0
    %300 = vmatprep.mubr.f32.mxu0 0.0
    %301 = vmatmul.mubr.f32.gmra.mrb[0].mxu0 %v213
    %v302 = vpop.f32.mrb[0].mxu0
    %v303 = vadd.f32 %v211, %v302
    %v304 = vpop.f32.mrb[0].mxu0
    %305 = vmatprep.mubr.f32.mxu0 0.0
    %306 = vmatmul.mubr.f32.gmra.mrb[0].mxu0 %v216
    %v307 = vpop.f32.mrb[0].mxu0
    %v308 = vadd.f32 %v211, %v307
    %v309 = vpop.f32.mrb[0].mxu0
    %310 = vmatprep.mubr.f32.mxu0 0.0
    %311 = vmatmul.mubr.f32.gmra.mrb[0].mxu0 %v219
    %v312 = vpop.f32.mrb[0].mxu0
    %v313 = vadd.f32 %v211, %v312
    %v314 = vpop.f32.mrb[0].mxu0
    %315 = vmatprep.mubr.f32.mxu0 0.0
    %316 = vmatmul.mubr.f32.gmra.mrb[0].mxu0 %v222
    %v317 = vpop.f32.mrb[0].mxu0
    %v318 = vadd.f32 %v211, %v317
    %v319 = vpop.f32.mrb[0].mxu0
    %320 = vmatprep.mubr.f32.mxu0 0.0
    %321 = vmatmul.mubr.f32.gmra.mrb[0].mxu0 %v225
    %v322 = vpop.f32.mrb[0].mxu0
    %v323 = vadd.f32 %v211, %v322
    %v324 = vpop.f32.mrb[0].mxu0
    %325 = vmatprep.mubr.f32.mxu0 0.0
    %326 = vmatmul.mubr.f32.gmra.mrb[0].mxu0 %v228
    %v327 = vpop.f32.mrb[0].mxu0
    %v328 = vadd.f32 %v211, %v327
    %v329 = vpop.f32.mrb[0].mxu0
    %330 = vmatprep.mubr.f32.mxu0 0.0
    %331 = vmatmul.mubr.f32.gmra.mrb[0].mxu0 %v231
    %v332 = vpop.f32.mrb[0].mxu0
    %v333 = vadd.f32 %v211, %v332
    %v334 = vpop.f32.mrb[0].mxu0
    %335 = vmatprep.mubr.f32.mxu0 0.0
    %336 = vmatmul.mubr.f32.gmra.mrb[0].mxu0 %v234
    %v337 = vpop.f32.mrb[0].mxu0
    %v338 = vadd.f32 %v211, %v337
    %v339 = vpop.f32.mrb[0].mxu0
    %340 = vdwg.mxu0
    %v342 = vsel %vm78, %v54, 0
    %v345 = vsel %vm78, %v55, 0
    %347 = vmatprep.subr.mxu0 0.0
    %348 = vmatpush1.msra.mxu0 %v60
    %349 = vmatprep.subr.mxu0 0.0
    %350 = vmatpush1.msra.mxu0 %v61
    %351 = vmatprep.subr.mxu0 0.0
    %352 = vmatpush1.msra.mxu0 %v62
    %353 = vmatprep.subr.mxu0 0.0
    %354 = vmatpush1.msra.mxu0 %v63
    %355 = vmatprep.subr.mxu0 0.0
    %356 = vmatpush1.msra.mxu0 0.0
    %357 = vmatprep.subr.mxu0 0.0
    %358 = vmatpush1.msra.mxu0 0.0
    %359 = vmatprep.subr.mxu0 0.0
    %360 = vmatpush1.msra.mxu0 0.0
    %361 = vmatprep.subr.mxu0 0.0
    %362 = vmatpush1.msra.mxu0 0.0
    %363 = vmatprep.subr.mxu0 0.0
    %364 = vmatpush1.msra.mxu0 0.0
    %365 = vmatprep.subr.mxu0 0.0
    %366 = vmatpush1.msra.mxu0 0.0
    %367 = vmatprep.subr.mxu0 0.0
    %368 = vmatpush1.msra.mxu0 0.0
    %369 = vmatprep.subr.mxu0 0.0
    %370 = vmatpush1.msra.mxu0 0.0
    %371 = vmatprep.subr.mxu0 0.0
    %372 = vmatpush1.msra.mxu0 0.0
    %373 = vmatprep.subr.mxu0 0.0
    %374 = vmatpush1.msra.mxu0 0.0
    %375 = vmatprep.subr.mxu0 0.0
    %376 = vmatpush1.msra.mxu0 0.0
    %377 = vmatprep.subr.mxu0 0.0
    %378 = vmatpush1.msra.mxu0 0.0
    %379 = vmatprep.subr.mxu0 0.0
    %380 = vmatpush1.msra.mxu0 0.0
    %381 = vmatprep.subr.mxu0 0.0
    %382 = vmatpush1.msra.mxu0 0.0
    %383 = vmatprep.subr.mxu0 0.0
    %384 = vmatpush1.msra.mxu0 0.0
    %385 = vmatprep.subr.mxu0 0.0
    %386 = vmatpush1.msra.mxu0 0.0
    %387 = vmatprep.subr.mxu0 0.0
    %388 = vmatpush1.msra.mxu0 0.0
    %389 = vmatprep.subr.mxu0 0.0
    %390 = vmatpush1.msra.mxu0 0.0
    %391 = vmatprep.subr.mxu0 0.0
    %392 = vmatpush1.msra.mxu0 0.0
    %393 = vmatprep.subr.mxu0 0.0
    %394 = vmatpush1.msra.mxu0 0.0
    %395 = vmatprep.subr.mxu0 0.0
    %396 = vmatpush1.msra.mxu0 0.0
    %397 = vmatprep.subr.mxu0 0.0
    %398 = vmatpush1.msra.mxu0 0.0
    %399 = vmatprep.subr.mxu0 0.0
    %400 = vmatpush1.msra.mxu0 0.0
    %401 = vmatprep.subr.mxu0 0.0
    %402 = vmatpush1.msra.mxu0 0.0
    %403 = vmatprep.subr.mxu0 0.0
    %404 = vmatpush1.msra.mxu0 0.0
    %405 = vmatprep.subr.mxu0 0.0
    %406 = vmatpush1.msra.mxu0 0.0
    %407 = vmatprep.subr.mxu0 0.0
    %408 = vmatpush1.msra.mxu0 0.0
    %409 = vmatprep.subr.mxu0 0.0
    %410 = vmatpush1.msra.mxu0 0.0
    %411 = vmatprep.mubr.f32.mxu0 0.0
    %412 = vmatmul.mubr.f32.gmra.mrb[0].mxu0 %v342
    %v413 = vpop.f32.mrb[0].mxu0
    %v414 = vadd.f32 0.0, %v413
    %v415 = vpop.f32.mrb[0].mxu0
    %416 = vmatprep.mubr.f32.mxu0 0.0
    %417 = vmatmul.mubr.f32.gmra.mrb[0].mxu0 %v345
    %v418 = vpop.f32.mrb[0].mxu0
    %v419 = vadd.f32 0.0, %v418
    %v420 = vpop.f32.mrb[0].mxu0
    %421 = vdwg.mxu0
    %v422 = vlaneseq
    %v423 = vshrl.u32 %v422, 7
    %v424 = vsub.s32 3, %v423
    %v425 = vrot.slane %v76, %v424
    %v426 = vadd.f32 %v414, %v425
    %v427 = vadd.f32 %v419, %v425
    %v428 = vlaneseq
    %v429 = vshrl.u32 %v428, 7
    %v430 = vsub.s32 4, %v429
    %v431 = vrot.slane %v76, %v430
    %433 = vrot.lane.b32.xlu0 %v431, 32
    %v434 = vpop.permute.xlu0 %433
    %v436 = vadd.f32 %v414, %v434
    %v437 = vadd.f32 %v419, %v434
    %v439 = vsel %vm78, %v303, 0
    %v442 = vsel %vm78, %v308, 0
    %v445 = vsel %vm78, %v313, 0
    %v448 = vsel %vm78, %v318, 0
    %v451 = vsel %vm78, %v426, 0
    %453 = vmatprep.subr.mxu0 0.0
    %454 = vmatpush1.xpose.msra.mxu0 %v451
    %455 = vmatprep.subr.mxu0 0.0
    %456 = vmatpush1.xpose.msra.mxu0 0.0
    %457 = vmatprep.subr.mxu0 0.0
    %458 = vmatpush1.xpose.msra.mxu0 0.0
    %459 = vmatprep.subr.mxu0 0.0
    %460 = vmatpush1.xpose.msra.mxu0 0.0
    %461 = vmatprep.subr.mxu0 0.0
    %462 = vmatpush1.xpose.msra.mxu0 0.0
    %463 = vmatprep.subr.mxu0 0.0
    %464 = vmatpush1.xpose.msra.mxu0 0.0
    %465 = vmatprep.subr.mxu0 0.0
    %466 = vmatpush1.xpose.msra.mxu0 0.0
    %467 = vmatprep.subr.mxu0 0.0
    %468 = vmatpush1.xpose.msra.mxu0 0.0
    %469 = vmatprep.subr.mxu0 0.0
    %470 = vmatpush1.xpose.msra.mxu0 0.0
    %471 = vmatprep.subr.mxu0 0.0
    %472 = vmatpush1.xpose.msra.mxu0 0.0
    %473 = vmatprep.subr.mxu0 0.0
    %474 = vmatpush1.xpose.msra.mxu0 0.0
    %475 = vmatprep.subr.mxu0 0.0
    %476 = vmatpush1.xpose.msra.mxu0 0.0
    %477 = vmatprep.subr.mxu0 0.0
    %478 = vmatpush1.xpose.msra.mxu0 0.0
    %479 = vmatprep.subr.mxu0 0.0
    %480 = vmatpush1.xpose.msra.mxu0 0.0
    %481 = vmatprep.subr.mxu0 0.0
    %482 = vmatpush1.xpose.msra.mxu0 0.0
    %483 = vmatprep.subr.mxu0 0.0
    %484 = vmatpush1.xpose.msra.mxu0 0.0
    %485 = vmatprep.subr.mxu0 0.0
    %486 = vmatpush1.xpose.msra.mxu0 0.0
    %487 = vmatprep.subr.mxu0 0.0
    %488 = vmatpush1.xpose.msra.mxu0 0.0
    %489 = vmatprep.subr.mxu0 0.0
    %490 = vmatpush1.xpose.msra.mxu0 0.0
    %491 = vmatprep.subr.mxu0 0.0
    %492 = vmatpush1.xpose.msra.mxu0 0.0
    %493 = vmatprep.subr.mxu0 0.0
    %494 = vmatpush1.xpose.msra.mxu0 0.0
    %495 = vmatprep.subr.mxu0 0.0
    %496 = vmatpush1.xpose.msra.mxu0 0.0
    %497 = vmatprep.subr.mxu0 0.0
    %498 = vmatpush1.xpose.msra.mxu0 0.0
    %499 = vmatprep.subr.mxu0 0.0
    %500 = vmatpush1.xpose.msra.mxu0 0.0
    %501 = vmatprep.subr.mxu0 0.0
    %502 = vmatpush1.xpose.msra.mxu0 0.0
    %503 = vmatprep.subr.mxu0 0.0
    %504 = vmatpush1.xpose.msra.mxu0 0.0
    %505 = vmatprep.subr.mxu0 0.0
    %506 = vmatpush1.xpose.msra.mxu0 0.0
    %507 = vmatprep.subr.mxu0 0.0
    %508 = vmatpush1.xpose.msra.mxu0 0.0
    %509 = vmatprep.subr.mxu0 0.0
    %510 = vmatpush1.xpose.msra.mxu0 0.0
    %511 = vmatprep.subr.mxu0 0.0
    %512 = vmatpush1.xpose.msra.mxu0 0.0
    %513 = vmatprep.subr.mxu0 0.0
    %514 = vmatpush1.xpose.msra.mxu0 0.0
    %515 = vmatprep.subr.mxu0 0.0
    %516 = vmatpush1.xpose.msra.mxu0 0.0
    %517 = vmatprep.mubr.f32.mxu0 0.0
    %518 = vmatmul.mubr.f32.gmra.mrb[0].mxu0 %v439
    %v519 = vpop.f32.mrb[0].mxu0
    %v520 = vadd.f32 0.0, %v519
    %v521 = vpop.f32.mrb[0].mxu0
    %522 = vmatprep.mubr.f32.mxu0 0.0
    %523 = vmatmul.mubr.f32.gmra.mrb[0].mxu0 %v442
    %v524 = vpop.f32.mrb[0].mxu0
    %v525 = vadd.f32 0.0, %v524
    %v526 = vpop.f32.mrb[0].mxu0
    %527 = vmatprep.mubr.f32.mxu0 0.0
    %528 = vmatmul.mubr.f32.gmra.mrb[0].mxu0 %v445
    %v529 = vpop.f32.mrb[0].mxu0
    %v530 = vadd.f32 0.0, %v529
    %v531 = vpop.f32.mrb[0].mxu0
    %532 = vmatprep.mubr.f32.mxu0 0.0
    %533 = vmatmul.mubr.f32.gmra.mrb[0].mxu0 %v448
    %v534 = vpop.f32.mrb[0].mxu0
    %v535 = vadd.f32 0.0, %v534
    %v536 = vpop.f32.mrb[0].mxu0
    %537 = vdwg.mxu0
    %v539 = vsel %vm78, %v323, 0
    %v542 = vsel %vm78, %v328, 0
    %v545 = vsel %vm78, %v333, 0
    %v548 = vsel %vm78, %v338, 0
    %v551 = vsel %vm78, %v427, 0
    %553 = vmatprep.subr.mxu0 0.0
    %554 = vmatpush1.xpose.msra.mxu0 %v551
    %555 = vmatprep.subr.mxu0 0.0
    %556 = vmatpush1.xpose.msra.mxu0 0.0
    %557 = vmatprep.subr.mxu0 0.0
    %558 = vmatpush1.xpose.msra.mxu0 0.0
    %559 = vmatprep.subr.mxu0 0.0
    %560 = vmatpush1.xpose.msra.mxu0 0.0
    %561 = vmatprep.subr.mxu0 0.0
    %562 = vmatpush1.xpose.msra.mxu0 0.0
    %563 = vmatprep.subr.mxu0 0.0
    %564 = vmatpush1.xpose.msra.mxu0 0.0
    %565 = vmatprep.subr.mxu0 0.0
    %566 = vmatpush1.xpose.msra.mxu0 0.0
    %567 = vmatprep.subr.mxu0 0.0
    %568 = vmatpush1.xpose.msra.mxu0 0.0
    %569 = vmatprep.subr.mxu0 0.0
    %570 = vmatpush1.xpose.msra.mxu0 0.0
    %571 = vmatprep.subr.mxu0 0.0
    %572 = vmatpush1.xpose.msra.mxu0 0.0
    %573 = vmatprep.subr.mxu0 0.0
    %574 = vmatpush1.xpose.msra.mxu0 0.0
    %575 = vmatprep.subr.mxu0 0.0
    %576 = vmatpush1.xpose.msra.mxu0 0.0
    %577 = vmatprep.subr.mxu0 0.0
    %578 = vmatpush1.xpose.msra.mxu0 0.0
    %579 = vmatprep.subr.mxu0 0.0
    %580 = vmatpush1.xpose.msra.mxu0 0.0
    %581 = vmatprep.subr.mxu0 0.0
    %582 = vmatpush1.xpose.msra.mxu0 0.0
    %583 = vmatprep.subr.mxu0 0.0
    %584 = vmatpush1.xpose.msra.mxu0 0.0
    %585 = vmatprep.subr.mxu0 0.0
    %586 = vmatpush1.xpose.msra.mxu0 0.0
    %587 = vmatprep.subr.mxu0 0.0
    %588 = vmatpush1.xpose.msra.mxu0 0.0
    %589 = vmatprep.subr.mxu0 0.0
    %590 = vmatpush1.xpose.msra.mxu0 0.0
    %591 = vmatprep.subr.mxu0 0.0
    %592 = vmatpush1.xpose.msra.mxu0 0.0
    %593 = vmatprep.subr.mxu0 0.0
    %594 = vmatpush1.xpose.msra.mxu0 0.0
    %595 = vmatprep.subr.mxu0 0.0
    %596 = vmatpush1.xpose.msra.mxu0 0.0
    %597 = vmatprep.subr.mxu0 0.0
    %598 = vmatpush1.xpose.msra.mxu0 0.0
    %599 = vmatprep.subr.mxu0 0.0
    %600 = vmatpush1.xpose.msra.mxu0 0.0
    %601 = vmatprep.subr.mxu0 0.0
    %602 = vmatpush1.xpose.msra.mxu0 0.0
    %603 = vmatprep.subr.mxu0 0.0
    %604 = vmatpush1.xpose.msra.mxu0 0.0
    %605 = vmatprep.subr.mxu0 0.0
    %606 = vmatpush1.xpose.msra.mxu0 0.0
    %607 = vmatprep.subr.mxu0 0.0
    %608 = vmatpush1.xpose.msra.mxu0 0.0
    %609 = vmatprep.subr.mxu0 0.0
    %610 = vmatpush1.xpose.msra.mxu0 0.0
    %611 = vmatprep.subr.mxu0 0.0
    %612 = vmatpush1.xpose.msra.mxu0 0.0
    %613 = vmatprep.subr.mxu0 0.0
    %614 = vmatpush1.xpose.msra.mxu0 0.0
    %615 = vmatprep.subr.mxu0 0.0
    %616 = vmatpush1.xpose.msra.mxu0 0.0
    %617 = vmatprep.mubr.f32.mxu0 0.0
    %618 = vmatmul.mubr.f32.gmra.mrb[0].mxu0 %v539
    %v619 = vpop.f32.mrb[0].mxu0
    %v620 = vadd.f32 0.0, %v619
    %v621 = vpop.f32.mrb[0].mxu0
    %622 = vmatprep.mubr.f32.mxu0 0.0
    %623 = vmatmul.mubr.f32.gmra.mrb[0].mxu0 %v542
    %v624 = vpop.f32.mrb[0].mxu0
    %v625 = vadd.f32 0.0, %v624
    %v626 = vpop.f32.mrb[0].mxu0
    %627 = vmatprep.mubr.f32.mxu0 0.0
    %628 = vmatmul.mubr.f32.gmra.mrb[0].mxu0 %v545
    %v629 = vpop.f32.mrb[0].mxu0
    %v630 = vadd.f32 0.0, %v629
    %v631 = vpop.f32.mrb[0].mxu0
    %632 = vmatprep.mubr.f32.mxu0 0.0
    %633 = vmatmul.mubr.f32.gmra.mrb[0].mxu0 %v548
    %v634 = vpop.f32.mrb[0].mxu0
    %v635 = vadd.f32 0.0, %v634
    %v636 = vpop.f32.mrb[0].mxu0
    %637 = vdwg.mxu0
    %vm638 = vcmask 64512
    %v639 = vsel %vm638, %v520, -inf
    %640 = vmax.xlane.f32.xlu0 %v639
    %v641 = vpop.xlane.xlu0 %640
    %v642 = vsel %vm638, %v525, -inf
    %643 = vmax.xlane.f32.xlu0 %v642
    %v644 = vpop.xlane.xlu0 %643
    %v645 = vsel %vm638, %v530, -inf
    %646 = vmax.xlane.f32.xlu0 %v645
    %v647 = vpop.xlane.xlu0 %646
    %v648 = vsel %vm638, %v535, -inf
    %649 = vmax.xlane.f32.xlu0 %v648
    %v650 = vpop.xlane.xlu0 %649
    %v651 = vsel %vm638, %v620, -inf
    %652 = vmax.xlane.f32.xlu0 %v651
    %v653 = vpop.xlane.xlu0 %652
    %v654 = vsel %vm638, %v625, -inf
    %655 = vmax.xlane.f32.xlu0 %v654
    %v656 = vpop.xlane.xlu0 %655
    %v657 = vsel %vm638, %v630, -inf
    %658 = vmax.xlane.f32.xlu0 %v657
    %v659 = vpop.xlane.xlu0 %658
    %v660 = vsel %vm638, %v635, -inf
    %661 = vmax.xlane.f32.xlu0 %v660
    %v662 = vpop.xlane.xlu0 %661
    %v663 = vsub.f32 %v520, %v641
    %v664 = vsub.f32 %v525, %v644
    %v665 = vsub.f32 %v530, %v647
    %v666 = vsub.f32 %v535, %v650
    %v667 = vsub.f32 %v620, %v653
    %v668 = vsub.f32 %v625, %v656
    %v669 = vsub.f32 %v630, %v659
    %v670 = vsub.f32 %v635, %v662
    %v671 = vmul.f32 %v663, 1.442695
    %v672 = vpow.pop %v671
    %v673 = vmul.f32 %v664, 1.442695
    %v674 = vpow.pop %v673
    %v675 = vmul.f32 %v665, 1.442695
    %v676 = vpow.pop %v675
    %v677 = vmul.f32 %v666, 1.442695
    %v678 = vpow.pop %v677
    %v679 = vmul.f32 %v667, 1.442695
    %v680 = vpow.pop %v679
    %v681 = vmul.f32 %v668, 1.442695
    %v682 = vpow.pop %v681
    %v683 = vmul.f32 %v669, 1.442695
    %v684 = vpow.pop %v683
    %v685 = vmul.f32 %v670, 1.442695
    %v686 = vpow.pop %v685
    %v687 = vsel %vm638, %v672, 0.0
    %688 = vadd.xlane.f32.xlu0 %v687
    %v689 = vpop.xlane.xlu0 %688
    %v690 = vsel %vm638, %v674, 0.0
    %691 = vadd.xlane.f32.xlu0 %v690
    %v692 = vpop.xlane.xlu0 %691
    %v693 = vsel %vm638, %v676, 0.0
    %694 = vadd.xlane.f32.xlu0 %v693
    %v695 = vpop.xlane.xlu0 %694
    %v696 = vsel %vm638, %v678, 0.0
    %697 = vadd.xlane.f32.xlu0 %v696
    %v698 = vpop.xlane.xlu0 %697
    %v699 = vsel %vm638, %v680, 0.0
    %700 = vadd.xlane.f32.xlu0 %v699
    %v701 = vpop.xlane.xlu0 %700
    %v702 = vsel %vm638, %v682, 0.0
    %703 = vadd.xlane.f32.xlu0 %v702
    %v704 = vpop.xlane.xlu0 %703
    %v705 = vsel %vm638, %v684, 0.0
    %706 = vadd.xlane.f32.xlu0 %v705
    %v707 = vpop.xlane.xlu0 %706
    %v708 = vsel %vm638, %v686, 0.0
    %709 = vadd.xlane.f32.xlu0 %v708
    %v710 = vpop.xlane.xlu0 %709
    %v711 = vrcp.pop %v689
    %v712 = vrcp.pop %v692
    %v713 = vrcp.pop %v695
    %v714 = vrcp.pop %v698
    %v715 = vrcp.pop %v701
    %v716 = vrcp.pop %v704
    %v717 = vrcp.pop %v707
    %v718 = vrcp.pop %v710
    %v719 = vmul.f32 %v672, %v711
    %v720 = vmul.f32 %v674, %v712
    %v721 = vmul.f32 %v676, %v713
    %v722 = vmul.f32 %v678, %v714
    %v723 = vmul.f32 %v680, %v715
    %v724 = vmul.f32 %v682, %v716
    %v725 = vmul.f32 %v684, %v717
    %v726 = vmul.f32 %v686, %v718
    %728 = vrot.lane.b32.xlu0 %v436, 96
    %v729 = vpop.permute.xlu0 %728
    %v732 = vsel %vm638, %v719, 0
    %v735 = vsel %vm638, %v720, 0
    %v738 = vsel %vm638, %v721, 0
    %v741 = vsel %vm638, %v722, 0
    %743 = vmatprep.subr.mxu0 0.0
    %744 = vmatpush1.msra.mxu0 %v729
    %745 = vmatprep.subr.mxu0 0.0
    %746 = vmatpush1.msra.mxu0 0.0
    %747 = vmatprep.subr.mxu0 0.0
    %748 = vmatpush1.msra.mxu0 0.0
    %749 = vmatprep.subr.mxu0 0.0
    %750 = vmatpush1.msra.mxu0 0.0
    %751 = vmatprep.subr.mxu0 0.0
    %752 = vmatpush1.msra.mxu0 0.0
    %753 = vmatprep.subr.mxu0 0.0
    %754 = vmatpush1.msra.mxu0 0.0
    %755 = vmatprep.subr.mxu0 0.0
    %756 = vmatpush1.msra.mxu0 0.0
    %757 = vmatprep.subr.mxu0 0.0
    %758 = vmatpush1.msra.mxu0 0.0
    %759 = vmatprep.subr.mxu0 0.0
    %760 = vmatpush1.msra.mxu0 0.0
    %761 = vmatprep.subr.mxu0 0.0
    %762 = vmatpush1.msra.mxu0 0.0
    %763 = vmatprep.subr.mxu0 0.0
    %764 = vmatpush1.msra.mxu0 0.0
    %765 = vmatprep.subr.mxu0 0.0
    %766 = vmatpush1.msra.mxu0 0.0
    %767 = vmatprep.subr.mxu0 0.0
    %768 = vmatpush1.msra.mxu0 0.0
    %769 = vmatprep.subr.mxu0 0.0
    %770 = vmatpush1.msra.mxu0 0.0
    %771 = vmatprep.subr.mxu0 0.0
    %772 = vmatpush1.msra.mxu0 0.0
    %773 = vmatprep.subr.mxu0 0.0
    %774 = vmatpush1.msra.mxu0 0.0
    %775 = vmatprep.subr.mxu0 0.0
    %776 = vmatpush1.msra.mxu0 0.0
    %777 = vmatprep.subr.mxu0 0.0
    %778 = vmatpush1.msra.mxu0 0.0
    %779 = vmatprep.subr.mxu0 0.0
    %780 = vmatpush1.msra.mxu0 0.0
    %781 = vmatprep.subr.mxu0 0.0
    %782 = vmatpush1.msra.mxu0 0.0
    %783 = vmatprep.subr.mxu0 0.0
    %784 = vmatpush1.msra.mxu0 0.0
    %785 = vmatprep.subr.mxu0 0.0
    %786 = vmatpush1.msra.mxu0 0.0
    %787 = vmatprep.subr.mxu0 0.0
    %788 = vmatpush1.msra.mxu0 0.0
    %789 = vmatprep.subr.mxu0 0.0
    %790 = vmatpush1.msra.mxu0 0.0
    %791 = vmatprep.subr.mxu0 0.0
    %792 = vmatpush1.msra.mxu0 0.0
    %793 = vmatprep.subr.mxu0 0.0
    %794 = vmatpush1.msra.mxu0 0.0
    %795 = vmatprep.subr.mxu0 0.0
    %796 = vmatpush1.msra.mxu0 0.0
    %797 = vmatprep.subr.mxu0 0.0
    %798 = vmatpush1.msra.mxu0 0.0
    %799 = vmatprep.subr.mxu0 0.0
    %800 = vmatpush1.msra.mxu0 0.0
    %801 = vmatprep.subr.mxu0 0.0
    %802 = vmatpush1.msra.mxu0 0.0
    %803 = vmatprep.subr.mxu0 0.0
    %804 = vmatpush1.msra.mxu0 0.0
    %805 = vmatprep.subr.mxu0 0.0
    %806 = vmatpush1.msra.mxu0 0.0
    %807 = vmatprep.mubr.f32.mxu0 0.0
    %808 = vmatmul.mubr.f32.gmra.mrb[0].mxu0 %v732
    %v809 = vpop.f32.mrb[0].mxu0
    %v810 = vadd.f32 %v200, %v809
    %v811 = vpop.f32.mrb[0].mxu0
    %812 = vmatprep.mubr.f32.mxu0 0.0
    %813 = vmatmul.mubr.f32.gmra.mrb[0].mxu0 %v735
    %v814 = vpop.f32.mrb[0].mxu0
    %v815 = vadd.f32 %v201, %v814
    %v816 = vpop.f32.mrb[0].mxu0
    %817 = vmatprep.mubr.f32.mxu0 0.0
    %818 = vmatmul.mubr.f32.gmra.mrb[0].mxu0 %v738
    %v819 = vpop.f32.mrb[0].mxu0
    %v820 = vadd.f32 %v202, %v819
    %v821 = vpop.f32.mrb[0].mxu0
    %822 = vmatprep.mubr.f32.mxu0 0.0
    %823 = vmatmul.mubr.f32.gmra.mrb[0].mxu0 %v741
    %v824 = vpop.f32.mrb[0].mxu0
    %v825 = vadd.f32 %v203, %v824
    %v826 = vpop.f32.mrb[0].mxu0
    %827 = vdwg.mxu0
    %829 = vrot.lane.b32.xlu0 %v437, 96
    %v830 = vpop.permute.xlu0 %829
    %v833 = vsel %vm638, %v723, 0
    %v836 = vsel %vm638, %v724, 0
    %v839 = vsel %vm638, %v725, 0
    %v842 = vsel %vm638, %v726, 0
    %844 = vmatprep.subr.mxu0 0.0
    %845 = vmatpush1.msra.mxu0 %v830
    %846 = vmatprep.subr.mxu0 0.0
    %847 = vmatpush1.msra.mxu0 0.0
    %848 = vmatprep.subr.mxu0 0.0
    %849 = vmatpush1.msra.mxu0 0.0
    %850 = vmatprep.subr.mxu0 0.0
    %851 = vmatpush1.msra.mxu0 0.0
    %852 = vmatprep.subr.mxu0 0.0
    %853 = vmatpush1.msra.mxu0 0.0
    %854 = vmatprep.subr.mxu0 0.0
    %855 = vmatpush1.msra.mxu0 0.0
    %856 = vmatprep.subr.mxu0 0.0
    %857 = vmatpush1.msra.mxu0 0.0
    %858 = vmatprep.subr.mxu0 0.0
    %859 = vmatpush1.msra.mxu0 0.0
    %860 = vmatprep.subr.mxu0 0.0
    %861 = vmatpush1.msra.mxu0 0.0
    %862 = vmatprep.subr.mxu0 0.0
    %863 = vmatpush1.msra.mxu0 0.0
    %864 = vmatprep.subr.mxu0 0.0
    %865 = vmatpush1.msra.mxu0 0.0
    %866 = vmatprep.subr.mxu0 0.0
    %867 = vmatpush1.msra.mxu0 0.0
    %868 = vmatprep.subr.mxu0 0.0
    %869 = vmatpush1.msra.mxu0 0.0
    %870 = vmatprep.subr.mxu0 0.0
    %871 = vmatpush1.msra.mxu0 0.0
    %872 = vmatprep.subr.mxu0 0.0
    %873 = vmatpush1.msra.mxu0 0.0
    %874 = vmatprep.subr.mxu0 0.0
    %875 = vmatpush1.msra.mxu0 0.0
    %876 = vmatprep.subr.mxu0 0.0
    %877 = vmatpush1.msra.mxu0 0.0
    %878 = vmatprep.subr.mxu0 0.0
    %879 = vmatpush1.msra.mxu0 0.0
    %880 = vmatprep.subr.mxu0 0.0
    %881 = vmatpush1.msra.mxu0 0.0
    %882 = vmatprep.subr.mxu0 0.0
    %883 = vmatpush1.msra.mxu0 0.0
    %884 = vmatprep.subr.mxu0 0.0
    %885 = vmatpush1.msra.mxu0 0.0
    %886 = vmatprep.subr.mxu0 0.0
    %887 = vmatpush1.msra.mxu0 0.0
    %888 = vmatprep.subr.mxu0 0.0
    %889 = vmatpush1.msra.mxu0 0.0
    %890 = vmatprep.subr.mxu0 0.0
    %891 = vmatpush1.msra.mxu0 0.0
    %892 = vmatprep.subr.mxu0 0.0
    %893 = vmatpush1.msra.mxu0 0.0
    %894 = vmatprep.subr.mxu0 0.0
    %895 = vmatpush1.msra.mxu0 0.0
    %896 = vmatprep.subr.mxu0 0.0
    %897 = vmatpush1.msra.mxu0 0.0
    %898 = vmatprep.subr.mxu0 0.0
    %899 = vmatpush1.msra.mxu0 0.0
    %900 = vmatprep.subr.mxu0 0.0
    %901 = vmatpush1.msra.mxu0 0.0
    %902 = vmatprep.subr.mxu0 0.0
    %903 = vmatpush1.msra.mxu0 0.0
    %904 = vmatprep.subr.mxu0 0.0
    %905 = vmatpush1.msra.mxu0 0.0
    %906 = vmatprep.subr.mxu0 0.0
    %907 = vmatpush1.msra.mxu0 0.0
    %908 = vmatprep.mubr.f32.mxu0 0.0
    %909 = vmatmul.mubr.f32.gmra.mrb[0].mxu0 %v833
    %v910 = vpop.f32.mrb[0].mxu0
    %v911 = vadd.f32 %v204, %v910
    %v912 = vpop.f32.mrb[0].mxu0
    %913 = vmatprep.mubr.f32.mxu0 0.0
    %914 = vmatmul.mubr.f32.gmra.mrb[0].mxu0 %v836
    %v915 = vpop.f32.mrb[0].mxu0
    %v916 = vadd.f32 %v205, %v915
    %v917 = vpop.f32.mrb[0].mxu0
    %918 = vmatprep.mubr.f32.mxu0 0.0
    %919 = vmatmul.mubr.f32.gmra.mrb[0].mxu0 %v839
    %v920 = vpop.f32.mrb[0].mxu0
    %v921 = vadd.f32 %v206, %v920
    %v922 = vpop.f32.mrb[0].mxu0
    %923 = vmatprep.mubr.f32.mxu0 0.0
    %924 = vmatmul.mubr.f32.gmra.mrb[0].mxu0 %v842
    %v925 = vpop.f32.mrb[0].mxu0
    %v926 = vadd.f32 %v207, %v925
    %v927 = vpop.f32.mrb[0].mxu0
    %928 = vdwg.mxu0
    %929 = vxpose.xlu0.b32.start [1/16] %v810, 128
    %930 = vxpose.xlu0.b32.cont [2/16] %v815, 128
    %931 = vxpose.xlu0.b32.cont [3/16] %v820, 128
    %932 = vxpose.xlu0.b32.cont [4/16] %v825, 128
    %933 = vxpose.xlu0.b32.cont [5/16] 0.0, 128
    %934 = vxpose.xlu0.b32.cont [6/16] 0.0, 128
    %935 = vxpose.xlu0.b32.cont [7/16] 0.0, 128
    %936 = vxpose.xlu0.b32.cont [8/16] 0.0, 128
    %937 = vxpose.xlu0.b32.cont [9/16] 0.0, 128
    %938 = vxpose.xlu0.b32.cont [10/16] 0.0, 128
    %939 = vxpose.xlu0.b32.cont [11/16] 0.0, 128
    %940 = vxpose.xlu0.b32.cont [12/16] 0.0, 128
    %941 = vxpose.xlu0.b32.cont [13/16] 0.0, 128
    %942 = vxpose.xlu0.b32.cont [14/16] 0.0, 128
    %943 = vxpose.xlu0.b32.cont [15/16] 0.0, 128
    %944 = vxpose.xlu0.b32.end [16/16] 0.0, 128
    %v945 = vpop.trf.xlu0
    %v946 = vpop.trf.xlu0
    %v947 = vpop.trf.xlu0
    %v948 = vpop.trf.xlu0
    %v949 = vpop.trf.xlu0
    %v950 = vpop.trf.xlu0
    %v951 = vpop.trf.xlu0
    %v952 = vpop.trf.xlu0
    %v953 = vpop.trf.xlu0
    %v954 = vpop.trf.xlu0
    %v955 = vpop.trf.xlu0
    %v956 = vpop.trf.xlu0
    %v957 = vpop.trf.xlu0
    %v958 = vpop.trf.xlu0
    %v959 = vpop.trf.xlu0
    %v960 = vpop.trf.xlu0
    %961 = vxpose.xlu0.b32.start [1/16] %v911, 128
    %962 = vxpose.xlu0.b32.cont [2/16] %v916, 128
    %963 = vxpose.xlu0.b32.cont [3/16] %v921, 128
    %964 = vxpose.xlu0.b32.cont [4/16] %v926, 128
    %965 = vxpose.xlu0.b32.cont [5/16] 0.0, 128
    %966 = vxpose.xlu0.b32.cont [6/16] 0.0, 128
    %967 = vxpose.xlu0.b32.cont [7/16] 0.0, 128
    %968 = vxpose.xlu0.b32.cont [8/16] 0.0, 128
    %969 = vxpose.xlu0.b32.cont [9/16] 0.0, 128
    %970 = vxpose.xlu0.b32.cont [10/16] 0.0, 128
    %971 = vxpose.xlu0.b32.cont [11/16] 0.0, 128
    %972 = vxpose.xlu0.b32.cont [12/16] 0.0, 128
    %973 = vxpose.xlu0.b32.cont [13/16] 0.0, 128
    %974 = vxpose.xlu0.b32.cont [14/16] 0.0, 128
    %975 = vxpose.xlu0.b32.cont [15/16] 0.0, 128
    %976 = vxpose.xlu0.b32.end [16/16] 0.0, 128
    %v977 = vpop.trf.xlu0
    %v978 = vpop.trf.xlu0
    %v979 = vpop.trf.xlu0
    %v980 = vpop.trf.xlu0
    %v981 = vpop.trf.xlu0
    %v982 = vpop.trf.xlu0
    %v983 = vpop.trf.xlu0
    %v984 = vpop.trf.xlu0
    %v985 = vpop.trf.xlu0
    %v986 = vpop.trf.xlu0
    %v987 = vpop.trf.xlu0
    %v988 = vpop.trf.xlu0
    %v989 = vpop.trf.xlu0
    %v990 = vpop.trf.xlu0
    %v991 = vpop.trf.xlu0
    %v992 = vpop.trf.xlu0
    %v993 = vlaneseq
    %v994 = vshrl.u32 %v993, 7
    %v995 = vsub.s32 0, %v994
    %v996 = vrot.slane %v77, %v995
    %v998 = vsel %vm78, %v945, 0
    %v1001 = vsel %vm78, %v946, 0
    %v1004 = vsel %vm78, %v947, 0
    %v1007 = vsel %vm78, %v948, 0
    %v1010 = vsel %vm78, %v977, 0
    %v1013 = vsel %vm78, %v978, 0
    %v1016 = vsel %vm78, %v979, 0
    %v1019 = vsel %vm78, %v980, 0
    %1021 = vmatprep.subr.mxu0 0.0
    %1022 = vmatpush1.msra.mxu0 %v64
    %1023 = vmatprep.subr.mxu0 0.0
    %1024 = vmatpush1.msra.mxu0 %v65
    %1025 = vmatprep.subr.mxu0 0.0
    %1026 = vmatpush1.msra.mxu0 %v66
    %1027 = vmatprep.subr.mxu0 0.0
    %1028 = vmatpush1.msra.mxu0 %v67
    %1029 = vmatprep.subr.mxu0 0.0
    %1030 = vmatpush1.msra.mxu0 0.0
    %1031 = vmatprep.subr.mxu0 0.0
    %1032 = vmatpush1.msra.mxu0 0.0
    %1033 = vmatprep.subr.mxu0 0.0
    %1034 = vmatpush1.msra.mxu0 0.0
    %1035 = vmatprep.subr.mxu0 0.0
    %1036 = vmatpush1.msra.mxu0 0.0
    %1037 = vmatprep.subr.mxu0 0.0
    %1038 = vmatpush1.msra.mxu0 0.0
    %1039 = vmatprep.subr.mxu0 0.0
    %1040 = vmatpush1.msra.mxu0 0.0
    %1041 = vmatprep.subr.mxu0 0.0
    %1042 = vmatpush1.msra.mxu0 0.0
    %1043 = vmatprep.subr.mxu0 0.0
    %1044 = vmatpush1.msra.mxu0 0.0
    %1045 = vmatprep.subr.mxu0 0.0
    %1046 = vmatpush1.msra.mxu0 0.0
    %1047 = vmatprep.subr.mxu0 0.0
    %1048 = vmatpush1.msra.mxu0 0.0
    %1049 = vmatprep.subr.mxu0 0.0
    %1050 = vmatpush1.msra.mxu0 0.0
    %1051 = vmatprep.subr.mxu0 0.0
    %1052 = vmatpush1.msra.mxu0 0.0
    %1053 = vmatprep.subr.mxu0 0.0
    %1054 = vmatpush1.msra.mxu0 0.0
    %1055 = vmatprep.subr.mxu0 0.0
    %1056 = vmatpush1.msra.mxu0 0.0
    %1057 = vmatprep.subr.mxu0 0.0
    %1058 = vmatpush1.msra.mxu0 0.0
    %1059 = vmatprep.subr.mxu0 0.0
    %1060 = vmatpush1.msra.mxu0 0.0
    %1061 = vmatprep.subr.mxu0 0.0
    %1062 = vmatpush1.msra.mxu0 0.0
    %1063 = vmatprep.subr.mxu0 0.0
    %1064 = vmatpush1.msra.mxu0 0.0
    %1065 = vmatprep.subr.mxu0 0.0
    %1066 = vmatpush1.msra.mxu0 0.0
    %1067 = vmatprep.subr.mxu0 0.0
    %1068 = vmatpush1.msra.mxu0 0.0
    %1069 = vmatprep.subr.mxu0 0.0
    %1070 = vmatpush1.msra.mxu0 0.0
    %1071 = vmatprep.subr.mxu0 0.0
    %1072 = vmatpush1.msra.mxu0 0.0
    %1073 = vmatprep.subr.mxu0 0.0
    %1074 = vmatpush1.msra.mxu0 0.0
    %1075 = vmatprep.subr.mxu0 0.0
    %1076 = vmatpush1.msra.mxu0 0.0
    %1077 = vmatprep.subr.mxu0 0.0
    %1078 = vmatpush1.msra.mxu0 0.0
    %1079 = vmatprep.subr.mxu0 0.0
    %1080 = vmatpush1.msra.mxu0 0.0
    %1081 = vmatprep.subr.mxu0 0.0
    %1082 = vmatpush1.msra.mxu0 0.0
    %1083 = vmatprep.subr.mxu0 0.0
    %1084 = vmatpush1.msra.mxu0 0.0
    %1085 = vmatprep.mubr.f32.mxu0 0.0
    %1086 = vmatmul.mubr.f32.gmra.mrb[0].mxu0 %v998
    %v1087 = vpop.f32.mrb[0].mxu0
    %v1088 = vadd.f32 %v996, %v1087
    %v1089 = vpop.f32.mrb[0].mxu0
    %1090 = vmatprep.mubr.f32.mxu0 0.0
    %1091 = vmatmul.mubr.f32.gmra.mrb[0].mxu0 %v1001
    %v1092 = vpop.f32.mrb[0].mxu0
    %v1093 = vadd.f32 %v996, %v1092
    %v1094 = vpop.f32.mrb[0].mxu0
    %1095 = vmatprep.mubr.f32.mxu0 0.0
    %1096 = vmatmul.mubr.f32.gmra.mrb[0].mxu0 %v1004
    %v1097 = vpop.f32.mrb[0].mxu0
    %v1098 = vadd.f32 %v996, %v1097
    %v1099 = vpop.f32.mrb[0].mxu0
    %1100 = vmatprep.mubr.f32.mxu0 0.0
    %1101 = vmatmul.mubr.f32.gmra.mrb[0].mxu0 %v1007
    %v1102 = vpop.f32.mrb[0].mxu0
    %v1103 = vadd.f32 %v996, %v1102
    %v1104 = vpop.f32.mrb[0].mxu0
    %1105 = vmatprep.mubr.f32.mxu0 0.0
    %1106 = vmatmul.mubr.f32.gmra.mrb[0].mxu0 %v1010
    %v1107 = vpop.f32.mrb[0].mxu0
    %v1108 = vadd.f32 %v996, %v1107
    %v1109 = vpop.f32.mrb[0].mxu0
    %1110 = vmatprep.mubr.f32.mxu0 0.0
    %1111 = vmatmul.mubr.f32.gmra.mrb[0].mxu0 %v1013
    %v1112 = vpop.f32.mrb[0].mxu0
    %v1113 = vadd.f32 %v996, %v1112
    %v1114 = vpop.f32.mrb[0].mxu0
    %1115 = vmatprep.mubr.f32.mxu0 0.0
    %1116 = vmatmul.mubr.f32.gmra.mrb[0].mxu0 %v1016
    %v1117 = vpop.f32.mrb[0].mxu0
    %v1118 = vadd.f32 %v996, %v1117
    %v1119 = vpop.f32.mrb[0].mxu0
    %1120 = vmatprep.mubr.f32.mxu0 0.0
    %1121 = vmatmul.mubr.f32.gmra.mrb[0].mxu0 %v1019
    %v1122 = vpop.f32.mrb[0].mxu0
    %v1123 = vadd.f32 %v996, %v1122
    %v1124 = vpop.f32.mrb[0].mxu0
    %1125 = vdwg.mxu0
    %vm1126 = vcmask 523264
    %v1127 = vsel %vm1126, %v1088, 0.0
    %1128 = vadd.xlane.f32.xlu0 %v1127
    %v1129 = vpop.xlane.xlu0 %1128
    %v1130 = vsel %vm1126, %v1093, 0.0
    %1131 = vadd.xlane.f32.xlu0 %v1130
    %v1132 = vpop.xlane.xlu0 %1131
    %v1133 = vsel %vm1126, %v1098, 0.0
    %1134 = vadd.xlane.f32.xlu0 %v1133
    %v1135 = vpop.xlane.xlu0 %1134
    %v1136 = vsel %vm1126, %v1103, 0.0
    %1137 = vadd.xlane.f32.xlu0 %v1136
    %v1138 = vpop.xlane.xlu0 %1137
    %v1139 = vsel %vm1126, %v1108, 0.0
    %1140 = vadd.xlane.f32.xlu0 %v1139
    %v1141 = vpop.xlane.xlu0 %1140
    %v1142 = vsel %vm1126, %v1113, 0.0
    %1143 = vadd.xlane.f32.xlu0 %v1142
    %v1144 = vpop.xlane.xlu0 %1143
    %v1145 = vsel %vm1126, %v1118, 0.0
    %1146 = vadd.xlane.f32.xlu0 %v1145
    %v1147 = vpop.xlane.xlu0 %1146
    %v1148 = vsel %vm1126, %v1123, 0.0
    %1149 = vadd.xlane.f32.xlu0 %v1148
    %v1150 = vpop.xlane.xlu0 %1149
    %v1151 = vrcp.pop 64.0
    %v1152 = vmul.f32 %v1129, %v1151
    %v1153 = vmul.f32 %v1132, %v1151
    %v1154 = vmul.f32 %v1135, %v1151
    %v1155 = vmul.f32 %v1138, %v1151
    %v1156 = vmul.f32 %v1141, %v1151
    %v1157 = vmul.f32 %v1144, %v1151
    %v1158 = vmul.f32 %v1147, %v1151
    %v1159 = vmul.f32 %v1150, %v1151
    %v1160 = vsub.f32 %v1088, %v1152
    %v1161 = vsub.f32 %v1093, %v1153
    %v1162 = vsub.f32 %v1098, %v1154
    %v1163 = vsub.f32 %v1103, %v1155
    %v1164 = vsub.f32 %v1108, %v1156
    %v1165 = vsub.f32 %v1113, %v1157
    %v1166 = vsub.f32 %v1118, %v1158
    %v1167 = vsub.f32 %v1123, %v1159
    %v1168 = vmul.f32 %v1160, %v1160
    %v1169 = vmul.f32 %v1161, %v1161
    %v1170 = vmul.f32 %v1162, %v1162
    %v1171 = vmul.f32 %v1163, %v1163
    %v1172 = vmul.f32 %v1164, %v1164
    %v1173 = vmul.f32 %v1165, %v1165
    %v1174 = vmul.f32 %v1166, %v1166
    %v1175 = vmul.f32 %v1167, %v1167
    %v1176 = vsel %vm1126, %v1168, 0.0
    %1177 = vadd.xlane.f32.xlu0 %v1176
    %v1178 = vpop.xlane.xlu0 %1177
    %v1179 = vsel %vm1126, %v1169, 0.0
    %1180 = vadd.xlane.f32.xlu0 %v1179
    %v1181 = vpop.xlane.xlu0 %1180
    %v1182 = vsel %vm1126, %v1170, 0.0
    %1183 = vadd.xlane.f32.xlu0 %v1182
    %v1184 = vpop.xlane.xlu0 %1183
    %v1185 = vsel %vm1126, %v1171, 0.0
    %1186 = vadd.xlane.f32.xlu0 %v1185
    %v1187 = vpop.xlane.xlu0 %1186
    %v1188 = vsel %vm1126, %v1172, 0.0
    %1189 = vadd.xlane.f32.xlu0 %v1188
    %v1190 = vpop.xlane.xlu0 %1189
    %v1191 = vsel %vm1126, %v1173, 0.0
    %1192 = vadd.xlane.f32.xlu0 %v1191
    %v1193 = vpop.xlane.xlu0 %1192
    %v1194 = vsel %vm1126, %v1174, 0.0
    %1195 = vadd.xlane.f32.xlu0 %v1194
    %v1196 = vpop.xlane.xlu0 %1195
    %v1197 = vsel %vm1126, %v1175, 0.0
    %1198 = vadd.xlane.f32.xlu0 %v1197
    %v1199 = vpop.xlane.xlu0 %1198
    %v1200 = vmul.f32 %v1178, %v1151
    %v1201 = vmul.f32 %v1181, %v1151
    %v1202 = vmul.f32 %v1184, %v1151
    %v1203 = vmul.f32 %v1187, %v1151
    %v1204 = vmul.f32 %v1190, %v1151
    %v1205 = vmul.f32 %v1193, %v1151
    %v1206 = vmul.f32 %v1196, %v1151
    %v1207 = vmul.f32 %v1199, %v1151
    %v1208 = vadd.f32 %v1200, 1e-05
    %v1209 = vadd.f32 %v1201, 1e-05
    %v1210 = vadd.f32 %v1202, 1e-05
    %v1211 = vadd.f32 %v1203, 1e-05
    %v1212 = vadd.f32 %v1204, 1e-05
    %v1213 = vadd.f32 %v1205, 1e-05
    %v1214 = vadd.f32 %v1206, 1e-05
    %v1215 = vadd.f32 %v1207, 1e-05
    %v1216 = vrsqrt.pop %v1208
    %v1217 = vrsqrt.pop %v1209
    %v1218 = vrsqrt.pop %v1210
    %v1219 = vrsqrt.pop %v1211
    %v1220 = vrsqrt.pop %v1212
    %v1221 = vrsqrt.pop %v1213
    %v1222 = vrsqrt.pop %v1214
    %v1223 = vrsqrt.pop %v1215
    %v1224 = vmul.f32 %v1160, %v1216
    %v1225 = vmul.f32 %v1161, %v1217
    %v1226 = vmul.f32 %v1162, %v1218
    %v1227 = vmul.f32 %v1163, %v1219
    %v1228 = vmul.f32 %v1164, %v1220
    %v1229 = vmul.f32 %v1165, %v1221
    %v1230 = vmul.f32 %v1166, %v1222
    %v1231 = vmul.f32 %v1167, %v1223
    %v1232 = vlaneseq
    %v1233 = vshrl.u32 %v1232, 7
    %v1234 = vsub.s32 1, %v1233
    %v1235 = vrot.slane %v77, %v1234
    %v1236 = vmul.f32 %v1224, %v1235
    %v1237 = vmul.f32 %v1225, %v1235
    %v1238 = vmul.f32 %v1226, %v1235
    %v1239 = vmul.f32 %v1227, %v1235
    %v1240 = vmul.f32 %v1228, %v1235
    %v1241 = vmul.f32 %v1229, %v1235
    %v1242 = vmul.f32 %v1230, %v1235
    %v1243 = vmul.f32 %v1231, %v1235
    %v1244 = vlaneseq
    %v1245 = vshrl.u32 %v1244, 7
    %v1246 = vsub.s32 2, %v1245
    %v1247 = vrot.slane %v77, %v1246
    %v1248 = vadd.f32 %v1236, %v1247
    %v1249 = vadd.f32 %v1237, %v1247
    %v1250 = vadd.f32 %v1238, %v1247
    %v1251 = vadd.f32 %v1239, %v1247
    %v1252 = vadd.f32 %v1240, %v1247
    %v1253 = vadd.f32 %v1241, %v1247
    %v1254 = vadd.f32 %v1242, %v1247
    %v1255 = vadd.f32 %v1243, %v1247
    %v1256 = vmax.f32 %v1248, 0.0
    %v1257 = vmax.f32 %v1249, 0.0
    %v1258 = vmax.f32 %v1250, 0.0
    %v1259 = vmax.f32 %v1251, 0.0
    %v1260 = vmax.f32 %v1252, 0.0
    %v1261 = vmax.f32 %v1253, 0.0
    %v1262 = vmax.f32 %v1254, 0.0
    %v1263 = vmax.f32 %v1255, 0.0
    %v1264 = vlaneseq
    %v1265 = vshrl.u32 %v1264, 7
    %v1266 = vsub.s32 5, %v1265
    %v1267 = vrot.slane %v76, %v1266
    %v1269 = vsel %vm1126, %v1256, 0
    %v1272 = vsel %vm1126, %v1257, 0
    %v1275 = vsel %vm1126, %v1258, 0
    %v1278 = vsel %vm1126, %v1259, 0
    %v1281 = vsel %vm1126, %v1260, 0
    %v1284 = vsel %vm1126, %v1261, 0
    %v1287 = vsel %vm1126, %v1262, 0
    %v1290 = vsel %vm1126, %v1263, 0
    %1292 = vmatprep.subr.mxu0 0.0
    %1293 = vmatpush1.msra.mxu0 %v68
    %1294 = vmatprep.subr.mxu0 0.0
    %1295 = vmatpush1.msra.mxu0 %v69
    %1296 = vmatprep.subr.mxu0 0.0
    %1297 = vmatpush1.msra.mxu0 %v70
    %1298 = vmatprep.subr.mxu0 0.0
    %1299 = vmatpush1.msra.mxu0 %v71
    %1300 = vmatprep.subr.mxu0 0.0
    %1301 = vmatpush1.msra.mxu0 %v72
    %1302 = vmatprep.subr.mxu0 0.0
    %1303 = vmatpush1.msra.mxu0 %v73
    %1304 = vmatprep.subr.mxu0 0.0
    %1305 = vmatpush1.msra.mxu0 %v74
    %1306 = vmatprep.subr.mxu0 0.0
    %1307 = vmatpush1.msra.mxu0 %v75
    %1308 = vmatprep.subr.mxu0 0.0
    %1309 = vmatpush1.msra.mxu0 0.0
    %1310 = vmatprep.subr.mxu0 0.0
    %1311 = vmatpush1.msra.mxu0 0.0
    %1312 = vmatprep.subr.mxu0 0.0
    %1313 = vmatpush1.msra.mxu0 0.0
    %1314 = vmatprep.subr.mxu0 0.0
    %1315 = vmatpush1.msra.mxu0 0.0
    %1316 = vmatprep.subr.mxu0 0.0
    %1317 = vmatpush1.msra.mxu0 0.0
    %1318 = vmatprep.subr.mxu0 0.0
    %1319 = vmatpush1.msra.mxu0 0.0
    %1320 = vmatprep.subr.mxu0 0.0
    %1321 = vmatpush1.msra.mxu0 0.0
    %1322 = vmatprep.subr.mxu0 0.0
    %1323 = vmatpush1.msra.mxu0 0.0
    %1324 = vmatprep.subr.mxu0 0.0
    %1325 = vmatpush1.msra.mxu0 0.0
    %1326 = vmatprep.subr.mxu0 0.0
    %1327 = vmatpush1.msra.mxu0 0.0
    %1328 = vmatprep.subr.mxu0 0.0
    %1329 = vmatpush1.msra.mxu0 0.0
    %1330 = vmatprep.subr.mxu0 0.0
    %1331 = vmatpush1.msra.mxu0 0.0
    %1332 = vmatprep.subr.mxu0 0.0
    %1333 = vmatpush1.msra.mxu0 0.0
    %1334 = vmatprep.subr.mxu0 0.0
    %1335 = vmatpush1.msra.mxu0 0.0
    %1336 = vmatprep.subr.mxu0 0.0
    %1337 = vmatpush1.msra.mxu0 0.0
    %1338 = vmatprep.subr.mxu0 0.0
    %1339 = vmatpush1.msra.mxu0 0.0
    %1340 = vmatprep.subr.mxu0 0.0
    %1341 = vmatpush1.msra.mxu0 0.0
    %1342 = vmatprep.subr.mxu0 0.0
    %1343 = vmatpush1.msra.mxu0 0.0
    %1344 = vmatprep.subr.mxu0 0.0
    %1345 = vmatpush1.msra.mxu0 0.0
    %1346 = vmatprep.subr.mxu0 0.0
    %1347 = vmatpush1.msra.mxu0 0.0
    %1348 = vmatprep.subr.mxu0 0.0
    %1349 = vmatpush1.msra.mxu0 0.0
    %1350 = vmatprep.subr.mxu0 0.0
    %1351 = vmatpush1.msra.mxu0 0.0
    %1352 = vmatprep.subr.mxu0 0.0
    %1353 = vmatpush1.msra.mxu0 0.0
    %1354 = vmatprep.subr.mxu0 0.0
    %1355 = vmatpush1.msra.mxu0 0.0
    %1356 = vmatprep.mubr.f32.mxu0 0.0
    %1357 = vmatmul.mubr.f32.gmra.mrb[0].mxu0 %v1269
    %v1358 = vpop.f32.mrb[0].mxu0
    %v1359 = vadd.f32 %v1267, %v1358
    %v1360 = vpop.f32.mrb[0].mxu0
    %1361 = vmatprep.mubr.f32.mxu0 0.0
    %1362 = vmatmul.mubr.f32.gmra.mrb[0].mxu0 %v1272
    %v1363 = vpop.f32.mrb[0].mxu0
    %v1364 = vadd.f32 %v1267, %v1363
    %v1365 = vpop.f32.mrb[0].mxu0
    %1366 = vmatprep.mubr.f32.mxu0 0.0
    %1367 = vmatmul.mubr.f32.gmra.mrb[0].mxu0 %v1275
    %v1368 = vpop.f32.mrb[0].mxu0
    %v1369 = vadd.f32 %v1267, %v1368
    %v1370 = vpop.f32.mrb[0].mxu0
    %1371 = vmatprep.mubr.f32.mxu0 0.0
    %1372 = vmatmul.mubr.f32.gmra.mrb[0].mxu0 %v1278
    %v1373 = vpop.f32.mrb[0].mxu0
    %v1374 = vadd.f32 %v1267, %v1373
    %v1375 = vpop.f32.mrb[0].mxu0
    %1376 = vmatprep.mubr.f32.mxu0 0.0
    %1377 = vmatmul.mubr.f32.gmra.mrb[0].mxu0 %v1281
    %v1378 = vpop.f32.mrb[0].mxu0
    %v1379 = vadd.f32 %v1267, %v1378
    %v1380 = vpop.f32.mrb[0].mxu0
    %1381 = vmatprep.mubr.f32.mxu0 0.0
    %1382 = vmatmul.mubr.f32.gmra.mrb[0].mxu0 %v1284
    %v1383 = vpop.f32.mrb[0].mxu0
    %v1384 = vadd.f32 %v1267, %v1383
    %v1385 = vpop.f32.mrb[0].mxu0
    %1386 = vmatprep.mubr.f32.mxu0 0.0
    %1387 = vmatmul.mubr.f32.gmra.mrb[0].mxu0 %v1287
    %v1388 = vpop.f32.mrb[0].mxu0
    %v1389 = vadd.f32 %v1267, %v1388
    %v1390 = vpop.f32.mrb[0].mxu0
    %1391 = vmatprep.mubr.f32.mxu0 0.0
    %1392 = vmatmul.mubr.f32.gmra.mrb[0].mxu0 %v1290
    %v1393 = vpop.f32.mrb[0].mxu0
    %v1394 = vadd.f32 %v1267, %v1393
    %v1395 = vpop.f32.mrb[0].mxu0
    %1396 = vdwg.mxu0
    %v1397 = vsel %vm78, %v1359, 0.0
    %1398 = vadd.xlane.f32.xlu0 %v1397
    %v1399 = vpop.xlane.xlu0 %1398
    %v1400 = vsel %vm78, %v1364, 0.0
    %1401 = vadd.xlane.f32.xlu0 %v1400
    %v1402 = vpop.xlane.xlu0 %1401
    %v1403 = vsel %vm78, %v1369, 0.0
    %1404 = vadd.xlane.f32.xlu0 %v1403
    %v1405 = vpop.xlane.xlu0 %1404
    %v1406 = vsel %vm78, %v1374, 0.0
    %1407 = vadd.xlane.f32.xlu0 %v1406
    %v1408 = vpop.xlane.xlu0 %1407
    %v1409 = vsel %vm78, %v1379, 0.0
    %1410 = vadd.xlane.f32.xlu0 %v1409
    %v1411 = vpop.xlane.xlu0 %1410
    %v1412 = vsel %vm78, %v1384, 0.0
    %1413 = vadd.xlane.f32.xlu0 %v1412
    %v1414 = vpop.xlane.xlu0 %1413
    %v1415 = vsel %vm78, %v1389, 0.0
    %1416 = vadd.xlane.f32.xlu0 %v1415
    %v1417 = vpop.xlane.xlu0 %1416
    %v1418 = vsel %vm78, %v1394, 0.0
    %1419 = vadd.xlane.f32.xlu0 %v1418
    %v1420 = vpop.xlane.xlu0 %1419
    %v1421 = vmul.f32 %v1399, %v103
    %v1422 = vmul.f32 %v1402, %v103
    %v1423 = vmul.f32 %v1405, %v103
    %v1424 = vmul.f32 %v1408, %v103
    %v1425 = vmul.f32 %v1411, %v103
    %v1426 = vmul.f32 %v1414, %v103
    %v1427 = vmul.f32 %v1417, %v103
    %v1428 = vmul.f32 %v1420, %v103
    %v1429 = vsub.f32 %v1359, %v1421
    %v1430 = vsub.f32 %v1364, %v1422
    %v1431 = vsub.f32 %v1369, %v1423
    %v1432 = vsub.f32 %v1374, %v1424
    %v1433 = vsub.f32 %v1379, %v1425
    %v1434 = vsub.f32 %v1384, %v1426
    %v1435 = vsub.f32 %v1389, %v1427
    %v1436 = vsub.f32 %v1394, %v1428
    %v1437 = vmul.f32 %v1429, %v1429
    %v1438 = vmul.f32 %v1430, %v1430
    %v1439 = vmul.f32 %v1431, %v1431
    %v1440 = vmul.f32 %v1432, %v1432
    %v1441 = vmul.f32 %v1433, %v1433
    %v1442 = vmul.f32 %v1434, %v1434
    %v1443 = vmul.f32 %v1435, %v1435
    %v1444 = vmul.f32 %v1436, %v1436
    %v1445 = vsel %vm78, %v1437, 0.0
    %1446 = vadd.xlane.f32.xlu0 %v1445
    %v1447 = vpop.xlane.xlu0 %1446
    %v1448 = vsel %vm78, %v1438, 0.0
    %1449 = vadd.xlane.f32.xlu0 %v1448
    %v1450 = vpop.xlane.xlu0 %1449
    %v1451 = vsel %vm78, %v1439, 0.0
    %1452 = vadd.xlane.f32.xlu0 %v1451
    %v1453 = vpop.xlane.xlu0 %1452
    %v1454 = vsel %vm78, %v1440, 0.0
    %1455 = vadd.xlane.f32.xlu0 %v1454
    %v1456 = vpop.xlane.xlu0 %1455
    %v1457 = vsel %vm78, %v1441, 0.0
    %1458 = vadd.xlane.f32.xlu0 %v1457
    %v1459 = vpop.xlane.xlu0 %1458
    %v1460 = vsel %vm78, %v1442, 0.0
    %1461 = vadd.xlane.f32.xlu0 %v1460
    %v1462 = vpop.xlane.xlu0 %1461
    %v1463 = vsel %vm78, %v1443, 0.0
    %1464 = vadd.xlane.f32.xlu0 %v1463
    %v1465 = vpop.xlane.xlu0 %1464
    %v1466 = vsel %vm78, %v1444, 0.0
    %1467 = vadd.xlane.f32.xlu0 %v1466
    %v1468 = vpop.xlane.xlu0 %1467
    %v1469 = vmul.f32 %v1447, %v103
    %v1470 = vmul.f32 %v1450, %v103
    %v1471 = vmul.f32 %v1453, %v103
    %v1472 = vmul.f32 %v1456, %v103
    %v1473 = vmul.f32 %v1459, %v103
    %v1474 = vmul.f32 %v1462, %v103
    %v1475 = vmul.f32 %v1465, %v103
    %v1476 = vmul.f32 %v1468, %v103
    %v1477 = vadd.f32 %v1469, 1e-05
    %v1478 = vadd.f32 %v1470, 1e-05
    %v1479 = vadd.f32 %v1471, 1e-05
    %v1480 = vadd.f32 %v1472, 1e-05
    %v1481 = vadd.f32 %v1473, 1e-05
    %v1482 = vadd.f32 %v1474, 1e-05
    %v1483 = vadd.f32 %v1475, 1e-05
    %v1484 = vadd.f32 %v1476, 1e-05
    %v1485 = vrsqrt.pop %v1477
    %v1486 = vrsqrt.pop %v1478
    %v1487 = vrsqrt.pop %v1479
    %v1488 = vrsqrt.pop %v1480
    %v1489 = vrsqrt.pop %v1481
    %v1490 = vrsqrt.pop %v1482
    %v1491 = vrsqrt.pop %v1483
    %v1492 = vrsqrt.pop %v1484
    %v1493 = vmul.f32 %v1429, %v1485
    %v1494 = vmul.f32 %v1430, %v1486
    %v1495 = vmul.f32 %v1431, %v1487
    %v1496 = vmul.f32 %v1432, %v1488
    %v1497 = vmul.f32 %v1433, %v1489
    %v1498 = vmul.f32 %v1434, %v1490
    %v1499 = vmul.f32 %v1435, %v1491
    %v1500 = vmul.f32 %v1436, %v1492
    %v1501 = vlaneseq
    %v1502 = vshrl.u32 %v1501, 7
    %v1503 = vsub.s32 6, %v1502
    %v1504 = vrot.slane %v76, %v1503
    %v1505 = vmul.f32 %v1493, %v1504
    %v1506 = vmul.f32 %v1494, %v1504
    %v1507 = vmul.f32 %v1495, %v1504
    %v1508 = vmul.f32 %v1496, %v1504
    %v1509 = vmul.f32 %v1497, %v1504
    %v1510 = vmul.f32 %v1498, %v1504
    %v1511 = vmul.f32 %v1499, %v1504
    %v1512 = vmul.f32 %v1500, %v1504
    %v1513 = vlaneseq
    %v1514 = vshrl.u32 %v1513, 7
    %v1515 = vsub.s32 7, %v1514
    %v1516 = vrot.slane %v76, %v1515
    %v1517 = vadd.f32 %v1505, %v1516
    %v1518 = vadd.f32 %v1506, %v1516
    %v1519 = vadd.f32 %v1507, %v1516
    %v1520 = vadd.f32 %v1508, %v1516
    %v1521 = vadd.f32 %v1509, %v1516
    %v1522 = vadd.f32 %v1510, %v1516
    %v1523 = vadd.f32 %v1511, %v1516
    %v1524 = vadd.f32 %v1512, %v1516
    %1525 = vxpose.xlu0.b32.start [1/16] %v1517, 128
    %1526 = vxpose.xlu0.b32.cont [2/16] %v1518, 128
    %1527 = vxpose.xlu0.b32.cont [3/16] %v1519, 128
    %1528 = vxpose.xlu0.b32.cont [4/16] %v1520, 128
    %1529 = vxpose.xlu0.b32.cont [5/16] 0.0, 128
    %1530 = vxpose.xlu0.b32.cont [6/16] 0.0, 128
    %1531 = vxpose.xlu0.b32.cont [7/16] 0.0, 128
    %1532 = vxpose.xlu0.b32.cont [8/16] 0.0, 128
    %1533 = vxpose.xlu0.b32.cont [9/16] 0.0, 128
    %1534 = vxpose.xlu0.b32.cont [10/16] 0.0, 128
    %1535 = vxpose.xlu0.b32.cont [11/16] 0.0, 128
    %1536 = vxpose.xlu0.b32.cont [12/16] 0.0, 128
    %1537 = vxpose.xlu0.b32.cont [13/16] 0.0, 128
    %1538 = vxpose.xlu0.b32.cont [14/16] 0.0, 128
    %1539 = vxpose.xlu0.b32.cont [15/16] 0.0, 128
    %1540 = vxpose.xlu0.b32.end [16/16] 0.0, 128
    %v1541 = vpop.trf.xlu0
    %v1542 = vpop.trf.xlu0
    %v1543 = vpop.trf.xlu0
    %v1544 = vpop.trf.xlu0
    %v1545 = vpop.trf.xlu0
    %v1546 = vpop.trf.xlu0
    %v1547 = vpop.trf.xlu0
    %v1548 = vpop.trf.xlu0
    %v1549 = vpop.trf.xlu0
    %v1550 = vpop.trf.xlu0
    %v1551 = vpop.trf.xlu0
    %v1552 = vpop.trf.xlu0
    %v1553 = vpop.trf.xlu0
    %v1554 = vpop.trf.xlu0
    %v1555 = vpop.trf.xlu0
    %v1556 = vpop.trf.xlu0
    %1557 = vxpose.xlu0.b32.start [1/16] %v1521, 128
    %1558 = vxpose.xlu0.b32.cont [2/16] %v1522, 128
    %1559 = vxpose.xlu0.b32.cont [3/16] %v1523, 128
    %1560 = vxpose.xlu0.b32.cont [4/16] %v1524, 128
    %1561 = vxpose.xlu0.b32.cont [5/16] 0.0, 128
    %1562 = vxpose.xlu0.b32.cont [6/16] 0.0, 128
    %1563 = vxpose.xlu0.b32.cont [7/16] 0.0, 128
    %1564 = vxpose.xlu0.b32.cont [8/16] 0.0, 128
    %1565 = vxpose.xlu0.b32.cont [9/16] 0.0, 128
    %1566 = vxpose.xlu0.b32.cont [10/16] 0.0, 128
    %1567 = vxpose.xlu0.b32.cont [11/16] 0.0, 128
    %1568 = vxpose.xlu0.b32.cont [12/16] 0.0, 128
    %1569 = vxpose.xlu0.b32.cont [13/16] 0.0, 128
    %1570 = vxpose.xlu0.b32.cont [14/16] 0.0, 128
    %1571 = vxpose.xlu0.b32.cont [15/16] 0.0, 128
    %1572 = vxpose.xlu0.b32.end [16/16] 0.0, 128
    %v1573 = vpop.trf.xlu0
    %v1574 = vpop.trf.xlu0
    %v1575 = vpop.trf.xlu0
    %v1576 = vpop.trf.xlu0
    %v1577 = vpop.trf.xlu0
    %v1578 = vpop.trf.xlu0
    %v1579 = vpop.trf.xlu0
    %v1580 = vpop.trf.xlu0
    %v1581 = vpop.trf.xlu0
    %v1582 = vpop.trf.xlu0
    %v1583 = vpop.trf.xlu0
    %v1584 = vpop.trf.xlu0
    %v1585 = vpop.trf.xlu0
    %v1586 = vpop.trf.xlu0
    %v1587 = vpop.trf.xlu0
    %v1588 = vpop.trf.xlu0
    %v1589 = vadd.f32 %v810, %v1541
    %v1590 = vadd.f32 %v815, %v1542
    %v1591 = vadd.f32 %v820, %v1543
    %v1592 = vadd.f32 %v825, %v1544
    %v1593 = vadd.f32 %v911, %v1573
    %v1594 = vadd.f32 %v916, %v1574
    %v1595 = vadd.f32 %v921, %v1575
    %v1596 = vadd.f32 %v926, %v1576
    %1597 = vst.msk [vmem:[%s9] sm:$0xff] %vm638, %v719
    %1598 = vst.msk [vmem:[%s9 + $0x8] sm:$0xff] %vm638, %v720
    %1599 = vst.msk [vmem:[%s9 + $0x10] sm:$0xff] %vm638, %v721
    %1600 = vst.msk [vmem:[%s9 + $0x18] sm:$0xff] %vm638, %v722
    %1601 = vst.msk [vmem:[%s9 + $0x20] sm:$0xff] %vm638, %v723
    %1602 = vst.msk [vmem:[%s9 + $0x28] sm:$0xff] %vm638, %v724
    %1603 = vst.msk [vmem:[%s9 + $0x30] sm:$0xff] %vm638, %v725
    %1604 = vst.msk [vmem:[%s9 + $0x38] sm:$0xff] %vm638, %v726
    %s1605 = scalar_lea.vmem %s2, 32
    %v1606 = vld [vmem:[%s1605] sm:$0xff]
    %v1607 = vld [vmem:[%s1605 + $0x8] sm:$0xff]
    %v1608 = vld [vmem:[%s1605 + $0x10] sm:$0xff]
    %v1609 = vld [vmem:[%s1605 + $0x18] sm:$0xff]
    %s1610 = scalar_lea.vmem %s3, 32
    %v1611 = vld [vmem:[%s1610] sm:$0xff]
    %v1612 = vld [vmem:[%s1610 + $0x8] sm:$0xff]
    %v1613 = vld [vmem:[%s1610 + $0x10] sm:$0xff]
    %v1614 = vld [vmem:[%s1610 + $0x18] sm:$0xff]
    %s1615 = scalar_lea.vmem [#allocation2], 32
    %v1616 = vld [vmem:[%s1615] sm:$0xff]
    %v1617 = vld [vmem:[%s1615 + $0x8] sm:$0xff]
    %v1618 = vld [vmem:[%s1615 + $0x10] sm:$0xff]
    %v1619 = vld [vmem:[%s1615 + $0x18] sm:$0xff]
    %s1620 = scalar_lea.vmem %s5, 64
    %v1621 = vld [vmem:[%s1620] sm:$0xff]
    %v1622 = vld [vmem:[%s1620 + $0x8] sm:$0xff]
    %v1623 = vld [vmem:[%s1620 + $0x10] sm:$0xff]
    %v1624 = vld [vmem:[%s1620 + $0x18] sm:$0xff]
    %v1625 = vld [vmem:[%s1620 + $0x20] sm:$0xff]
    %v1626 = vld [vmem:[%s1620 + $0x28] sm:$0xff]
    %v1627 = vld [vmem:[%s1620 + $0x30] sm:$0xff]
    %v1628 = vld [vmem:[%s1620 + $0x38] sm:$0xff]
    %s1629 = scalar_lea.vmem %s6, 8
    %v1630 = vld [vmem:[%s1629] sm:$0xff]
    %s1631 = scalar_lea.vmem %s7, 4
    %v1632 = vld [vmem:[%s1631] sm:$0x7]
    %v1633 = vsel %vm78, %v1589, 0.0
    %1634 = vadd.xlane.f32.xlu0 %v1633
    %v1635 = vpop.xlane.xlu0 %1634
    %v1636 = vsel %vm78, %v1590, 0.0
    %1637 = vadd.xlane.f32.xlu0 %v1636
    %v1638 = vpop.xlane.xlu0 %1637
    %v1639 = vsel %vm78, %v1591, 0.0
    %1640 = vadd.xlane.f32.xlu0 %v1639
    %v1641 = vpop.xlane.xlu0 %1640
    %v1642 = vsel %vm78, %v1592, 0.0
    %1643 = vadd.xlane.f32.xlu0 %v1642
    %v1644 = vpop.xlane.xlu0 %1643
    %v1645 = vsel %vm78, %v1593, 0.0
    %1646 = vadd.xlane.f32.xlu0 %v1645
    %v1647 = vpop.xlane.xlu0 %1646
    %v1648 = vsel %vm78, %v1594, 0.0
    %1649 = vadd.xlane.f32.xlu0 %v1648
    %v1650 = vpop.xlane.xlu0 %1649
    %v1651 = vsel %vm78, %v1595, 0.0
    %1652 = vadd.xlane.f32.xlu0 %v1651
    %v1653 = vpop.xlane.xlu0 %1652
    %v1654 = vsel %vm78, %v1596, 0.0
    %1655 = vadd.xlane.f32.xlu0 %v1654
    %v1656 = vpop.xlane.xlu0 %1655
    %v1657 = vmul.f32 %v1635, %v103
    %v1658 = vmul.f32 %v1638, %v103
    %v1659 = vmul.f32 %v1641, %v103
    %v1660 = vmul.f32 %v1644, %v103
    %v1661 = vmul.f32 %v1647, %v103
    %v1662 = vmul.f32 %v1650, %v103
    %v1663 = vmul.f32 %v1653, %v103
    %v1664 = vmul.f32 %v1656, %v103
    %v1665 = vsub.f32 %v1589, %v1657
    %v1666 = vsub.f32 %v1590, %v1658
    %v1667 = vsub.f32 %v1591, %v1659
    %v1668 = vsub.f32 %v1592, %v1660
    %v1669 = vsub.f32 %v1593, %v1661
    %v1670 = vsub.f32 %v1594, %v1662
    %v1671 = vsub.f32 %v1595, %v1663
    %v1672 = vsub.f32 %v1596, %v1664
    %v1673 = vmul.f32 %v1665, %v1665
    %v1674 = vmul.f32 %v1666, %v1666
    %v1675 = vmul.f32 %v1667, %v1667
    %v1676 = vmul.f32 %v1668, %v1668
    %v1677 = vmul.f32 %v1669, %v1669
    %v1678 = vmul.f32 %v1670, %v1670
    %v1679 = vmul.f32 %v1671, %v1671
    %v1680 = vmul.f32 %v1672, %v1672
    %v1681 = vsel %vm78, %v1673, 0.0
    %1682 = vadd.xlane.f32.xlu0 %v1681
    %v1683 = vpop.xlane.xlu0 %1682
    %v1684 = vsel %vm78, %v1674, 0.0
    %1685 = vadd.xlane.f32.xlu0 %v1684
    %v1686 = vpop.xlane.xlu0 %1685
    %v1687 = vsel %vm78, %v1675, 0.0
    %1688 = vadd.xlane.f32.xlu0 %v1687
    %v1689 = vpop.xlane.xlu0 %1688
    %v1690 = vsel %vm78, %v1676, 0.0
    %1691 = vadd.xlane.f32.xlu0 %v1690
    %v1692 = vpop.xlane.xlu0 %1691
    %v1693 = vsel %vm78, %v1677, 0.0
    %1694 = vadd.xlane.f32.xlu0 %v1693
    %v1695 = vpop.xlane.xlu0 %1694
    %v1696 = vsel %vm78, %v1678, 0.0
    %1697 = vadd.xlane.f32.xlu0 %v1696
    %v1698 = vpop.xlane.xlu0 %1697
    %v1699 = vsel %vm78, %v1679, 0.0
    %1700 = vadd.xlane.f32.xlu0 %v1699
    %v1701 = vpop.xlane.xlu0 %1700
    %v1702 = vsel %vm78, %v1680, 0.0
    %1703 = vadd.xlane.f32.xlu0 %v1702
    %v1704 = vpop.xlane.xlu0 %1703
    %v1705 = vmul.f32 %v1683, %v103
    %v1706 = vmul.f32 %v1686, %v103
    %v1707 = vmul.f32 %v1689, %v103
    %v1708 = vmul.f32 %v1692, %v103
    %v1709 = vmul.f32 %v1695, %v103
    %v1710 = vmul.f32 %v1698, %v103
    %v1711 = vmul.f32 %v1701, %v103
    %v1712 = vmul.f32 %v1704, %v103
    %v1713 = vadd.f32 %v1705, 1e-05
    %v1714 = vadd.f32 %v1706, 1e-05
    %v1715 = vadd.f32 %v1707, 1e-05
    %v1716 = vadd.f32 %v1708, 1e-05
    %v1717 = vadd.f32 %v1709, 1e-05
    %v1718 = vadd.f32 %v1710, 1e-05
    %v1719 = vadd.f32 %v1711, 1e-05
    %v1720 = vadd.f32 %v1712, 1e-05
    %v1721 = vrsqrt.pop %v1713
    %v1722 = vrsqrt.pop %v1714
    %v1723 = vrsqrt.pop %v1715
    %v1724 = vrsqrt.pop %v1716
    %v1725 = vrsqrt.pop %v1717
    %v1726 = vrsqrt.pop %v1718
    %v1727 = vrsqrt.pop %v1719
    %v1728 = vrsqrt.pop %v1720
    %v1729 = vmul.f32 %v1665, %v1721
    %v1730 = vmul.f32 %v1666, %v1722
    %v1731 = vmul.f32 %v1667, %v1723
    %v1732 = vmul.f32 %v1668, %v1724
    %v1733 = vmul.f32 %v1669, %v1725
    %v1734 = vmul.f32 %v1670, %v1726
    %v1735 = vmul.f32 %v1671, %v1727
    %v1736 = vmul.f32 %v1672, %v1728
    %v1737 = vlaneseq
    %v1738 = vshrl.u32 %v1737, 7
    %v1739 = vsub.s32 0, %v1738
    %v1740 = vrot.slane %v1630, %v1739
    %v1741 = vmul.f32 %v1729, %v1740
    %v1742 = vmul.f32 %v1730, %v1740
    %v1743 = vmul.f32 %v1731, %v1740
    %v1744 = vmul.f32 %v1732, %v1740
    %v1745 = vmul.f32 %v1733, %v1740
    %v1746 = vmul.f32 %v1734, %v1740
    %v1747 = vmul.f32 %v1735, %v1740
    %v1748 = vmul.f32 %v1736, %v1740
    %v1749 = vlaneseq
    %v1750 = vshrl.u32 %v1749, 7
    %v1751 = vsub.s32 1, %v1750
    %v1752 = vrot.slane %v1630, %v1751
    %v1753 = vadd.f32 %v1741, %v1752
    %v1754 = vadd.f32 %v1742, %v1752
    %v1755 = vadd.f32 %v1743, %v1752
    %v1756 = vadd.f32 %v1744, %v1752
    %v1757 = vadd.f32 %v1745, %v1752
    %v1758 = vadd.f32 %v1746, %v1752
    %v1759 = vadd.f32 %v1747, %v1752
    %v1760 = vadd.f32 %v1748, %v1752
    %v1761 = vlaneseq
    %v1762 = vshrl.u32 %v1761, 7
    %v1763 = vsub.s32 2, %v1762
    %v1764 = vrot.slane %v1630, %v1763
    %v1766 = vsel %vm78, %v1753, 0
    %v1769 = vsel %vm78, %v1754, 0
    %v1772 = vsel %vm78, %v1755, 0
    %v1775 = vsel %vm78, %v1756, 0
    %v1778 = vsel %vm78, %v1757, 0
    %v1781 = vsel %vm78, %v1758, 0
    %v1784 = vsel %vm78, %v1759, 0
    %v1787 = vsel %vm78, %v1760, 0
    %1789 = vmatprep.subr.mxu0 0.0
    %1790 = vmatpush1.msra.mxu0 %v1606
    %1791 = vmatprep.subr.mxu0 0.0
    %1792 = vmatpush1.msra.mxu0 %v1607
    %1793 = vmatprep.subr.mxu0 0.0
    %1794 = vmatpush1.msra.mxu0 %v1608
    %1795 = vmatprep.subr.mxu0 0.0
    %1796 = vmatpush1.msra.mxu0 %v1609
    %1797 = vmatprep.subr.mxu0 0.0
    %1798 = vmatpush1.msra.mxu0 0.0
    %1799 = vmatprep.subr.mxu0 0.0
    %1800 = vmatpush1.msra.mxu0 0.0
    %1801 = vmatprep.subr.mxu0 0.0
    %1802 = vmatpush1.msra.mxu0 0.0
    %1803 = vmatprep.subr.mxu0 0.0
    %1804 = vmatpush1.msra.mxu0 0.0
    %1805 = vmatprep.subr.mxu0 0.0
    %1806 = vmatpush1.msra.mxu0 0.0
    %1807 = vmatprep.subr.mxu0 0.0
    %1808 = vmatpush1.msra.mxu0 0.0
    %1809 = vmatprep.subr.mxu0 0.0
    %1810 = vmatpush1.msra.mxu0 0.0
    %1811 = vmatprep.subr.mxu0 0.0
    %1812 = vmatpush1.msra.mxu0 0.0
    %1813 = vmatprep.subr.mxu0 0.0
    %1814 = vmatpush1.msra.mxu0 0.0
    %1815 = vmatprep.subr.mxu0 0.0
    %1816 = vmatpush1.msra.mxu0 0.0
    %1817 = vmatprep.subr.mxu0 0.0
    %1818 = vmatpush1.msra.mxu0 0.0
    %1819 = vmatprep.subr.mxu0 0.0
    %1820 = vmatpush1.msra.mxu0 0.0
    %1821 = vmatprep.subr.mxu0 0.0
    %1822 = vmatpush1.msra.mxu0 0.0
    %1823 = vmatprep.subr.mxu0 0.0
    %1824 = vmatpush1.msra.mxu0 0.0
    %1825 = vmatprep.subr.mxu0 0.0
    %1826 = vmatpush1.msra.mxu0 0.0
    %1827 = vmatprep.subr.mxu0 0.0
    %1828 = vmatpush1.msra.mxu0 0.0
    %1829 = vmatprep.subr.mxu0 0.0
    %1830 = vmatpush1.msra.mxu0 0.0
    %1831 = vmatprep.subr.mxu0 0.0
    %1832 = vmatpush1.msra.mxu0 0.0
    %1833 = vmatprep.subr.mxu0 0.0
    %1834 = vmatpush1.msra.mxu0 0.0
    %1835 = vmatprep.subr.mxu0 0.0
    %1836 = vmatpush1.msra.mxu0 0.0
    %1837 = vmatprep.subr.mxu0 0.0
    %1838 = vmatpush1.msra.mxu0 0.0
    %1839 = vmatprep.subr.mxu0 0.0
    %1840 = vmatpush1.msra.mxu0 0.0
    %1841 = vmatprep.subr.mxu0 0.0
    %1842 = vmatpush1.msra.mxu0 0.0
    %1843 = vmatprep.subr.mxu0 0.0
    %1844 = vmatpush1.msra.mxu0 0.0
    %1845 = vmatprep.subr.mxu0 0.0
    %1846 = vmatpush1.msra.mxu0 0.0
    %1847 = vmatprep.subr.mxu0 0.0
    %1848 = vmatpush1.msra.mxu0 0.0
    %1849 = vmatprep.subr.mxu0 0.0
    %1850 = vmatpush1.msra.mxu0 0.0
    %1851 = vmatprep.subr.mxu0 0.0
    %1852 = vmatpush1.msra.mxu0 0.0
    %1853 = vmatprep.mubr.f32.mxu0 0.0
    %1854 = vmatmul.mubr.f32.gmra.mrb[0].mxu0 %v1766
    %v1855 = vpop.f32.mrb[0].mxu0
    %v1856 = vadd.f32 %v1764, %v1855
    %v1857 = vpop.f32.mrb[0].mxu0
    %1858 = vmatprep.mubr.f32.mxu0 0.0
    %1859 = vmatmul.mubr.f32.gmra.mrb[0].mxu0 %v1769
    %v1860 = vpop.f32.mrb[0].mxu0
    %v1861 = vadd.f32 %v1764, %v1860
    %v1862 = vpop.f32.mrb[0].mxu0
    %1863 = vmatprep.mubr.f32.mxu0 0.0
    %1864 = vmatmul.mubr.f32.gmra.mrb[0].mxu0 %v1772
    %v1865 = vpop.f32.mrb[0].mxu0
    %v1866 = vadd.f32 %v1764, %v1865
    %v1867 = vpop.f32.mrb[0].mxu0
    %1868 = vmatprep.mubr.f32.mxu0 0.0
    %1869 = vmatmul.mubr.f32.gmra.mrb[0].mxu0 %v1775
    %v1870 = vpop.f32.mrb[0].mxu0
    %v1871 = vadd.f32 %v1764, %v1870
    %v1872 = vpop.f32.mrb[0].mxu0
    %1873 = vmatprep.mubr.f32.mxu0 0.0
    %1874 = vmatmul.mubr.f32.gmra.mrb[0].mxu0 %v1778
    %v1875 = vpop.f32.mrb[0].mxu0
    %v1876 = vadd.f32 %v1764, %v1875
    %v1877 = vpop.f32.mrb[0].mxu0
    %1878 = vmatprep.mubr.f32.mxu0 0.0
    %1879 = vmatmul.mubr.f32.gmra.mrb[0].mxu0 %v1781
    %v1880 = vpop.f32.mrb[0].mxu0
    %v1881 = vadd.f32 %v1764, %v1880
    %v1882 = vpop.f32.mrb[0].mxu0
    %1883 = vmatprep.mubr.f32.mxu0 0.0
    %1884 = vmatmul.mubr.f32.gmra.mrb[0].mxu0 %v1784
    %v1885 = vpop.f32.mrb[0].mxu0
    %v1886 = vadd.f32 %v1764, %v1885
    %v1887 = vpop.f32.mrb[0].mxu0
    %1888 = vmatprep.mubr.f32.mxu0 0.0
    %1889 = vmatmul.mubr.f32.gmra.mrb[0].mxu0 %v1787
    %v1890 = vpop.f32.mrb[0].mxu0
    %v1891 = vadd.f32 %v1764, %v1890
    %v1892 = vpop.f32.mrb[0].mxu0
    %1893 = vdwg.mxu0
    %1894 = vmatprep.subr.mxu0 0.0
    %1895 = vmatpush1.msra.mxu0 %v1611
    %1896 = vmatprep.subr.mxu0 0.0
    %1897 = vmatpush1.msra.mxu0 %v1612
    %1898 = vmatprep.subr.mxu0 0.0
    %1899 = vmatpush1.msra.mxu0 %v1613
    %1900 = vmatprep.subr.mxu0 0.0
    %1901 = vmatpush1.msra.mxu0 %v1614
    %1902 = vmatprep.subr.mxu0 0.0
    %1903 = vmatpush1.msra.mxu0 0.0
    %1904 = vmatprep.subr.mxu0 0.0
    %1905 = vmatpush1.msra.mxu0 0.0
    %1906 = vmatprep.subr.mxu0 0.0
    %1907 = vmatpush1.msra.mxu0 0.0
    %1908 = vmatprep.subr.mxu0 0.0
    %1909 = vmatpush1.msra.mxu0 0.0
    %1910 = vmatprep.subr.mxu0 0.0
    %1911 = vmatpush1.msra.mxu0 0.0
    %1912 = vmatprep.subr.mxu0 0.0
    %1913 = vmatpush1.msra.mxu0 0.0
    %1914 = vmatprep.subr.mxu0 0.0
    %1915 = vmatpush1.msra.mxu0 0.0
    %1916 = vmatprep.subr.mxu0 0.0
    %1917 = vmatpush1.msra.mxu0 0.0
    %1918 = vmatprep.subr.mxu0 0.0
    %1919 = vmatpush1.msra.mxu0 0.0
    %1920 = vmatprep.subr.mxu0 0.0
    %1921 = vmatpush1.msra.mxu0 0.0
    %1922 = vmatprep.subr.mxu0 0.0
    %1923 = vmatpush1.msra.mxu0 0.0
    %1924 = vmatprep.subr.mxu0 0.0
    %1925 = vmatpush1.msra.mxu0 0.0
    %1926 = vmatprep.subr.mxu0 0.0
    %1927 = vmatpush1.msra.mxu0 0.0
    %1928 = vmatprep.subr.mxu0 0.0
    %1929 = vmatpush1.msra.mxu0 0.0
    %1930 = vmatprep.subr.mxu0 0.0
    %1931 = vmatpush1.msra.mxu0 0.0
    %1932 = vmatprep.subr.mxu0 0.0
    %1933 = vmatpush1.msra.mxu0 0.0
    %1934 = vmatprep.subr.mxu0 0.0
    %1935 = vmatpush1.msra.mxu0 0.0
    %1936 = vmatprep.subr.mxu0 0.0
    %1937 = vmatpush1.msra.mxu0 0.0
    %1938 = vmatprep.subr.mxu0 0.0
    %1939 = vmatpush1.msra.mxu0 0.0
    %1940 = vmatprep.subr.mxu0 0.0
    %1941 = vmatpush1.msra.mxu0 0.0
    %1942 = vmatprep.subr.mxu0 0.0
    %1943 = vmatpush1.msra.mxu0 0.0
    %1944 = vmatprep.subr.mxu0 0.0
    %1945 = vmatpush1.msra.mxu0 0.0
    %1946 = vmatprep.subr.mxu0 0.0
    %1947 = vmatpush1.msra.mxu0 0.0
    %1948 = vmatprep.subr.mxu0 0.0
    %1949 = vmatpush1.msra.mxu0 0.0
    %1950 = vmatprep.subr.mxu0 0.0
    %1951 = vmatpush1.msra.mxu0 0.0
    %1952 = vmatprep.subr.mxu0 0.0
    %1953 = vmatpush1.msra.mxu0 0.0
    %1954 = vmatprep.subr.mxu0 0.0
    %1955 = vmatpush1.msra.mxu0 0.0
    %1956 = vmatprep.subr.mxu0 0.0
    %1957 = vmatpush1.msra.mxu0 0.0
    %1958 = vmatprep.mubr.f32.mxu0 0.0
    %1959 = vmatmul.mubr.f32.gmra.mrb[0].mxu0 %v342
    %v1960 = vpop.f32.mrb[0].mxu0
    %v1961 = vadd.f32 0.0, %v1960
    %v1962 = vpop.f32.mrb[0].mxu0
    %1963 = vmatprep.mubr.f32.mxu0 0.0
    %1964 = vmatmul.mubr.f32.gmra.mrb[0].mxu0 %v345
    %v1965 = vpop.f32.mrb[0].mxu0
    %v1966 = vadd.f32 0.0, %v1965
    %v1967 = vpop.f32.mrb[0].mxu0
    %1968 = vdwg.mxu0
    %v1969 = vlaneseq
    %v1970 = vshrl.u32 %v1969, 7
    %v1971 = vsub.s32 3, %v1970
    %v1972 = vrot.slane %v1630, %v1971
    %v1973 = vadd.f32 %v1961, %v1972
    %v1974 = vadd.f32 %v1966, %v1972
    %v1975 = vlaneseq
    %v1976 = vshrl.u32 %v1975, 7
    %v1977 = vsub.s32 4, %v1976
    %v1978 = vrot.slane %v1630, %v1977
    %1980 = vrot.lane.b32.xlu0 %v1978, 32
    %v1981 = vpop.permute.xlu0 %1980
    %v1983 = vadd.f32 %v1961, %v1981
    %v1984 = vadd.f32 %v1966, %v1981
    %v1986 = vsel %vm78, %v1856, 0
    %v1989 = vsel %vm78, %v1861, 0
    %v1992 = vsel %vm78, %v1866, 0
    %v1995 = vsel %vm78, %v1871, 0
    %v1998 = vsel %vm78, %v1973, 0
    %2000 = vmatprep.subr.mxu0 0.0
    %2001 = vmatpush1.xpose.msra.mxu0 %v1998
    %2002 = vmatprep.subr.mxu0 0.0
    %2003 = vmatpush1.xpose.msra.mxu0 0.0
    %2004 = vmatprep.subr.mxu0 0.0
    %2005 = vmatpush1.xpose.msra.mxu0 0.0
    %2006 = vmatprep.subr.mxu0 0.0
    %2007 = vmatpush1.xpose.msra.mxu0 0.0
    %2008 = vmatprep.subr.mxu0 0.0
    %2009 = vmatpush1.xpose.msra.mxu0 0.0
    %2010 = vmatprep.subr.mxu0 0.0
    %2011 = vmatpush1.xpose.msra.mxu0 0.0
    %2012 = vmatprep.subr.mxu0 0.0
    %2013 = vmatpush1.xpose.msra.mxu0 0.0
    %2014 = vmatprep.subr.mxu0 0.0
    %2015 = vmatpush1.xpose.msra.mxu0 0.0
    %2016 = vmatprep.subr.mxu0 0.0
    %2017 = vmatpush1.xpose.msra.mxu0 0.0
    %2018 = vmatprep.subr.mxu0 0.0
    %2019 = vmatpush1.xpose.msra.mxu0 0.0
    %2020 = vmatprep.subr.mxu0 0.0
    %2021 = vmatpush1.xpose.msra.mxu0 0.0
    %2022 = vmatprep.subr.mxu0 0.0
    %2023 = vmatpush1.xpose.msra.mxu0 0.0
    %2024 = vmatprep.subr.mxu0 0.0
    %2025 = vmatpush1.xpose.msra.mxu0 0.0
    %2026 = vmatprep.subr.mxu0 0.0
    %2027 = vmatpush1.xpose.msra.mxu0 0.0
    %2028 = vmatprep.subr.mxu0 0.0
    %2029 = vmatpush1.xpose.msra.mxu0 0.0
    %2030 = vmatprep.subr.mxu0 0.0
    %2031 = vmatpush1.xpose.msra.mxu0 0.0
    %2032 = vmatprep.subr.mxu0 0.0
    %2033 = vmatpush1.xpose.msra.mxu0 0.0
    %2034 = vmatprep.subr.mxu0 0.0
    %2035 = vmatpush1.xpose.msra.mxu0 0.0
    %2036 = vmatprep.subr.mxu0 0.0
    %2037 = vmatpush1.xpose.msra.mxu0 0.0
    %2038 = vmatprep.subr.mxu0 0.0
    %2039 = vmatpush1.xpose.msra.mxu0 0.0
    %2040 = vmatprep.subr.mxu0 0.0
    %2041 = vmatpush1.xpose.msra.mxu0 0.0
    %2042 = vmatprep.subr.mxu0 0.0
    %2043 = vmatpush1.xpose.msra.mxu0 0.0
    %2044 = vmatprep.subr.mxu0 0.0
    %2045 = vmatpush1.xpose.msra.mxu0 0.0
    %2046 = vmatprep.subr.mxu0 0.0
    %2047 = vmatpush1.xpose.msra.mxu0 0.0
    %2048 = vmatprep.subr.mxu0 0.0
    %2049 = vmatpush1.xpose.msra.mxu0 0.0
    %2050 = vmatprep.subr.mxu0 0.0
    %2051 = vmatpush1.xpose.msra.mxu0 0.0
    %2052 = vmatprep.subr.mxu0 0.0
    %2053 = vmatpush1.xpose.msra.mxu0 0.0
    %2054 = vmatprep.subr.mxu0 0.0
    %2055 = vmatpush1.xpose.msra.mxu0 0.0
    %2056 = vmatprep.subr.mxu0 0.0
    %2057 = vmatpush1.xpose.msra.mxu0 0.0
    %2058 = vmatprep.subr.mxu0 0.0
    %2059 = vmatpush1.xpose.msra.mxu0 0.0
    %2060 = vmatprep.subr.mxu0 0.0
    %2061 = vmatpush1.xpose.msra.mxu0 0.0
    %2062 = vmatprep.subr.mxu0 0.0
    %2063 = vmatpush1.xpose.msra.mxu0 0.0
    %2064 = vmatprep.mubr.f32.mxu0 0.0
    %2065 = vmatmul.mubr.f32.gmra.mrb[0].mxu0 %v1986
    %v2066 = vpop.f32.mrb[0].mxu0
    %v2067 = vadd.f32 0.0, %v2066
    %v2068 = vpop.f32.mrb[0].mxu0
    %2069 = vmatprep.mubr.f32.mxu0 0.0
    %2070 = vmatmul.mubr.f32.gmra.mrb[0].mxu0 %v1989
    %v2071 = vpop.f32.mrb[0].mxu0
    %v2072 = vadd.f32 0.0, %v2071
    %v2073 = vpop.f32.mrb[0].mxu0
    %2074 = vmatprep.mubr.f32.mxu0 0.0
    %2075 = vmatmul.mubr.f32.gmra.mrb[0].mxu0 %v1992
    %v2076 = vpop.f32.mrb[0].mxu0
    %v2077 = vadd.f32 0.0, %v2076
    %v2078 = vpop.f32.mrb[0].mxu0
    %2079 = vmatprep.mubr.f32.mxu0 0.0
    %2080 = vmatmul.mubr.f32.gmra.mrb[0].mxu0 %v1995
    %v2081 = vpop.f32.mrb[0].mxu0
    %v2082 = vadd.f32 0.0, %v2081
    %v2083 = vpop.f32.mrb[0].mxu0
    %2084 = vdwg.mxu0
    %v2086 = vsel %vm78, %v1876, 0
    %v2089 = vsel %vm78, %v1881, 0
    %v2092 = vsel %vm78, %v1886, 0
    %v2095 = vsel %vm78, %v1891, 0
    %v2098 = vsel %vm78, %v1974, 0
    %2100 = vmatprep.subr.mxu0 0.0
    %2101 = vmatpush1.xpose.msra.mxu0 %v2098
    %2102 = vmatprep.subr.mxu0 0.0
    %2103 = vmatpush1.xpose.msra.mxu0 0.0
    %2104 = vmatprep.subr.mxu0 0.0
    %2105 = vmatpush1.xpose.msra.mxu0 0.0
    %2106 = vmatprep.subr.mxu0 0.0
    %2107 = vmatpush1.xpose.msra.mxu0 0.0
    %2108 = vmatprep.subr.mxu0 0.0
    %2109 = vmatpush1.xpose.msra.mxu0 0.0
    %2110 = vmatprep.subr.mxu0 0.0
    %2111 = vmatpush1.xpose.msra.mxu0 0.0
    %2112 = vmatprep.subr.mxu0 0.0
    %2113 = vmatpush1.xpose.msra.mxu0 0.0
    %2114 = vmatprep.subr.mxu0 0.0
    %2115 = vmatpush1.xpose.msra.mxu0 0.0
    %2116 = vmatprep.subr.mxu0 0.0
    %2117 = vmatpush1.xpose.msra.mxu0 0.0
    %2118 = vmatprep.subr.mxu0 0.0
    %2119 = vmatpush1.xpose.msra.mxu0 0.0
    %2120 = vmatprep.subr.mxu0 0.0
    %2121 = vmatpush1.xpose.msra.mxu0 0.0
    %2122 = vmatprep.subr.mxu0 0.0
    %2123 = vmatpush1.xpose.msra.mxu0 0.0
    %2124 = vmatprep.subr.mxu0 0.0
    %2125 = vmatpush1.xpose.msra.mxu0 0.0
    %2126 = vmatprep.subr.mxu0 0.0
    %2127 = vmatpush1.xpose.msra.mxu0 0.0
    %2128 = vmatprep.subr.mxu0 0.0
    %2129 = vmatpush1.xpose.msra.mxu0 0.0
    %2130 = vmatprep.subr.mxu0 0.0
    %2131 = vmatpush1.xpose.msra.mxu0 0.0
    %2132 = vmatprep.subr.mxu0 0.0
    %2133 = vmatpush1.xpose.msra.mxu0 0.0
    %2134 = vmatprep.subr.mxu0 0.0
    %2135 = vmatpush1.xpose.msra.mxu0 0.0
    %2136 = vmatprep.subr.mxu0 0.0
    %2137 = vmatpush1.xpose.msra.mxu0 0.0
    %2138 = vmatprep.subr.mxu0 0.0
    %2139 = vmatpush1.xpose.msra.mxu0 0.0
    %2140 = vmatprep.subr.mxu0 0.0
    %2141 = vmatpush1.xpose.msra.mxu0 0.0
    %2142 = vmatprep.subr.mxu0 0.0
    %2143 = vmatpush1.xpose.msra.mxu0 0.0
    %2144 = vmatprep.subr.mxu0 0.0
    %2145 = vmatpush1.xpose.msra.mxu0 0.0
    %2146 = vmatprep.subr.mxu0 0.0
    %2147 = vmatpush1.xpose.msra.mxu0 0.0
    %2148 = vmatprep.subr.mxu0 0.0
    %2149 = vmatpush1.xpose.msra.mxu0 0.0
    %2150 = vmatprep.subr.mxu0 0.0
    %2151 = vmatpush1.xpose.msra.mxu0 0.0
    %2152 = vmatprep.subr.mxu0 0.0
    %2153 = vmatpush1.xpose.msra.mxu0 0.0
    %2154 = vmatprep.subr.mxu0 0.0
    %2155 = vmatpush1.xpose.msra.mxu0 0.0
    %2156 = vmatprep.subr.mxu0 0.0
    %2157 = vmatpush1.xpose.msra.mxu0 0.0
    %2158 = vmatprep.subr.mxu0 0.0
    %2159 = vmatpush1.xpose.msra.mxu0 0.0
    %2160 = vmatprep.subr.mxu0 0.0
    %2161 = vmatpush1.xpose.msra.mxu0 0.0
    %2162 = vmatprep.subr.mxu0 0.0
    %2163 = vmatpush1.xpose.msra.mxu0 0.0
    %2164 = vmatprep.mubr.f32.mxu0 0.0
    %2165 = vmatmul.mubr.f32.gmra.mrb[0].mxu0 %v2086
    %v2166 = vpop.f32.mrb[0].mxu0
    %v2167 = vadd.f32 0.0, %v2166
    %v2168 = vpop.f32.mrb[0].mxu0
    %2169 = vmatprep.mubr.f32.mxu0 0.0
    %2170 = vmatmul.mubr.f32.gmra.mrb[0].mxu0 %v2089
    %v2171 = vpop.f32.mrb[0].mxu0
    %v2172 = vadd.f32 0.0, %v2171
    %v2173 = vpop.f32.mrb[0].mxu0
    %2174 = vmatprep.mubr.f32.mxu0 0.0
    %2175 = vmatmul.mubr.f32.gmra.mrb[0].mxu0 %v2092
    %v2176 = vpop.f32.mrb[0].mxu0
    %v2177 = vadd.f32 0.0, %v2176
    %v2178 = vpop.f32.mrb[0].mxu0
    %2179 = vmatprep.mubr.f32.mxu0 0.0
    %2180 = vmatmul.mubr.f32.gmra.mrb[0].mxu0 %v2095
    %v2181 = vpop.f32.mrb[0].mxu0
    %v2182 = vadd.f32 0.0, %v2181
    %v2183 = vpop.f32.mrb[0].mxu0
    %2184 = vdwg.mxu0
    %v2185 = vsel %vm638, %v2067, -inf
    %2186 = vmax.xlane.f32.xlu0 %v2185
    %v2187 = vpop.xlane.xlu0 %2186
    %v2188 = vsel %vm638, %v2072, -inf
    %2189 = vmax.xlane.f32.xlu0 %v2188
    %v2190 = vpop.xlane.xlu0 %2189
    %v2191 = vsel %vm638, %v2077, -inf
    %2192 = vmax.xlane.f32.xlu0 %v2191
    %v2193 = vpop.xlane.xlu0 %2192
    %v2194 = vsel %vm638, %v2082, -inf
    %2195 = vmax.xlane.f32.xlu0 %v2194
    %v2196 = vpop.xlane.xlu0 %2195
    %v2197 = vsel %vm638, %v2167, -inf
    %2198 = vmax.xlane.f32.xlu0 %v2197
    %v2199 = vpop.xlane.xlu0 %2198
    %v2200 = vsel %vm638, %v2172, -inf
    %2201 = vmax.xlane.f32.xlu0 %v2200
    %v2202 = vpop.xlane.xlu0 %2201
    %v2203 = vsel %vm638, %v2177, -inf
    %2204 = vmax.xlane.f32.xlu0 %v2203
    %v2205 = vpop.xlane.xlu0 %2204
    %v2206 = vsel %vm638, %v2182, -inf
    %2207 = vmax.xlane.f32.xlu0 %v2206
    %v2208 = vpop.xlane.xlu0 %2207
    %v2209 = vsub.f32 %v2067, %v2187
    %v2210 = vsub.f32 %v2072, %v2190
    %v2211 = vsub.f32 %v2077, %v2193
    %v2212 = vsub.f32 %v2082, %v2196
    %v2213 = vsub.f32 %v2167, %v2199
    %v2214 = vsub.f32 %v2172, %v2202
    %v2215 = vsub.f32 %v2177, %v2205
    %v2216 = vsub.f32 %v2182, %v2208
    %v2217 = vmul.f32 %v2209, 1.442695
    %v2218 = vpow.pop %v2217
    %v2219 = vmul.f32 %v2210, 1.442695
    %v2220 = vpow.pop %v2219
    %v2221 = vmul.f32 %v2211, 1.442695
    %v2222 = vpow.pop %v2221
    %v2223 = vmul.f32 %v2212, 1.442695
    %v2224 = vpow.pop %v2223
    %v2225 = vmul.f32 %v2213, 1.442695
    %v2226 = vpow.pop %v2225
    %v2227 = vmul.f32 %v2214, 1.442695
    %v2228 = vpow.pop %v2227
    %v2229 = vmul.f32 %v2215, 1.442695
    %v2230 = vpow.pop %v2229
    %v2231 = vmul.f32 %v2216, 1.442695
    %v2232 = vpow.pop %v2231
    %v2233 = vsel %vm638, %v2218, 0.0
    %2234 = vadd.xlane.f32.xlu0 %v2233
    %v2235 = vpop.xlane.xlu0 %2234
    %v2236 = vsel %vm638, %v2220, 0.0
    %2237 = vadd.xlane.f32.xlu0 %v2236
    %v2238 = vpop.xlane.xlu0 %2237
    %v2239 = vsel %vm638, %v2222, 0.0
    %2240 = vadd.xlane.f32.xlu0 %v2239
    %v2241 = vpop.xlane.xlu0 %2240
    %v2242 = vsel %vm638, %v2224, 0.0
    %2243 = vadd.xlane.f32.xlu0 %v2242
    %v2244 = vpop.xlane.xlu0 %2243
    %v2245 = vsel %vm638, %v2226, 0.0
    %2246 = vadd.xlane.f32.xlu0 %v2245
    %v2247 = vpop.xlane.xlu0 %2246
    %v2248 = vsel %vm638, %v2228, 0.0
    %2249 = vadd.xlane.f32.xlu0 %v2248
    %v2250 = vpop.xlane.xlu0 %2249
    %v2251 = vsel %vm638, %v2230, 0.0
    %2252 = vadd.xlane.f32.xlu0 %v2251
    %v2253 = vpop.xlane.xlu0 %2252
    %v2254 = vsel %vm638, %v2232, 0.0
    %2255 = vadd.xlane.f32.xlu0 %v2254
    %v2256 = vpop.xlane.xlu0 %2255
    %v2257 = vrcp.pop %v2235
    %v2258 = vrcp.pop %v2238
    %v2259 = vrcp.pop %v2241
    %v2260 = vrcp.pop %v2244
    %v2261 = vrcp.pop %v2247
    %v2262 = vrcp.pop %v2250
    %v2263 = vrcp.pop %v2253
    %v2264 = vrcp.pop %v2256
    %v2265 = vmul.f32 %v2218, %v2257
    %v2266 = vmul.f32 %v2220, %v2258
    %v2267 = vmul.f32 %v2222, %v2259
    %v2268 = vmul.f32 %v2224, %v2260
    %v2269 = vmul.f32 %v2226, %v2261
    %v2270 = vmul.f32 %v2228, %v2262
    %v2271 = vmul.f32 %v2230, %v2263
    %v2272 = vmul.f32 %v2232, %v2264
    %2274 = vrot.lane.b32.xlu0 %v1983, 96
    %v2275 = vpop.permute.xlu0 %2274
    %v2278 = vsel %vm638, %v2265, 0
    %v2281 = vsel %vm638, %v2266, 0
    %v2284 = vsel %vm638, %v2267, 0
    %v2287 = vsel %vm638, %v2268, 0
    %2289 = vmatprep.subr.mxu0 0.0
    %2290 = vmatpush1.msra.mxu0 %v2275
    %2291 = vmatprep.subr.mxu0 0.0
    %2292 = vmatpush1.msra.mxu0 0.0
    %2293 = vmatprep.subr.mxu0 0.0
    %2294 = vmatpush1.msra.mxu0 0.0
    %2295 = vmatprep.subr.mxu0 0.0
    %2296 = vmatpush1.msra.mxu0 0.0
    %2297 = vmatprep.subr.mxu0 0.0
    %2298 = vmatpush1.msra.mxu0 0.0
    %2299 = vmatprep.subr.mxu0 0.0
    %2300 = vmatpush1.msra.mxu0 0.0
    %2301 = vmatprep.subr.mxu0 0.0
    %2302 = vmatpush1.msra.mxu0 0.0
    %2303 = vmatprep.subr.mxu0 0.0
    %2304 = vmatpush1.msra.mxu0 0.0
    %2305 = vmatprep.subr.mxu0 0.0
    %2306 = vmatpush1.msra.mxu0 0.0
    %2307 = vmatprep.subr.mxu0 0.0
    %2308 = vmatpush1.msra.mxu0 0.0
    %2309 = vmatprep.subr.mxu0 0.0
    %2310 = vmatpush1.msra.mxu0 0.0
    %2311 = vmatprep.subr.mxu0 0.0
    %2312 = vmatpush1.msra.mxu0 0.0
    %2313 = vmatprep.subr.mxu0 0.0
    %2314 = vmatpush1.msra.mxu0 0.0
    %2315 = vmatprep.subr.mxu0 0.0
    %2316 = vmatpush1.msra.mxu0 0.0
    %2317 = vmatprep.subr.mxu0 0.0
    %2318 = vmatpush1.msra.mxu0 0.0
    %2319 = vmatprep.subr.mxu0 0.0
    %2320 = vmatpush1.msra.mxu0 0.0
    %2321 = vmatprep.subr.mxu0 0.0
    %2322 = vmatpush1.msra.mxu0 0.0
    %2323 = vmatprep.subr.mxu0 0.0
    %2324 = vmatpush1.msra.mxu0 0.0
    %2325 = vmatprep.subr.mxu0 0.0
    %2326 = vmatpush1.msra.mxu0 0.0
    %2327 = vmatprep.subr.mxu0 0.0
    %2328 = vmatpush1.msra.mxu0 0.0
    %2329 = vmatprep.subr.mxu0 0.0
    %2330 = vmatpush1.msra.mxu0 0.0
    %2331 = vmatprep.subr.mxu0 0.0
    %2332 = vmatpush1.msra.mxu0 0.0
    %2333 = vmatprep.subr.mxu0 0.0
    %2334 = vmatpush1.msra.mxu0 0.0
    %2335 = vmatprep.subr.mxu0 0.0
    %2336 = vmatpush1.msra.mxu0 0.0
    %2337 = vmatprep.subr.mxu0 0.0
    %2338 = vmatpush1.msra.mxu0 0.0
    %2339 = vmatprep.subr.mxu0 0.0
    %2340 = vmatpush1.msra.mxu0 0.0
    %2341 = vmatprep.subr.mxu0 0.0
    %2342 = vmatpush1.msra.mxu0 0.0
    %2343 = vmatprep.subr.mxu0 0.0
    %2344 = vmatpush1.msra.mxu0 0.0
    %2345 = vmatprep.subr.mxu0 0.0
    %2346 = vmatpush1.msra.mxu0 0.0
    %2347 = vmatprep.subr.mxu0 0.0
    %2348 = vmatpush1.msra.mxu0 0.0
    %2349 = vmatprep.subr.mxu0 0.0
    %2350 = vmatpush1.msra.mxu0 0.0
    %2351 = vmatprep.subr.mxu0 0.0
    %2352 = vmatpush1.msra.mxu0 0.0
    %2353 = vmatprep.mubr.f32.mxu0 0.0
    %2354 = vmatmul.mubr.f32.gmra.mrb[0].mxu0 %v2278
    %v2355 = vpop.f32.mrb[0].mxu0
    %v2356 = vadd.f32 %v1753, %v2355
    %v2357 = vpop.f32.mrb[0].mxu0
    %2358 = vmatprep.mubr.f32.mxu0 0.0
    %2359 = vmatmul.mubr.f32.gmra.mrb[0].mxu0 %v2281
    %v2360 = vpop.f32.mrb[0].mxu0
    %v2361 = vadd.f32 %v1754, %v2360
    %v2362 = vpop.f32.mrb[0].mxu0
    %2363 = vmatprep.mubr.f32.mxu0 0.0
    %2364 = vmatmul.mubr.f32.gmra.mrb[0].mxu0 %v2284
    %v2365 = vpop.f32.mrb[0].mxu0
    %v2366 = vadd.f32 %v1755, %v2365
    %v2367 = vpop.f32.mrb[0].mxu0
    %2368 = vmatprep.mubr.f32.mxu0 0.0
    %2369 = vmatmul.mubr.f32.gmra.mrb[0].mxu0 %v2287
    %v2370 = vpop.f32.mrb[0].mxu0
    %v2371 = vadd.f32 %v1756, %v2370
    %v2372 = vpop.f32.mrb[0].mxu0
    %2373 = vdwg.mxu0
    %2375 = vrot.lane.b32.xlu0 %v1984, 96
    %v2376 = vpop.permute.xlu0 %2375
    %v2379 = vsel %vm638, %v2269, 0
    %v2382 = vsel %vm638, %v2270, 0
    %v2385 = vsel %vm638, %v2271, 0
    %v2388 = vsel %vm638, %v2272, 0
    %2390 = vmatprep.subr.mxu0 0.0
    %2391 = vmatpush1.msra.mxu0 %v2376
    %2392 = vmatprep.subr.mxu0 0.0
    %2393 = vmatpush1.msra.mxu0 0.0
    %2394 = vmatprep.subr.mxu0 0.0
    %2395 = vmatpush1.msra.mxu0 0.0
    %2396 = vmatprep.subr.mxu0 0.0
    %2397 = vmatpush1.msra.mxu0 0.0
    %2398 = vmatprep.subr.mxu0 0.0
    %2399 = vmatpush1.msra.mxu0 0.0
    %2400 = vmatprep.subr.mxu0 0.0
    %2401 = vmatpush1.msra.mxu0 0.0
    %2402 = vmatprep.subr.mxu0 0.0
    %2403 = vmatpush1.msra.mxu0 0.0
    %2404 = vmatprep.subr.mxu0 0.0
    %2405 = vmatpush1.msra.mxu0 0.0
    %2406 = vmatprep.subr.mxu0 0.0
    %2407 = vmatpush1.msra.mxu0 0.0
    %2408 = vmatprep.subr.mxu0 0.0
    %2409 = vmatpush1.msra.mxu0 0.0
    %2410 = vmatprep.subr.mxu0 0.0
    %2411 = vmatpush1.msra.mxu0 0.0
    %2412 = vmatprep.subr.mxu0 0.0
    %2413 = vmatpush1.msra.mxu0 0.0
    %2414 = vmatprep.subr.mxu0 0.0
    %2415 = vmatpush1.msra.mxu0 0.0
    %2416 = vmatprep.subr.mxu0 0.0
    %2417 = vmatpush1.msra.mxu0 0.0
    %2418 = vmatprep.subr.mxu0 0.0
    %2419 = vmatpush1.msra.mxu0 0.0
    %2420 = vmatprep.subr.mxu0 0.0
    %2421 = vmatpush1.msra.mxu0 0.0
    %2422 = vmatprep.subr.mxu0 0.0
    %2423 = vmatpush1.msra.mxu0 0.0
    %2424 = vmatprep.subr.mxu0 0.0
    %2425 = vmatpush1.msra.mxu0 0.0
    %2426 = vmatprep.subr.mxu0 0.0
    %2427 = vmatpush1.msra.mxu0 0.0
    %2428 = vmatprep.subr.mxu0 0.0
    %2429 = vmatpush1.msra.mxu0 0.0
    %2430 = vmatprep.subr.mxu0 0.0
    %2431 = vmatpush1.msra.mxu0 0.0
    %2432 = vmatprep.subr.mxu0 0.0
    %2433 = vmatpush1.msra.mxu0 0.0
    %2434 = vmatprep.subr.mxu0 0.0
    %2435 = vmatpush1.msra.mxu0 0.0
    %2436 = vmatprep.subr.mxu0 0.0
    %2437 = vmatpush1.msra.mxu0 0.0
    %2438 = vmatprep.subr.mxu0 0.0
    %2439 = vmatpush1.msra.mxu0 0.0
    %2440 = vmatprep.subr.mxu0 0.0
    %2441 = vmatpush1.msra.mxu0 0.0
    %2442 = vmatprep.subr.mxu0 0.0
    %2443 = vmatpush1.msra.mxu0 0.0
    %2444 = vmatprep.subr.mxu0 0.0
    %2445 = vmatpush1.msra.mxu0 0.0
    %2446 = vmatprep.subr.mxu0 0.0
    %2447 = vmatpush1.msra.mxu0 0.0
    %2448 = vmatprep.subr.mxu0 0.0
    %2449 = vmatpush1.msra.mxu0 0.0
    %2450 = vmatprep.subr.mxu0 0.0
    %2451 = vmatpush1.msra.mxu0 0.0
    %2452 = vmatprep.subr.mxu0 0.0
    %2453 = vmatpush1.msra.mxu0 0.0
    %2454 = vmatprep.mubr.f32.mxu0 0.0
    %2455 = vmatmul.mubr.f32.gmra.mrb[0].mxu0 %v2379
    %v2456 = vpop.f32.mrb[0].mxu0
    %v2457 = vadd.f32 %v1757, %v2456
    %v2458 = vpop.f32.mrb[0].mxu0
    %2459 = vmatprep.mubr.f32.mxu0 0.0
    %2460 = vmatmul.mubr.f32.gmra.mrb[0].mxu0 %v2382
    %v2461 = vpop.f32.mrb[0].mxu0
    %v2462 = vadd.f32 %v1758, %v2461
    %v2463 = vpop.f32.mrb[0].mxu0
    %2464 = vmatprep.mubr.f32.mxu0 0.0
    %2465 = vmatmul.mubr.f32.gmra.mrb[0].mxu0 %v2385
    %v2466 = vpop.f32.mrb[0].mxu0
    %v2467 = vadd.f32 %v1759, %v2466
    %v2468 = vpop.f32.mrb[0].mxu0
    %2469 = vmatprep.mubr.f32.mxu0 0.0
    %2470 = vmatmul.mubr.f32.gmra.mrb[0].mxu0 %v2388
    %v2471 = vpop.f32.mrb[0].mxu0
    %v2472 = vadd.f32 %v1760, %v2471
    %v2473 = vpop.f32.mrb[0].mxu0
    %2474 = vdwg.mxu0
    %2475 = vxpose.xlu0.b32.start [1/16] %v2356, 128
    %2476 = vxpose.xlu0.b32.cont [2/16] %v2361, 128
    %2477 = vxpose.xlu0.b32.cont [3/16] %v2366, 128
    %2478 = vxpose.xlu0.b32.cont [4/16] %v2371, 128
    %2479 = vxpose.xlu0.b32.cont [5/16] 0.0, 128
    %2480 = vxpose.xlu0.b32.cont [6/16] 0.0, 128
    %2481 = vxpose.xlu0.b32.cont [7/16] 0.0, 128
    %2482 = vxpose.xlu0.b32.cont [8/16] 0.0, 128
    %2483 = vxpose.xlu0.b32.cont [9/16] 0.0, 128
    %2484 = vxpose.xlu0.b32.cont [10/16] 0.0, 128
    %2485 = vxpose.xlu0.b32.cont [11/16] 0.0, 128
    %2486 = vxpose.xlu0.b32.cont [12/16] 0.0, 128
    %2487 = vxpose.xlu0.b32.cont [13/16] 0.0, 128
    %2488 = vxpose.xlu0.b32.cont [14/16] 0.0, 128
    %2489 = vxpose.xlu0.b32.cont [15/16] 0.0, 128
    %2490 = vxpose.xlu0.b32.end [16/16] 0.0, 128
    %v2491 = vpop.trf.xlu0
    %v2492 = vpop.trf.xlu0
    %v2493 = vpop.trf.xlu0
    %v2494 = vpop.trf.xlu0
    %v2495 = vpop.trf.xlu0
    %v2496 = vpop.trf.xlu0
    %v2497 = vpop.trf.xlu0
    %v2498 = vpop.trf.xlu0
    %v2499 = vpop.trf.xlu0
    %v2500 = vpop.trf.xlu0
    %v2501 = vpop.trf.xlu0
    %v2502 = vpop.trf.xlu0
    %v2503 = vpop.trf.xlu0
    %v2504 = vpop.trf.xlu0
    %v2505 = vpop.trf.xlu0
    %v2506 = vpop.trf.xlu0
    %2507 = vxpose.xlu0.b32.start [1/16] %v2457, 128
    %2508 = vxpose.xlu0.b32.cont [2/16] %v2462, 128
    %2509 = vxpose.xlu0.b32.cont [3/16] %v2467, 128
    %2510 = vxpose.xlu0.b32.cont [4/16] %v2472, 128
    %2511 = vxpose.xlu0.b32.cont [5/16] 0.0, 128
    %2512 = vxpose.xlu0.b32.cont [6/16] 0.0, 128
    %2513 = vxpose.xlu0.b32.cont [7/16] 0.0, 128
    %2514 = vxpose.xlu0.b32.cont [8/16] 0.0, 128
    %2515 = vxpose.xlu0.b32.cont [9/16] 0.0, 128
    %2516 = vxpose.xlu0.b32.cont [10/16] 0.0, 128
    %2517 = vxpose.xlu0.b32.cont [11/16] 0.0, 128
    %2518 = vxpose.xlu0.b32.cont [12/16] 0.0, 128
    %2519 = vxpose.xlu0.b32.cont [13/16] 0.0, 128
    %2520 = vxpose.xlu0.b32.cont [14/16] 0.0, 128
    %2521 = vxpose.xlu0.b32.cont [15/16] 0.0, 128
    %2522 = vxpose.xlu0.b32.end [16/16] 0.0, 128
    %v2523 = vpop.trf.xlu0
    %v2524 = vpop.trf.xlu0
    %v2525 = vpop.trf.xlu0
    %v2526 = vpop.trf.xlu0
    %v2527 = vpop.trf.xlu0
    %v2528 = vpop.trf.xlu0
    %v2529 = vpop.trf.xlu0
    %v2530 = vpop.trf.xlu0
    %v2531 = vpop.trf.xlu0
    %v2532 = vpop.trf.xlu0
    %v2533 = vpop.trf.xlu0
    %v2534 = vpop.trf.xlu0
    %v2535 = vpop.trf.xlu0
    %v2536 = vpop.trf.xlu0
    %v2537 = vpop.trf.xlu0
    %v2538 = vpop.trf.xlu0
    %v2539 = vlaneseq
    %v2540 = vshrl.u32 %v2539, 7
    %v2541 = vsub.s32 0, %v2540
    %v2542 = vrot.slane %v1632, %v2541
    %v2544 = vsel %vm78, %v2491, 0
    %v2547 = vsel %vm78, %v2492, 0
    %v2550 = vsel %vm78, %v2493, 0
    %v2553 = vsel %vm78, %v2494, 0
    %v2556 = vsel %vm78, %v2523, 0
    %v2559 = vsel %vm78, %v2524, 0
    %v2562 = vsel %vm78, %v2525, 0
    %v2565 = vsel %vm78, %v2526, 0
    %2567 = vmatprep.subr.mxu0 0.0
    %2568 = vmatpush1.msra.mxu0 %v1616
    %2569 = vmatprep.subr.mxu0 0.0
    %2570 = vmatpush1.msra.mxu0 %v1617
    %2571 = vmatprep.subr.mxu0 0.0
    %2572 = vmatpush1.msra.mxu0 %v1618
    %2573 = vmatprep.subr.mxu0 0.0
    %2574 = vmatpush1.msra.mxu0 %v1619
    %2575 = vmatprep.subr.mxu0 0.0
    %2576 = vmatpush1.msra.mxu0 0.0
    %2577 = vmatprep.subr.mxu0 0.0
    %2578 = vmatpush1.msra.mxu0 0.0
    %2579 = vmatprep.subr.mxu0 0.0
    %2580 = vmatpush1.msra.mxu0 0.0
    %2581 = vmatprep.subr.mxu0 0.0
    %2582 = vmatpush1.msra.mxu0 0.0
    %2583 = vmatprep.subr.mxu0 0.0
    %2584 = vmatpush1.msra.mxu0 0.0
    %2585 = vmatprep.subr.mxu0 0.0
    %2586 = vmatpush1.msra.mxu0 0.0
    %2587 = vmatprep.subr.mxu0 0.0
    %2588 = vmatpush1.msra.mxu0 0.0
    %2589 = vmatprep.subr.mxu0 0.0
    %2590 = vmatpush1.msra.mxu0 0.0
    %2591 = vmatprep.subr.mxu0 0.0
    %2592 = vmatpush1.msra.mxu0 0.0
    %2593 = vmatprep.subr.mxu0 0.0
    %2594 = vmatpush1.msra.mxu0 0.0
    %2595 = vmatprep.subr.mxu0 0.0
    %2596 = vmatpush1.msra.mxu0 0.0
    %2597 = vmatprep.subr.mxu0 0.0
    %2598 = vmatpush1.msra.mxu0 0.0
    %2599 = vmatprep.subr.mxu0 0.0
    %2600 = vmatpush1.msra.mxu0 0.0
    %2601 = vmatprep.subr.mxu0 0.0
    %2602 = vmatpush1.msra.mxu0 0.0
    %2603 = vmatprep.subr.mxu0 0.0
    %2604 = vmatpush1.msra.mxu0 0.0
    %2605 = vmatprep.subr.mxu0 0.0
    %2606 = vmatpush1.msra.mxu0 0.0
    %2607 = vmatprep.subr.mxu0 0.0
    %2608 = vmatpush1.msra.mxu0 0.0
    %2609 = vmatprep.subr.mxu0 0.0
    %2610 = vmatpush1.msra.mxu0 0.0
    %2611 = vmatprep.subr.mxu0 0.0
    %2612 = vmatpush1.msra.mxu0 0.0
    %2613 = vmatprep.subr.mxu0 0.0
    %2614 = vmatpush1.msra.mxu0 0.0
    %2615 = vmatprep.subr.mxu0 0.0
    %2616 = vmatpush1.msra.mxu0 0.0
    %2617 = vmatprep.subr.mxu0 0.0
    %2618 = vmatpush1.msra.mxu0 0.0
    %2619 = vmatprep.subr.mxu0 0.0
    %2620 = vmatpush1.msra.mxu0 0.0
    %2621 = vmatprep.subr.mxu0 0.0
    %2622 = vmatpush1.msra.mxu0 0.0
    %2623 = vmatprep.subr.mxu0 0.0
    %2624 = vmatpush1.msra.mxu0 0.0
    %2625 = vmatprep.subr.mxu0 0.0
    %2626 = vmatpush1.msra.mxu0 0.0
    %2627 = vmatprep.subr.mxu0 0.0
    %2628 = vmatpush1.msra.mxu0 0.0
    %2629 = vmatprep.subr.mxu0 0.0
    %2630 = vmatpush1.msra.mxu0 0.0
    %2631 = vmatprep.mubr.f32.mxu0 0.0
    %2632 = vmatmul.mubr.f32.gmra.mrb[0].mxu0 %v2544
    %v2633 = vpop.f32.mrb[0].mxu0
    %v2634 = vadd.f32 %v2542, %v2633
    %v2635 = vpop.f32.mrb[0].mxu0
    %2636 = vmatprep.mubr.f32.mxu0 0.0
    %2637 = vmatmul.mubr.f32.gmra.mrb[0].mxu0 %v2547
    %v2638 = vpop.f32.mrb[0].mxu0
    %v2639 = vadd.f32 %v2542, %v2638
    %v2640 = vpop.f32.mrb[0].mxu0
    %2641 = vmatprep.mubr.f32.mxu0 0.0
    %2642 = vmatmul.mubr.f32.gmra.mrb[0].mxu0 %v2550
    %v2643 = vpop.f32.mrb[0].mxu0
    %v2644 = vadd.f32 %v2542, %v2643
    %v2645 = vpop.f32.mrb[0].mxu0
    %2646 = vmatprep.mubr.f32.mxu0 0.0
    %2647 = vmatmul.mubr.f32.gmra.mrb[0].mxu0 %v2553
    %v2648 = vpop.f32.mrb[0].mxu0
    %v2649 = vadd.f32 %v2542, %v2648
    %v2650 = vpop.f32.mrb[0].mxu0
    %2651 = vmatprep.mubr.f32.mxu0 0.0
    %2652 = vmatmul.mubr.f32.gmra.mrb[0].mxu0 %v2556
    %v2653 = vpop.f32.mrb[0].mxu0
    %v2654 = vadd.f32 %v2542, %v2653
    %v2655 = vpop.f32.mrb[0].mxu0
    %2656 = vmatprep.mubr.f32.mxu0 0.0
    %2657 = vmatmul.mubr.f32.gmra.mrb[0].mxu0 %v2559
    %v2658 = vpop.f32.mrb[0].mxu0
    %v2659 = vadd.f32 %v2542, %v2658
    %v2660 = vpop.f32.mrb[0].mxu0
    %2661 = vmatprep.mubr.f32.mxu0 0.0
    %2662 = vmatmul.mubr.f32.gmra.mrb[0].mxu0 %v2562
    %v2663 = vpop.f32.mrb[0].mxu0
    %v2664 = vadd.f32 %v2542, %v2663
    %v2665 = vpop.f32.mrb[0].mxu0
    %2666 = vmatprep.mubr.f32.mxu0 0.0
    %2667 = vmatmul.mubr.f32.gmra.mrb[0].mxu0 %v2565
    %v2668 = vpop.f32.mrb[0].mxu0
    %v2669 = vadd.f32 %v2542, %v2668
    %v2670 = vpop.f32.mrb[0].mxu0
    %2671 = vdwg.mxu0
    %v2672 = vsel %vm1126, %v2634, 0.0
    %2673 = vadd.xlane.f32.xlu0 %v2672
    %v2674 = vpop.xlane.xlu0 %2673
    %v2675 = vsel %vm1126, %v2639, 0.0
    %2676 = vadd.xlane.f32.xlu0 %v2675
    %v2677 = vpop.xlane.xlu0 %2676
    %v2678 = vsel %vm1126, %v2644, 0.0
    %2679 = vadd.xlane.f32.xlu0 %v2678
    %v2680 = vpop.xlane.xlu0 %2679
    %v2681 = vsel %vm1126, %v2649, 0.0
    %2682 = vadd.xlane.f32.xlu0 %v2681
    %v2683 = vpop.xlane.xlu0 %2682
    %v2684 = vsel %vm1126, %v2654, 0.0
    %2685 = vadd.xlane.f32.xlu0 %v2684
    %v2686 = vpop.xlane.xlu0 %2685
    %v2687 = vsel %vm1126, %v2659, 0.0
    %2688 = vadd.xlane.f32.xlu0 %v2687
    %v2689 = vpop.xlane.xlu0 %2688
    %v2690 = vsel %vm1126, %v2664, 0.0
    %2691 = vadd.xlane.f32.xlu0 %v2690
    %v2692 = vpop.xlane.xlu0 %2691
    %v2693 = vsel %vm1126, %v2669, 0.0
    %2694 = vadd.xlane.f32.xlu0 %v2693
    %v2695 = vpop.xlane.xlu0 %2694
    %v2696 = vmul.f32 %v2674, %v1151
    %v2697 = vmul.f32 %v2677, %v1151
    %v2698 = vmul.f32 %v2680, %v1151
    %v2699 = vmul.f32 %v2683, %v1151
    %v2700 = vmul.f32 %v2686, %v1151
    %v2701 = vmul.f32 %v2689, %v1151
    %v2702 = vmul.f32 %v2692, %v1151
    %v2703 = vmul.f32 %v2695, %v1151
    %v2704 = vsub.f32 %v2634, %v2696
    %v2705 = vsub.f32 %v2639, %v2697
    %v2706 = vsub.f32 %v2644, %v2698
    %v2707 = vsub.f32 %v2649, %v2699
    %v2708 = vsub.f32 %v2654, %v2700
    %v2709 = vsub.f32 %v2659, %v2701
    %v2710 = vsub.f32 %v2664, %v2702
    %v2711 = vsub.f32 %v2669, %v2703
    %v2712 = vmul.f32 %v2704, %v2704
    %v2713 = vmul.f32 %v2705, %v2705
    %v2714 = vmul.f32 %v2706, %v2706
    %v2715 = vmul.f32 %v2707, %v2707
    %v2716 = vmul.f32 %v2708, %v2708
    %v2717 = vmul.f32 %v2709, %v2709
    %v2718 = vmul.f32 %v2710, %v2710
    %v2719 = vmul.f32 %v2711, %v2711
    %v2720 = vsel %vm1126, %v2712, 0.0
    %2721 = vadd.xlane.f32.xlu0 %v2720
    %v2722 = vpop.xlane.xlu0 %2721
    %v2723 = vsel %vm1126, %v2713, 0.0
    %2724 = vadd.xlane.f32.xlu0 %v2723
    %v2725 = vpop.xlane.xlu0 %2724
    %v2726 = vsel %vm1126, %v2714, 0.0
    %2727 = vadd.xlane.f32.xlu0 %v2726
    %v2728 = vpop.xlane.xlu0 %2727
    %v2729 = vsel %vm1126, %v2715, 0.0
    %2730 = vadd.xlane.f32.xlu0 %v2729
    %v2731 = vpop.xlane.xlu0 %2730
    %v2732 = vsel %vm1126, %v2716, 0.0
    %2733 = vadd.xlane.f32.xlu0 %v2732
    %v2734 = vpop.xlane.xlu0 %2733
    %v2735 = vsel %vm1126, %v2717, 0.0
    %2736 = vadd.xlane.f32.xlu0 %v2735
    %v2737 = vpop.xlane.xlu0 %2736
    %v2738 = vsel %vm1126, %v2718, 0.0
    %2739 = vadd.xlane.f32.xlu0 %v2738
    %v2740 = vpop.xlane.xlu0 %2739
    %v2741 = vsel %vm1126, %v2719, 0.0
    %2742 = vadd.xlane.f32.xlu0 %v2741
    %v2743 = vpop.xlane.xlu0 %2742
    %v2744 = vmul.f32 %v2722, %v1151
    %v2745 = vmul.f32 %v2725, %v1151
    %v2746 = vmul.f32 %v2728, %v1151
    %v2747 = vmul.f32 %v2731, %v1151
    %v2748 = vmul.f32 %v2734, %v1151
    %v2749 = vmul.f32 %v2737, %v1151
    %v2750 = vmul.f32 %v2740, %v1151
    %v2751 = vmul.f32 %v2743, %v1151
    %v2752 = vadd.f32 %v2744, 1e-05
    %v2753 = vadd.f32 %v2745, 1e-05
    %v2754 = vadd.f32 %v2746, 1e-05
    %v2755 = vadd.f32 %v2747, 1e-05
    %v2756 = vadd.f32 %v2748, 1e-05
    %v2757 = vadd.f32 %v2749, 1e-05
    %v2758 = vadd.f32 %v2750, 1e-05
    %v2759 = vadd.f32 %v2751, 1e-05
    %v2760 = vrsqrt.pop %v2752
    %v2761 = vrsqrt.pop %v2753
    %v2762 = vrsqrt.pop %v2754
    %v2763 = vrsqrt.pop %v2755
    %v2764 = vrsqrt.pop %v2756
    %v2765 = vrsqrt.pop %v2757
    %v2766 = vrsqrt.pop %v2758
    %v2767 = vrsqrt.pop %v2759
    %v2768 = vmul.f32 %v2704, %v2760
    %v2769 = vmul.f32 %v2705, %v2761
    %v2770 = vmul.f32 %v2706, %v2762
    %v2771 = vmul.f32 %v2707, %v2763
    %v2772 = vmul.f32 %v2708, %v2764
    %v2773 = vmul.f32 %v2709, %v2765
    %v2774 = vmul.f32 %v2710, %v2766
    %v2775 = vmul.f32 %v2711, %v2767
    %v2776 = vlaneseq
    %v2777 = vshrl.u32 %v2776, 7
    %v2778 = vsub.s32 1, %v2777
    %v2779 = vrot.slane %v1632, %v2778
    %v2780 = vmul.f32 %v2768, %v2779
    %v2781 = vmul.f32 %v2769, %v2779
    %v2782 = vmul.f32 %v2770, %v2779
    %v2783 = vmul.f32 %v2771, %v2779
    %v2784 = vmul.f32 %v2772, %v2779
    %v2785 = vmul.f32 %v2773, %v2779
    %v2786 = vmul.f32 %v2774, %v2779
    %v2787 = vmul.f32 %v2775, %v2779
    %v2788 = vlaneseq
    %v2789 = vshrl.u32 %v2788, 7
    %v2790 = vsub.s32 2, %v2789
    %v2791 = vrot.slane %v1632, %v2790
    %v2792 = vadd.f32 %v2780, %v2791
    %v2793 = vadd.f32 %v2781, %v2791
    %v2794 = vadd.f32 %v2782, %v2791
    %v2795 = vadd.f32 %v2783, %v2791
    %v2796 = vadd.f32 %v2784, %v2791
    %v2797 = vadd.f32 %v2785, %v2791
    %v2798 = vadd.f32 %v2786, %v2791
    %v2799 = vadd.f32 %v2787, %v2791
    %v2800 = vmax.f32 %v2792, 0.0
    %v2801 = vmax.f32 %v2793, 0.0
    %v2802 = vmax.f32 %v2794, 0.0
    %v2803 = vmax.f32 %v2795, 0.0
    %v2804 = vmax.f32 %v2796, 0.0
    %v2805 = vmax.f32 %v2797, 0.0
    %v2806 = vmax.f32 %v2798, 0.0
    %v2807 = vmax.f32 %v2799, 0.0
    %v2808 = vlaneseq
    %v2809 = vshrl.u32 %v2808, 7
    %v2810 = vsub.s32 5, %v2809
    %v2811 = vrot.slane %v1630, %v2810
    %v2813 = vsel %vm1126, %v2800, 0
    %v2816 = vsel %vm1126, %v2801, 0
    %v2819 = vsel %vm1126, %v2802, 0
    %v2822 = vsel %vm1126, %v2803, 0
    %v2825 = vsel %vm1126, %v2804, 0
    %v2828 = vsel %vm1126, %v2805, 0
    %v2831 = vsel %vm1126, %v2806, 0
    %v2834 = vsel %vm1126, %v2807, 0
    %2836 = vmatprep.subr.mxu0 0.0
    %2837 = vmatpush1.msra.mxu0 %v1621
    %2838 = vmatprep.subr.mxu0 0.0
    %2839 = vmatpush1.msra.mxu0 %v1622
    %2840 = vmatprep.subr.mxu0 0.0
    %2841 = vmatpush1.msra.mxu0 %v1623
    %2842 = vmatprep.subr.mxu0 0.0
    %2843 = vmatpush1.msra.mxu0 %v1624
    %2844 = vmatprep.subr.mxu0 0.0
    %2845 = vmatpush1.msra.mxu0 %v1625
    %2846 = vmatprep.subr.mxu0 0.0
    %2847 = vmatpush1.msra.mxu0 %v1626
    %2848 = vmatprep.subr.mxu0 0.0
    %2849 = vmatpush1.msra.mxu0 %v1627
    %2850 = vmatprep.subr.mxu0 0.0
    %2851 = vmatpush1.msra.mxu0 %v1628
    %2852 = vmatprep.subr.mxu0 0.0
    %2853 = vmatpush1.msra.mxu0 0.0
    %2854 = vmatprep.subr.mxu0 0.0
    %2855 = vmatpush1.msra.mxu0 0.0
    %2856 = vmatprep.subr.mxu0 0.0
    %2857 = vmatpush1.msra.mxu0 0.0
    %2858 = vmatprep.subr.mxu0 0.0
    %2859 = vmatpush1.msra.mxu0 0.0
    %2860 = vmatprep.subr.mxu0 0.0
    %2861 = vmatpush1.msra.mxu0 0.0
    %2862 = vmatprep.subr.mxu0 0.0
    %2863 = vmatpush1.msra.mxu0 0.0
    %2864 = vmatprep.subr.mxu0 0.0
    %2865 = vmatpush1.msra.mxu0 0.0
    %2866 = vmatprep.subr.mxu0 0.0
    %2867 = vmatpush1.msra.mxu0 0.0
    %2868 = vmatprep.subr.mxu0 0.0
    %2869 = vmatpush1.msra.mxu0 0.0
    %2870 = vmatprep.subr.mxu0 0.0
    %2871 = vmatpush1.msra.mxu0 0.0
    %2872 = vmatprep.subr.mxu0 0.0
    %2873 = vmatpush1.msra.mxu0 0.0
    %2874 = vmatprep.subr.mxu0 0.0
    %2875 = vmatpush1.msra.mxu0 0.0
    %2876 = vmatprep.subr.mxu0 0.0
    %2877 = vmatpush1.msra.mxu0 0.0
    %2878 = vmatprep.subr.mxu0 0.0
    %2879 = vmatpush1.msra.mxu0 0.0
    %2880 = vmatprep.subr.mxu0 0.0
    %2881 = vmatpush1.msra.mxu0 0.0
    %2882 = vmatprep.subr.mxu0 0.0
    %2883 = vmatpush1.msra.mxu0 0.0
    %2884 = vmatprep.subr.mxu0 0.0
    %2885 = vmatpush1.msra.mxu0 0.0
    %2886 = vmatprep.subr.mxu0 0.0
    %2887 = vmatpush1.msra.mxu0 0.0
    %2888 = vmatprep.subr.mxu0 0.0
    %2889 = vmatpush1.msra.mxu0 0.0
    %2890 = vmatprep.subr.mxu0 0.0
    %2891 = vmatpush1.msra.mxu0 0.0
    %2892 = vmatprep.subr.mxu0 0.0
    %2893 = vmatpush1.msra.mxu0 0.0
    %2894 = vmatprep.subr.mxu0 0.0
    %2895 = vmatpush1.msra.mxu0 0.0
    %2896 = vmatprep.subr.mxu0 0.0
    %2897 = vmatpush1.msra.mxu0 0.0
    %2898 = vmatprep.subr.mxu0 0.0
    %2899 = vmatpush1.msra.mxu0 0.0
    %2900 = vmatprep.mubr.f32.mxu0 0.0
    %2901 = vmatmul.mubr.f32.gmra.mrb[0].mxu0 %v2813
    %v2902 = vpop.f32.mrb[0].mxu0
    %v2903 = vadd.f32 %v2811, %v2902
    %v2904 = vpop.f32.mrb[0].mxu0
    %2905 = vmatprep.mubr.f32.mxu0 0.0
    %2906 = vmatmul.mubr.f32.gmra.mrb[0].mxu0 %v2816
    %v2907 = vpop.f32.mrb[0].mxu0
    %v2908 = vadd.f32 %v2811, %v2907
    %v2909 = vpop.f32.mrb[0].mxu0
    %2910 = vmatprep.mubr.f32.mxu0 0.0
    %2911 = vmatmul.mubr.f32.gmra.mrb[0].mxu0 %v2819
    %v2912 = vpop.f32.mrb[0].mxu0
    %v2913 = vadd.f32 %v2811, %v2912
    %v2914 = vpop.f32.mrb[0].mxu0
    %2915 = vmatprep.mubr.f32.mxu0 0.0
    %2916 = vmatmul.mubr.f32.gmra.mrb[0].mxu0 %v2822
    %v2917 = vpop.f32.mrb[0].mxu0
    %v2918 = vadd.f32 %v2811, %v2917
    %v2919 = vpop.f32.mrb[0].mxu0
    %2920 = vmatprep.mubr.f32.mxu0 0.0
    %2921 = vmatmul.mubr.f32.gmra.mrb[0].mxu0 %v2825
    %v2922 = vpop.f32.mrb[0].mxu0
    %v2923 = vadd.f32 %v2811, %v2922
    %v2924 = vpop.f32.mrb[0].mxu0
    %2925 = vmatprep.mubr.f32.mxu0 0.0
    %2926 = vmatmul.mubr.f32.gmra.mrb[0].mxu0 %v2828
    %v2927 = vpop.f32.mrb[0].mxu0
    %v2928 = vadd.f32 %v2811, %v2927
    %v2929 = vpop.f32.mrb[0].mxu0
    %2930 = vmatprep.mubr.f32.mxu0 0.0
    %2931 = vmatmul.mubr.f32.gmra.mrb[0].mxu0 %v2831
    %v2932 = vpop.f32.mrb[0].mxu0
    %v2933 = vadd.f32 %v2811, %v2932
    %v2934 = vpop.f32.mrb[0].mxu0
    %2935 = vmatprep.mubr.f32.mxu0 0.0
    %2936 = vmatmul.mubr.f32.gmra.mrb[0].mxu0 %v2834
    %v2937 = vpop.f32.mrb[0].mxu0
    %v2938 = vadd.f32 %v2811, %v2937
    %v2939 = vpop.f32.mrb[0].mxu0
    %2940 = vdwg.mxu0
    %v2941 = vsel %vm78, %v2903, 0.0
    %2942 = vadd.xlane.f32.xlu0 %v2941
    %v2943 = vpop.xlane.xlu0 %2942
    %v2944 = vsel %vm78, %v2908, 0.0
    %2945 = vadd.xlane.f32.xlu0 %v2944
    %v2946 = vpop.xlane.xlu0 %2945
    %v2947 = vsel %vm78, %v2913, 0.0
    %2948 = vadd.xlane.f32.xlu0 %v2947
    %v2949 = vpop.xlane.xlu0 %2948
    %v2950 = vsel %vm78, %v2918, 0.0
    %2951 = vadd.xlane.f32.xlu0 %v2950
    %v2952 = vpop.xlane.xlu0 %2951
    %v2953 = vsel %vm78, %v2923, 0.0
    %2954 = vadd.xlane.f32.xlu0 %v2953
    %v2955 = vpop.xlane.xlu0 %2954
    %v2956 = vsel %vm78, %v2928, 0.0
    %2957 = vadd.xlane.f32.xlu0 %v2956
    %v2958 = vpop.xlane.xlu0 %2957
    %v2959 = vsel %vm78, %v2933, 0.0
    %2960 = vadd.xlane.f32.xlu0 %v2959
    %v2961 = vpop.xlane.xlu0 %2960
    %v2962 = vsel %vm78, %v2938, 0.0
    %2963 = vadd.xlane.f32.xlu0 %v2962
    %v2964 = vpop.xlane.xlu0 %2963
    %v2965 = vmul.f32 %v2943, %v103
    %v2966 = vmul.f32 %v2946, %v103
    %v2967 = vmul.f32 %v2949, %v103
    %v2968 = vmul.f32 %v2952, %v103
    %v2969 = vmul.f32 %v2955, %v103
    %v2970 = vmul.f32 %v2958, %v103
    %v2971 = vmul.f32 %v2961, %v103
    %v2972 = vmul.f32 %v2964, %v103
    %v2973 = vsub.f32 %v2903, %v2965
    %v2974 = vsub.f32 %v2908, %v2966
    %v2975 = vsub.f32 %v2913, %v2967
    %v2976 = vsub.f32 %v2918, %v2968
    %v2977 = vsub.f32 %v2923, %v2969
    %v2978 = vsub.f32 %v2928, %v2970
    %v2979 = vsub.f32 %v2933, %v2971
    %v2980 = vsub.f32 %v2938, %v2972
    %v2981 = vmul.f32 %v2973, %v2973
    %v2982 = vmul.f32 %v2974, %v2974
    %v2983 = vmul.f32 %v2975, %v2975
    %v2984 = vmul.f32 %v2976, %v2976
    %v2985 = vmul.f32 %v2977, %v2977
    %v2986 = vmul.f32 %v2978, %v2978
    %v2987 = vmul.f32 %v2979, %v2979
    %v2988 = vmul.f32 %v2980, %v2980
    %v2989 = vsel %vm78, %v2981, 0.0
    %2990 = vadd.xlane.f32.xlu0 %v2989
    %v2991 = vpop.xlane.xlu0 %2990
    %v2992 = vsel %vm78, %v2982, 0.0
    %2993 = vadd.xlane.f32.xlu0 %v2992
    %v2994 = vpop.xlane.xlu0 %2993
    %v2995 = vsel %vm78, %v2983, 0.0
    %2996 = vadd.xlane.f32.xlu0 %v2995
    %v2997 = vpop.xlane.xlu0 %2996
    %v2998 = vsel %vm78, %v2984, 0.0
    %2999 = vadd.xlane.f32.xlu0 %v2998
    %v3000 = vpop.xlane.xlu0 %2999
    %v3001 = vsel %vm78, %v2985, 0.0
    %3002 = vadd.xlane.f32.xlu0 %v3001
    %v3003 = vpop.xlane.xlu0 %3002
    %v3004 = vsel %vm78, %v2986, 0.0
    %3005 = vadd.xlane.f32.xlu0 %v3004
    %v3006 = vpop.xlane.xlu0 %3005
    %v3007 = vsel %vm78, %v2987, 0.0
    %3008 = vadd.xlane.f32.xlu0 %v3007
    %v3009 = vpop.xlane.xlu0 %3008
    %v3010 = vsel %vm78, %v2988, 0.0
    %3011 = vadd.xlane.f32.xlu0 %v3010
    %v3012 = vpop.xlane.xlu0 %3011
    %v3013 = vmul.f32 %v2991, %v103
    %v3014 = vmul.f32 %v2994, %v103
    %v3015 = vmul.f32 %v2997, %v103
    %v3016 = vmul.f32 %v3000, %v103
    %v3017 = vmul.f32 %v3003, %v103
    %v3018 = vmul.f32 %v3006, %v103
    %v3019 = vmul.f32 %v3009, %v103
    %v3020 = vmul.f32 %v3012, %v103
    %v3021 = vadd.f32 %v3013, 1e-05
    %v3022 = vadd.f32 %v3014, 1e-05
    %v3023 = vadd.f32 %v3015, 1e-05
    %v3024 = vadd.f32 %v3016, 1e-05
    %v3025 = vadd.f32 %v3017, 1e-05
    %v3026 = vadd.f32 %v3018, 1e-05
    %v3027 = vadd.f32 %v3019, 1e-05
    %v3028 = vadd.f32 %v3020, 1e-05
    %v3029 = vrsqrt.pop %v3021
    %v3030 = vrsqrt.pop %v3022
    %v3031 = vrsqrt.pop %v3023
    %v3032 = vrsqrt.pop %v3024
    %v3033 = vrsqrt.pop %v3025
    %v3034 = vrsqrt.pop %v3026
    %v3035 = vrsqrt.pop %v3027
    %v3036 = vrsqrt.pop %v3028
    %v3037 = vmul.f32 %v2973, %v3029
    %v3038 = vmul.f32 %v2974, %v3030
    %v3039 = vmul.f32 %v2975, %v3031
    %v3040 = vmul.f32 %v2976, %v3032
    %v3041 = vmul.f32 %v2977, %v3033
    %v3042 = vmul.f32 %v2978, %v3034
    %v3043 = vmul.f32 %v2979, %v3035
    %v3044 = vmul.f32 %v2980, %v3036
    %v3045 = vlaneseq
    %v3046 = vshrl.u32 %v3045, 7
    %v3047 = vsub.s32 6, %v3046
    %v3048 = vrot.slane %v1630, %v3047
    %v3049 = vmul.f32 %v3037, %v3048
    %v3050 = vmul.f32 %v3038, %v3048
    %v3051 = vmul.f32 %v3039, %v3048
    %v3052 = vmul.f32 %v3040, %v3048
    %v3053 = vmul.f32 %v3041, %v3048
    %v3054 = vmul.f32 %v3042, %v3048
    %v3055 = vmul.f32 %v3043, %v3048
    %v3056 = vmul.f32 %v3044, %v3048
    %v3057 = vlaneseq
    %v3058 = vshrl.u32 %v3057, 7
    %v3059 = vsub.s32 7, %v3058
    %v3060 = vrot.slane %v1630, %v3059
    %v3061 = vadd.f32 %v3049, %v3060
    %v3062 = vadd.f32 %v3050, %v3060
    %v3063 = vadd.f32 %v3051, %v3060
    %v3064 = vadd.f32 %v3052, %v3060
    %v3065 = vadd.f32 %v3053, %v3060
    %v3066 = vadd.f32 %v3054, %v3060
    %v3067 = vadd.f32 %v3055, %v3060
    %v3068 = vadd.f32 %v3056, %v3060
    %3069 = vxpose.xlu0.b32.start [1/16] %v3061, 128
    %3070 = vxpose.xlu0.b32.cont [2/16] %v3062, 128
    %3071 = vxpose.xlu0.b32.cont [3/16] %v3063, 128
    %3072 = vxpose.xlu0.b32.cont [4/16] %v3064, 128
    %3073 = vxpose.xlu0.b32.cont [5/16] 0.0, 128
    %3074 = vxpose.xlu0.b32.cont [6/16] 0.0, 128
    %3075 = vxpose.xlu0.b32.cont [7/16] 0.0, 128
    %3076 = vxpose.xlu0.b32.cont [8/16] 0.0, 128
    %3077 = vxpose.xlu0.b32.cont [9/16] 0.0, 128
    %3078 = vxpose.xlu0.b32.cont [10/16] 0.0, 128
    %3079 = vxpose.xlu0.b32.cont [11/16] 0.0, 128
    %3080 = vxpose.xlu0.b32.cont [12/16] 0.0, 128
    %3081 = vxpose.xlu0.b32.cont [13/16] 0.0, 128
    %3082 = vxpose.xlu0.b32.cont [14/16] 0.0, 128
    %3083 = vxpose.xlu0.b32.cont [15/16] 0.0, 128
    %3084 = vxpose.xlu0.b32.end [16/16] 0.0, 128
    %v3085 = vpop.trf.xlu0
    %v3086 = vpop.trf.xlu0
    %v3087 = vpop.trf.xlu0
    %v3088 = vpop.trf.xlu0
    %v3089 = vpop.trf.xlu0
    %v3090 = vpop.trf.xlu0
    %v3091 = vpop.trf.xlu0
    %v3092 = vpop.trf.xlu0
    %v3093 = vpop.trf.xlu0
    %v3094 = vpop.trf.xlu0
    %v3095 = vpop.trf.xlu0
    %v3096 = vpop.trf.xlu0
    %v3097 = vpop.trf.xlu0
    %v3098 = vpop.trf.xlu0
    %v3099 = vpop.trf.xlu0
    %v3100 = vpop.trf.xlu0
    %3101 = vxpose.xlu0.b32.start [1/16] %v3065, 128
    %3102 = vxpose.xlu0.b32.cont [2/16] %v3066, 128
    %3103 = vxpose.xlu0.b32.cont [3/16] %v3067, 128
    %3104 = vxpose.xlu0.b32.cont [4/16] %v3068, 128
    %3105 = vxpose.xlu0.b32.cont [5/16] 0.0, 128
    %3106 = vxpose.xlu0.b32.cont [6/16] 0.0, 128
    %3107 = vxpose.xlu0.b32.cont [7/16] 0.0, 128
    %3108 = vxpose.xlu0.b32.cont [8/16] 0.0, 128
    %3109 = vxpose.xlu0.b32.cont [9/16] 0.0, 128
    %3110 = vxpose.xlu0.b32.cont [10/16] 0.0, 128
    %3111 = vxpose.xlu0.b32.cont [11/16] 0.0, 128
    %3112 = vxpose.xlu0.b32.cont [12/16] 0.0, 128
    %3113 = vxpose.xlu0.b32.cont [13/16] 0.0, 128
    %3114 = vxpose.xlu0.b32.cont [14/16] 0.0, 128
    %3115 = vxpose.xlu0.b32.cont [15/16] 0.0, 128
    %3116 = vxpose.xlu0.b32.end [16/16] 0.0, 128
    %v3117 = vpop.trf.xlu0
    %v3118 = vpop.trf.xlu0
    %v3119 = vpop.trf.xlu0
    %v3120 = vpop.trf.xlu0
    %v3121 = vpop.trf.xlu0
    %v3122 = vpop.trf.xlu0
    %v3123 = vpop.trf.xlu0
    %v3124 = vpop.trf.xlu0
    %v3125 = vpop.trf.xlu0
    %v3126 = vpop.trf.xlu0
    %v3127 = vpop.trf.xlu0
    %v3128 = vpop.trf.xlu0
    %v3129 = vpop.trf.xlu0
    %v3130 = vpop.trf.xlu0
    %v3131 = vpop.trf.xlu0
    %v3132 = vpop.trf.xlu0
    %v3133 = vadd.f32 %v2356, %v3085
    %v3134 = vadd.f32 %v2361, %v3086
    %v3135 = vadd.f32 %v2366, %v3087
    %v3136 = vadd.f32 %v2371, %v3088
    %v3137 = vadd.f32 %v2457, %v3117
    %v3138 = vadd.f32 %v2462, %v3118
    %v3139 = vadd.f32 %v2467, %v3119
    %v3140 = vadd.f32 %v2472, %v3120
    %s3141 = scalar_lea.vmem %s9, 64
    %3142 = vst.msk [vmem:[%s3141] sm:$0xff] %vm638, %v2265
    %3143 = vst.msk [vmem:[%s3141 + $0x8] sm:$0xff] %vm638, %v2266
    %3144 = vst.msk [vmem:[%s3141 + $0x10] sm:$0xff] %vm638, %v2267
    %3145 = vst.msk [vmem:[%s3141 + $0x18] sm:$0xff] %vm638, %v2268
    %3146 = vst.msk [vmem:[%s3141 + $0x20] sm:$0xff] %vm638, %v2269
    %3147 = vst.msk [vmem:[%s3141 + $0x28] sm:$0xff] %vm638, %v2270
    %3148 = vst.msk [vmem:[%s3141 + $0x30] sm:$0xff] %vm638, %v2271
    %3149 = vst.msk [vmem:[%s3141 + $0x38] sm:$0xff] %vm638, %v2272
    %3150 = vst.msk [vmem:[#allocation5] sm:$0xff] %vm78, %v3133
    %3151 = vst.msk [vmem:[#allocation5 + $0x8] sm:$0xff] %vm78, %v3134
    %3152 = vst.msk [vmem:[#allocation5 + $0x10] sm:$0xff] %vm78, %v3135
    %3153 = vst.msk [vmem:[#allocation5 + $0x18] sm:$0xff] %vm78, %v3136
    %3154 = vst.msk [vmem:[#allocation5 + $0x20] sm:$0xff] %vm78, %v3137
    %3155 = vst.msk [vmem:[#allocation5 + $0x28] sm:$0xff] %vm78, %v3138
    %3156 = vst.msk [vmem:[#allocation5 + $0x30] sm:$0xff] %vm78, %v3139
    %3157 = vst.msk [vmem:[#allocation5 + $0x38] sm:$0xff] %vm78, %v3140
    // Predicated region
    $region38: #{tpu_custom_call.1} parent=1 // pred_check
      _
    $region39: #{tpu_custom_call.1} parent=1 // pred_check_branch
      %3159 = sbr.rel (0) target = $region41
    $region40: #{tpu_custom_call.1} parent=1 // pred_region
      %s3161 = ssub.s32 1024, 1024
      %3162 = vsyncadd [#allocation4], %s3161
      %s3163 = sshll.u32 [#allocation5], 4
      %s3164 = int_to_ptr.vmem [resolvable:$true] %s3163
      %3169 = dma.vmem_to_hbm [thread:$0]  %s3164, 1024, %s8, [#allocation4], 128, 128, 8
    $region41: #{tpu_custom_call.1} parent=1 // pred_fallthru
      _
    // Predicated region
    $region42: #{tpu_custom_call.1} parent=1 // pred_check
      _
    $region43: #{tpu_custom_call.1} parent=1 // pred_check_branch
      %3171 = sbr.rel (0) target = $region45
    $region44: #{tpu_custom_call.1} parent=1 // pred_region
      _
    $region45: #{tpu_custom_call.1} parent=1 // pred_fallthru
      _
    // Predicated region
    $region46: #{tpu_custom_call.1} parent=1 // pred_check
      _
    $region47: #{tpu_custom_call.1} parent=1 // pred_check_branch
      %3173 = sbr.rel (0) target = $region49
    $region48: #{tpu_custom_call.1} parent=1 // pred_region
      %3174 = dma.done [#allocation4], 1024
    $region49: #{tpu_custom_call.1} parent=1 // pred_fallthru
      _
    // Predicated region
    $region50: #{tpu_custom_call.1} parent=1 // pred_check
      _
    $region51: #{tpu_custom_call.1} parent=1 // pred_check_branch
      %3176 = sbr.rel (0) target = $region53
    $region52: #{tpu_custom_call.1} parent=1 // pred_region
      _
    $region53: #{tpu_custom_call.1} parent=1 // pred_fallthru
      _
    %3177 = vsyncpa [#allocation3], 1
    %3178 = vsyncpa [#allocation4], 1

</llo_original>
